<compile_context>
chip_gen: v5e
topology: v5e:2x2
jax: 0.10.0
libtpu: 0.0.40
codegen_flags: <defaults>
</compile_context>

<pallas_src>
import jax
import jax.numpy as jnp
from jax.experimental import pallas as pl
from jax.experimental.pallas import tpu as pltpu

SUBLANE = 8

_PARAM_ORDER = ("w1", "b1", "w2", "b2", "wmu", "bmu", "wlv", "blv",
                "wdi", "bdi", "wd1", "bd1", "wd2", "bd2")


def _round_up(n, m):
    return ((n + m - 1) // m) * m


def _leaky_relu(x, negative_slope=0.2):
    return jnp.where(x > 0, x, negative_slope * x)


# ----------------------------------------------------------------------------- kernel


def cst_vae_kernel(
    x_ref, eps_ref,
    w1_ref, b1_ref, w2_ref, b2_ref,
    wmu_ref, bmu_ref, wlv_ref, blv_ref,
    wdi_ref, bdi_ref, wd1_ref, bd1_ref, wd2_ref, bd2_ref,
    recon_ref, mu_ref, logvar_ref,
):
    # ---- encoder: Linear(bf16 x bf16 -> f32) -> LeakyReLU -> Linear(f32) -> LeakyReLU ----
    h = jnp.dot(x_ref[...], w1_ref[...], preferred_element_type=jnp.float32) + b1_ref[...]
    h = _leaky_relu(h)
    h = jnp.dot(h, w2_ref[...], preferred_element_type=jnp.float32) + b2_ref[...]
    h = _leaky_relu(h)

    # ---- latent heads in f32 (exp(0.5*logvar) amplifies any head error) ----
    mu = jnp.dot(h, wmu_ref[...], preferred_element_type=jnp.float32) + bmu_ref[...]
    logvar = jnp.dot(h, wlv_ref[...], preferred_element_type=jnp.float32) + blv_ref[...]
    logvar = jnp.clip(logvar, -10.0, 10.0)

    # ---- reparameterization (f32): z = mu + eps * exp(0.5 * logvar) ----
    z = mu + eps_ref[...] * jnp.exp(0.5 * logvar)

    # ---- decoder: Linear -> LeakyReLU -> Linear -> LeakyReLU -> Linear (all f32) ----
    d = jnp.dot(z, wdi_ref[...], preferred_element_type=jnp.float32) + bdi_ref[...]
    d = _leaky_relu(d)
    d = jnp.dot(d, wd1_ref[...], preferred_element_type=jnp.float32) + bd1_ref[...]
    d = _leaky_relu(d)
    recon = jnp.dot(d, wd2_ref[...], preferred_element_type=jnp.float32) + bd2_ref[...]

    # True-width stores (16 / 10 / 10 lanes) — masked vsts in VMEM, contiguous HBM writeback.
    recon_ref[...] = recon
    mu_ref[...] = mu
    logvar_ref[...] = logvar


# ----------------------------------------------------------------------------- wrapper


def prepare_params(params):
    """One-time layout/cast of the weights (hoisted out of the per-call forward path)."""
    def b(name):
        return params[name].reshape(1, -1).astype(jnp.float32)

    prepped = {"w1": params["w1"].astype(jnp.bfloat16), "b1": b("b1")}
    for name in ("w2", "wmu", "wlv", "wdi", "wd1", "wd2"):
        prepped[name] = params[name].astype(jnp.float32)
    for name in ("b2", "bmu", "blv", "bdi", "bd1", "bd2"):
        prepped[name] = b(name)
    return prepped


def _dense_forward(x, eps, p):
    """Small-batch fast path (plain XLA) on the prepared params."""
    h = _leaky_relu(x @ p["w1"].astype(jnp.float32) + p["b1"])
    h = _leaky_relu(h @ p["w2"] + p["b2"])
    mu = h @ p["wmu"] + p["bmu"]
    logvar = jnp.clip(h @ p["wlv"] + p["blv"], -10.0, 10.0)
    z = mu + eps * jnp.exp(0.5 * logvar)
    d = _leaky_relu(z @ p["wdi"] + p["bdi"])
    d = _leaky_relu(d @ p["wd1"] + p["bd1"])
    recon = d @ p["wd2"] + p["bd2"]
    return recon, mu, logvar


def _choose_tm(batch, tm):
    # Keep at least 2 grid steps so the "parallel" batch axis can shard across both
    # TensorCores on v7x; keep the tile sublane-aligned.
    tm_eff = min(tm, _round_up(max(pl.cdiv(batch, 2), 1), SUBLANE))
    return max(SUBLANE, tm_eff)


def cst_vae_forward(x, eps, prepped, *, tm=512, min_pallas_batch=64):
    """CST_VAE forward. Returns (reconstruction, mu, logvar) with unpadded shapes."""
    B, cst_dim = x.shape
    latent_dim = eps.shape[1]

    if B < min_pallas_batch:
        # Fixed-overhead-bound regime: skip the kernel entirely.
        return _dense_forward(x.astype(jnp.float32), eps.astype(jnp.float32), prepped)

    TM = _choose_tm(B, tm)
    b_pad = _round_up(B, TM)
    grid = (b_pad // TM,)

    # Streamed operands keep their true (narrow) widths; only row-pad when needed.
    x_in = x.astype(jnp.bfloat16)
    eps_in = eps.astype(jnp.float32)
    if b_pad != B:
        x_in = jnp.pad(x_in, ((0, b_pad - B), (0, 0)))
        eps_in = jnp.pad(eps_in, ((0, b_pad - B), (0, 0)))

    def stream_spec(cols):
        return pl.BlockSpec((TM, cols), lambda i: (i, 0))

    def resident_spec(arr):
        # Full array, constant index_map -> stays VMEM-resident across grid steps.
        return pl.BlockSpec(arr.shape, lambda i: (0, 0))

    in_specs = [stream_spec(cst_dim), stream_spec(latent_dim)]
    in_specs += [resident_spec(prepped[name]) for name in _PARAM_ORDER]

    out_specs = (
        stream_spec(cst_dim),     # reconstruction
        stream_spec(latent_dim),  # mu
        stream_spec(latent_dim),  # logvar
    )
    out_shape = (
        jax.ShapeDtypeStruct((b_pad, cst_dim), jnp.float32),
        jax.ShapeDtypeStruct((b_pad, latent_dim), jnp.float32),
        jax.ShapeDtypeStruct((b_pad, latent_dim), jnp.float32),
    )

    recon_p, mu_p, lv_p = pl.pallas_call(
        cst_vae_kernel,
        grid=grid,
        in_specs=in_specs,
        out_specs=out_specs,
        out_shape=out_shape,
        compiler_params=pltpu.CompilerParams(
            dimension_semantics=("parallel",),
            # Plenty of headroom for TM up to a few thousand rows; stays within the
            # 32 MiB scoped default of every generation (incl. v7x's 64 MiB/TC VMEM).
            vmem_limit_bytes=32 * 1024 * 1024,
        ),
    )(x_in, eps_in, *[prepped[name] for name in _PARAM_ORDER])

    return recon_p[:B], mu_p[:B], lv_p[:B]


# ----------------------------------------------------------------------------- reference


def cst_vae_reference(x, eps, params):
    """Pure-JAX f32 reference (mirrors the PyTorch module exactly)."""
    h = _leaky_relu(x @ params["w1"] + params["b1"])
    h = _leaky_relu(h @ params["w2"] + params["b2"])
    mu = h @ params["wmu"] + params["bmu"]
    logvar = jnp.clip(h @ params["wlv"] + params["blv"], -10.0, 10.0)
    z = mu + eps * jnp.exp(0.5 * logvar)
    d = _leaky_relu(z @ params["wdi"] + params["bdi"])
    d = _leaky_relu(d @ params["wd1"] + params["bd1"])
    recon = d @ params["wd2"] + params["bd2"]
    return recon, mu, logvar


def init_params(key, cst_dim, latent_dim, hidden_dims=(128, 64)):
    """Deterministic synthetic parameter init (weights stored as (in, out), biases (out,))."""
    h0, h1 = hidden_dims
    shapes = {
        "w1": (cst_dim, h0), "b1": (h0,),
        "w2": (h0, h1), "b2": (h1,),
        "wmu": (h1, latent_dim), "bmu": (latent_dim,),
        "wlv": (h1, latent_dim), "blv": (latent_dim,),
        "wdi": (latent_dim, h1), "bdi": (h1,),
        "wd1": (h1, h0), "bd1": (h0,),
        "wd2": (h0, cst_dim), "bd2": (cst_dim,),
    }
    params = {}
    keys = jax.random.split(key, len(shapes))
    for k, (name, shape) in zip(keys, sorted(shapes.items())):
        if name.startswith("w"):
            scale = 1.0 / jnp.sqrt(jnp.float32(shape[0]))
        else:
            scale = jnp.float32(0.1)
        params[name] = scale * jax.random.normal(k, shape, dtype=jnp.float32)
    return params


if __name__ == "__main__":
    cst_dim, latent_dim = 16, 10

    root = jax.random.PRNGKey(0)
    kx, keps, kparams, kx2, keps2 = jax.random.split(root, 5)

    params = init_params(kparams, cst_dim, latent_dim)
    prepped = prepare_params(params)  # one-time; reused across forward calls

    def check(got, ref):
        for a, b in zip(got, ref):
            assert a.shape == b.shape
            assert bool(jnp.all(jnp.abs(a - b) <= 5e-2 + 5e-2 * jnp.abs(b)))

    # Pallas path: batch large enough for TM=512 tiles and a >=2-step parallel grid.
    B = 1024
    x = jax.random.normal(kx, (B, cst_dim), dtype=jnp.float32)
    eps = jax.random.normal(keps, (B, latent_dim), dtype=jnp.float32)
    out = cst_vae_forward(x, eps, prepped)
    jax.block_until_ready(out)
    recon, mu, logvar = out
    assert recon.shape == (B, cst_dim)
    assert mu.shape == (B, latent_dim)
    assert logvar.shape == (B, latent_dim)
    check(out, cst_vae_reference(x, eps, params))

    # Small-batch fast path (no Pallas launch; fixed overhead would dominate).
    Bs = 8
    xs = jax.random.normal(kx2, (Bs, cst_dim), dtype=jnp.float32)
    es = jax.random.normal(keps2, (Bs, latent_dim), dtype=jnp.float32)
    out_s = cst_vae_forward(xs, es, prepped)
    jax.block_until_ready(out_s)
    check(out_s, cst_vae_reference(xs, es, params))

    print("KERNEL_OK")
</pallas_src>

<mosaic_0001>
module attributes {stable_mosaic.version = 11 : i64} {
  func.func @cst_vae_kernel(%arg0: i32, %arg1: memref<512x16xbf16, #tpu.memory_space<vmem>>, %arg2: memref<512x10xf32, #tpu.memory_space<vmem>>, %arg3: memref<16x128xbf16, #tpu.memory_space<vmem>>, %arg4: memref<1x128xf32, #tpu.memory_space<vmem>>, %arg5: memref<128x64xf32, #tpu.memory_space<vmem>>, %arg6: memref<1x64xf32, #tpu.memory_space<vmem>>, %arg7: memref<64x10xf32, #tpu.memory_space<vmem>>, %arg8: memref<1x10xf32, #tpu.memory_space<vmem>>, %arg9: memref<64x10xf32, #tpu.memory_space<vmem>>, %arg10: memref<1x10xf32, #tpu.memory_space<vmem>>, %arg11: memref<10x64xf32, #tpu.memory_space<vmem>>, %arg12: memref<1x64xf32, #tpu.memory_space<vmem>>, %arg13: memref<64x128xf32, #tpu.memory_space<vmem>>, %arg14: memref<1x128xf32, #tpu.memory_space<vmem>>, %arg15: memref<128x16xf32, #tpu.memory_space<vmem>>, %arg16: memref<1x16xf32, #tpu.memory_space<vmem>>, %arg17: memref<512x16xf32, #tpu.memory_space<vmem>>, %arg18: memref<512x10xf32, #tpu.memory_space<vmem>>, %arg19: memref<512x10xf32, #tpu.memory_space<vmem>>) attributes {dimension_semantics = [#tpu.dimension_semantics<parallel>], iteration_bounds = array<i64: 2>, scalar_prefetch = 0 : i64, scratch_operands = 0 : i64, tpu.core_type = #tpu.core_type<tc>, window_params = [{transform_indices = @transform_0, window_bounds = array<i64: 512, 16>}, {transform_indices = @transform_1, window_bounds = array<i64: 512, 10>}, {pipeline_mode = #tpu.pipeline_mode<synchronous>, transform_indices = @transform_2, window_bounds = array<i64: 16, 128>}, {pipeline_mode = #tpu.pipeline_mode<synchronous>, transform_indices = @transform_3, window_bounds = array<i64: 1, 128>}, {pipeline_mode = #tpu.pipeline_mode<synchronous>, transform_indices = @transform_4, window_bounds = array<i64: 128, 64>}, {pipeline_mode = #tpu.pipeline_mode<synchronous>, transform_indices = @transform_5, window_bounds = array<i64: 1, 64>}, {pipeline_mode = #tpu.pipeline_mode<synchronous>, transform_indices = @transform_6, window_bounds = array<i64: 64, 10>}, {pipeline_mode = #tpu.pipeline_mode<synchronous>, transform_indices = @transform_7, window_bounds = array<i64: 1, 10>}, {pipeline_mode = #tpu.pipeline_mode<synchronous>, transform_indices = @transform_8, window_bounds = array<i64: 64, 10>}, {pipeline_mode = #tpu.pipeline_mode<synchronous>, transform_indices = @transform_9, window_bounds = array<i64: 1, 10>}, {pipeline_mode = #tpu.pipeline_mode<synchronous>, transform_indices = @transform_10, window_bounds = array<i64: 10, 64>}, {pipeline_mode = #tpu.pipeline_mode<synchronous>, transform_indices = @transform_11, window_bounds = array<i64: 1, 64>}, {pipeline_mode = #tpu.pipeline_mode<synchronous>, transform_indices = @transform_12, window_bounds = array<i64: 64, 128>}, {pipeline_mode = #tpu.pipeline_mode<synchronous>, transform_indices = @transform_13, window_bounds = array<i64: 1, 128>}, {pipeline_mode = #tpu.pipeline_mode<synchronous>, transform_indices = @transform_14, window_bounds = array<i64: 128, 16>}, {pipeline_mode = #tpu.pipeline_mode<synchronous>, transform_indices = @transform_15, window_bounds = array<i64: 1, 16>}, {transform_indices = @transform_16, window_bounds = array<i64: 512, 16>}, {transform_indices = @transform_17, window_bounds = array<i64: 512, 10>}, {transform_indices = @transform_18, window_bounds = array<i64: 512, 10>}]} {
    %c0 = arith.constant 0 : index
    %c0_0 = arith.constant 0 : index
    %0 = vector.load %arg1[%c0, %c0_0] : memref<512x16xbf16, #tpu.memory_space<vmem>>, vector<512x16xbf16>
    %c0_1 = arith.constant 0 : index
    %c0_2 = arith.constant 0 : index
    %1 = vector.load %arg3[%c0_1, %c0_2] : memref<16x128xbf16, #tpu.memory_space<vmem>>, vector<16x128xbf16>
    %cst = arith.constant dense<0.000000e+00> : vector<512x128xf32>
    %2 = tpu.matmul %0, %1, %cst {dimension_numbers = #tpu.dot_dimension_numbers<[1], [0], [0], [1], [0, 0, 1, 1], [], []>} : vector<512x16xbf16>, vector<16x128xbf16>, vector<512x128xf32> -> vector<512x128xf32>
    %c0_3 = arith.constant 0 : index
    %c0_4 = arith.constant 0 : index
    %3 = vector.load %arg4[%c0_3, %c0_4] : memref<1x128xf32, #tpu.memory_space<vmem>>, vector<1x128xf32>
    %4 = vector.broadcast %3 : vector<1x128xf32> to vector<512x128xf32>
    %5 = arith.addf %2, %4 : vector<512x128xf32>
    %cst_5 = arith.constant 0.000000e+00 : f32
    %6 = vector.broadcast %cst_5 : f32 to vector<512x128xf32>
    %7 = arith.cmpf ogt, %5, %6 : vector<512x128xf32>
    %cst_6 = arith.constant 2.000000e-01 : f32
    %8 = vector.broadcast %cst_6 : f32 to vector<512x128xf32>
    %9 = arith.mulf %8, %5 : vector<512x128xf32>
    %10 = arith.select %7, %5, %9 : vector<512x128xi1>, vector<512x128xf32>
    %c0_7 = arith.constant 0 : index
    %c0_8 = arith.constant 0 : index
    %11 = vector.load %arg5[%c0_7, %c0_8] : memref<128x64xf32, #tpu.memory_space<vmem>>, vector<128x64xf32>
    %cst_9 = arith.constant dense<0.000000e+00> : vector<512x64xf32>
    %12 = tpu.matmul %10, %11, %cst_9 {dimension_numbers = #tpu.dot_dimension_numbers<[1], [0], [0], [1], [0, 0, 1, 1], [], []>} : vector<512x128xf32>, vector<128x64xf32>, vector<512x64xf32> -> vector<512x64xf32>
    %c0_10 = arith.constant 0 : index
    %c0_11 = arith.constant 0 : index
    %13 = vector.load %arg6[%c0_10, %c0_11] : memref<1x64xf32, #tpu.memory_space<vmem>>, vector<1x64xf32>
    %14 = vector.broadcast %13 : vector<1x64xf32> to vector<512x64xf32>
    %15 = arith.addf %12, %14 : vector<512x64xf32>
    %cst_12 = arith.constant 0.000000e+00 : f32
    %16 = vector.broadcast %cst_12 : f32 to vector<512x64xf32>
    %17 = arith.cmpf ogt, %15, %16 : vector<512x64xf32>
    %cst_13 = arith.constant 2.000000e-01 : f32
    %18 = vector.broadcast %cst_13 : f32 to vector<512x64xf32>
    %19 = arith.mulf %18, %15 : vector<512x64xf32>
    %20 = arith.select %17, %15, %19 : vector<512x64xi1>, vector<512x64xf32>
    %c0_14 = arith.constant 0 : index
    %c0_15 = arith.constant 0 : index
    %21 = vector.load %arg7[%c0_14, %c0_15] : memref<64x10xf32, #tpu.memory_space<vmem>>, vector<64x10xf32>
    %cst_16 = arith.constant dense<0.000000e+00> : vector<512x10xf32>
    %22 = tpu.matmul %20, %21, %cst_16 {dimension_numbers = #tpu.dot_dimension_numbers<[1], [0], [0], [1], [0, 0, 1, 1], [], []>} : vector<512x64xf32>, vector<64x10xf32>, vector<512x10xf32> -> vector<512x10xf32>
    %c0_17 = arith.constant 0 : index
    %c0_18 = arith.constant 0 : index
    %23 = vector.load %arg8[%c0_17, %c0_18] : memref<1x10xf32, #tpu.memory_space<vmem>>, vector<1x10xf32>
    %24 = vector.broadcast %23 : vector<1x10xf32> to vector<512x10xf32>
    %25 = arith.addf %22, %24 : vector<512x10xf32>
    %c0_19 = arith.constant 0 : index
    %c0_20 = arith.constant 0 : index
    %26 = vector.load %arg9[%c0_19, %c0_20] : memref<64x10xf32, #tpu.memory_space<vmem>>, vector<64x10xf32>
    %cst_21 = arith.constant dense<0.000000e+00> : vector<512x10xf32>
    %27 = tpu.matmul %20, %26, %cst_21 {dimension_numbers = #tpu.dot_dimension_numbers<[1], [0], [0], [1], [0, 0, 1, 1], [], []>} : vector<512x64xf32>, vector<64x10xf32>, vector<512x10xf32> -> vector<512x10xf32>
    %c0_22 = arith.constant 0 : index
    %c0_23 = arith.constant 0 : index
    %28 = vector.load %arg10[%c0_22, %c0_23] : memref<1x10xf32, #tpu.memory_space<vmem>>, vector<1x10xf32>
    %29 = vector.broadcast %28 : vector<1x10xf32> to vector<512x10xf32>
    %30 = arith.addf %27, %29 : vector<512x10xf32>
    %cst_24 = arith.constant -1.000000e+01 : f32
    %cst_25 = arith.constant 1.000000e+01 : f32
    %31 = vector.broadcast %cst_24 : f32 to vector<512x10xf32>
    %32 = arith.maximumf %31, %30 : vector<512x10xf32>
    %33 = vector.broadcast %cst_25 : f32 to vector<512x10xf32>
    %34 = arith.minimumf %33, %32 : vector<512x10xf32>
    %c0_26 = arith.constant 0 : index
    %c0_27 = arith.constant 0 : index
    %35 = vector.load %arg2[%c0_26, %c0_27] : memref<512x10xf32, #tpu.memory_space<vmem>>, vector<512x10xf32>
    %cst_28 = arith.constant 5.000000e-01 : f32
    %36 = vector.broadcast %cst_28 : f32 to vector<512x10xf32>
    %37 = arith.mulf %36, %34 : vector<512x10xf32>
    %38 = math.exp %37 : vector<512x10xf32>
    %39 = arith.mulf %35, %38 : vector<512x10xf32>
    %40 = arith.addf %25, %39 : vector<512x10xf32>
    %c0_29 = arith.constant 0 : index
    %c0_30 = arith.constant 0 : index
    %41 = vector.load %arg11[%c0_29, %c0_30] : memref<10x64xf32, #tpu.memory_space<vmem>>, vector<10x64xf32>
    %cst_31 = arith.constant dense<0.000000e+00> : vector<512x64xf32>
    %42 = tpu.matmul %40, %41, %cst_31 {dimension_numbers = #tpu.dot_dimension_numbers<[1], [0], [0], [1], [0, 0, 1, 1], [], []>} : vector<512x10xf32>, vector<10x64xf32>, vector<512x64xf32> -> vector<512x64xf32>
    %c0_32 = arith.constant 0 : index
    %c0_33 = arith.constant 0 : index
    %43 = vector.load %arg12[%c0_32, %c0_33] : memref<1x64xf32, #tpu.memory_space<vmem>>, vector<1x64xf32>
    %44 = vector.broadcast %43 : vector<1x64xf32> to vector<512x64xf32>
    %45 = arith.addf %42, %44 : vector<512x64xf32>
    %cst_34 = arith.constant 0.000000e+00 : f32
    %46 = vector.broadcast %cst_34 : f32 to vector<512x64xf32>
    %47 = arith.cmpf ogt, %45, %46 : vector<512x64xf32>
    %cst_35 = arith.constant 2.000000e-01 : f32
    %48 = vector.broadcast %cst_35 : f32 to vector<512x64xf32>
    %49 = arith.mulf %48, %45 : vector<512x64xf32>
    %50 = arith.select %47, %45, %49 : vector<512x64xi1>, vector<512x64xf32>
    %c0_36 = arith.constant 0 : index
    %c0_37 = arith.constant 0 : index
    %51 = vector.load %arg13[%c0_36, %c0_37] : memref<64x128xf32, #tpu.memory_space<vmem>>, vector<64x128xf32>
    %cst_38 = arith.constant dense<0.000000e+00> : vector<512x128xf32>
    %52 = tpu.matmul %50, %51, %cst_38 {dimension_numbers = #tpu.dot_dimension_numbers<[1], [0], [0], [1], [0, 0, 1, 1], [], []>} : vector<512x64xf32>, vector<64x128xf32>, vector<512x128xf32> -> vector<512x128xf32>
    %c0_39 = arith.constant 0 : index
    %c0_40 = arith.constant 0 : index
    %53 = vector.load %arg14[%c0_39, %c0_40] : memref<1x128xf32, #tpu.memory_space<vmem>>, vector<1x128xf32>
    %54 = vector.broadcast %53 : vector<1x128xf32> to vector<512x128xf32>
    %55 = arith.addf %52, %54 : vector<512x128xf32>
    %cst_41 = arith.constant 0.000000e+00 : f32
    %56 = vector.broadcast %cst_41 : f32 to vector<512x128xf32>
    %57 = arith.cmpf ogt, %55, %56 : vector<512x128xf32>
    %cst_42 = arith.constant 2.000000e-01 : f32
    %58 = vector.broadcast %cst_42 : f32 to vector<512x128xf32>
    %59 = arith.mulf %58, %55 : vector<512x128xf32>
    %60 = arith.select %57, %55, %59 : vector<512x128xi1>, vector<512x128xf32>
    %c0_43 = arith.constant 0 : index
    %c0_44 = arith.constant 0 : index
    %61 = vector.load %arg15[%c0_43, %c0_44] : memref<128x16xf32, #tpu.memory_space<vmem>>, vector<128x16xf32>
    %cst_45 = arith.constant dense<0.000000e+00> : vector<512x16xf32>
    %62 = tpu.matmul %60, %61, %cst_45 {dimension_numbers = #tpu.dot_dimension_numbers<[1], [0], [0], [1], [0, 0, 1, 1], [], []>} : vector<512x128xf32>, vector<128x16xf32>, vector<512x16xf32> -> vector<512x16xf32>
    %c0_46 = arith.constant 0 : index
    %c0_47 = arith.constant 0 : index
    %63 = vector.load %arg16[%c0_46, %c0_47] : memref<1x16xf32, #tpu.memory_space<vmem>>, vector<1x16xf32>
    %64 = vector.broadcast %63 : vector<1x16xf32> to vector<512x16xf32>
    %65 = arith.addf %62, %64 : vector<512x16xf32>
    %c0_48 = arith.constant 0 : index
    %c0_49 = arith.constant 0 : index
    %66 = vector.load %arg17[%c0_48, %c0_49] : memref<512x16xf32, #tpu.memory_space<vmem>>, vector<512x16xf32>
    tpu.vector_store %arg17[%c0_48, %c0_49], %65 {strides = array<i32>} : memref<512x16xf32, #tpu.memory_space<vmem>>, vector<512x16xf32>,
    %c0_50 = arith.constant 0 : index
    %c0_51 = arith.constant 0 : index
    %67 = vector.load %arg18[%c0_50, %c0_51] : memref<512x10xf32, #tpu.memory_space<vmem>>, vector<512x10xf32>
    tpu.vector_store %arg18[%c0_50, %c0_51], %25 {strides = array<i32>} : memref<512x10xf32, #tpu.memory_space<vmem>>, vector<512x10xf32>,
    %c0_52 = arith.constant 0 : index
    %c0_53 = arith.constant 0 : index
    %68 = vector.load %arg19[%c0_52, %c0_53] : memref<512x10xf32, #tpu.memory_space<vmem>>, vector<512x10xf32>
    tpu.vector_store %arg19[%c0_52, %c0_53], %34 {strides = array<i32>} : memref<512x10xf32, #tpu.memory_space<vmem>>, vector<512x10xf32>,
    return
  }
  func.func @transform_0(%arg0: i32) -> (i32, i32) {
    %c0_i32 = arith.constant 0 : i32
    %c0_i32_0 = arith.constant 0 : i32
    return %arg0, %c0_i32 : i32, i32
  }
  func.func @transform_1(%arg0: i32) -> (i32, i32) {
    %c0_i32 = arith.constant 0 : i32
    %c0_i32_0 = arith.constant 0 : i32
    return %arg0, %c0_i32 : i32, i32
  }
  func.func @transform_2(%arg0: i32) -> (i32, i32) {
    %c0_i32 = arith.constant 0 : i32
    %c0_i32_0 = arith.constant 0 : i32
    %c0_i32_1 = arith.constant 0 : i32
    return %c0_i32, %c0_i32_0 : i32, i32
  }
  func.func @transform_3(%arg0: i32) -> (i32, i32) {
    %c0_i32 = arith.constant 0 : i32
    %c0_i32_0 = arith.constant 0 : i32
    %c0_i32_1 = arith.constant 0 : i32
    return %c0_i32, %c0_i32_0 : i32, i32
  }
  func.func @transform_4(%arg0: i32) -> (i32, i32) {
    %c0_i32 = arith.constant 0 : i32
    %c0_i32_0 = arith.constant 0 : i32
    %c0_i32_1 = arith.constant 0 : i32
    return %c0_i32, %c0_i32_0 : i32, i32
  }
  func.func @transform_5(%arg0: i32) -> (i32, i32) {
    %c0_i32 = arith.constant 0 : i32
    %c0_i32_0 = arith.constant 0 : i32
    %c0_i32_1 = arith.constant 0 : i32
    return %c0_i32, %c0_i32_0 : i32, i32
  }
  func.func @transform_6(%arg0: i32) -> (i32, i32) {
    %c0_i32 = arith.constant 0 : i32
    %c0_i32_0 = arith.constant 0 : i32
    %c0_i32_1 = arith.constant 0 : i32
    return %c0_i32, %c0_i32_0 : i32, i32
  }
  func.func @transform_7(%arg0: i32) -> (i32, i32) {
    %c0_i32 = arith.constant 0 : i32
    %c0_i32_0 = arith.constant 0 : i32
    %c0_i32_1 = arith.constant 0 : i32
    return %c0_i32, %c0_i32_0 : i32, i32
  }
  func.func @transform_8(%arg0: i32) -> (i32, i32) {
    %c0_i32 = arith.constant 0 : i32
    %c0_i32_0 = arith.constant 0 : i32
    %c0_i32_1 = arith.constant 0 : i32
    return %c0_i32, %c0_i32_0 : i32, i32
  }
  func.func @transform_9(%arg0: i32) -> (i32, i32) {
    %c0_i32 = arith.constant 0 : i32
    %c0_i32_0 = arith.constant 0 : i32
    %c0_i32_1 = arith.constant 0 : i32
    return %c0_i32, %c0_i32_0 : i32, i32
  }
  func.func @transform_10(%arg0: i32) -> (i32, i32) {
    %c0_i32 = arith.constant 0 : i32
    %c0_i32_0 = arith.constant 0 : i32
    %c0_i32_1 = arith.constant 0 : i32
    return %c0_i32, %c0_i32_0 : i32, i32
  }
  func.func @transform_11(%arg0: i32) -> (i32, i32) {
    %c0_i32 = arith.constant 0 : i32
    %c0_i32_0 = arith.constant 0 : i32
    %c0_i32_1 = arith.constant 0 : i32
    return %c0_i32, %c0_i32_0 : i32, i32
  }
  func.func @transform_12(%arg0: i32) -> (i32, i32) {
    %c0_i32 = arith.constant 0 : i32
    %c0_i32_0 = arith.constant 0 : i32
    %c0_i32_1 = arith.constant 0 : i32
    return %c0_i32, %c0_i32_0 : i32, i32
  }
  func.func @transform_13(%arg0: i32) -> (i32, i32) {
    %c0_i32 = arith.constant 0 : i32
    %c0_i32_0 = arith.constant 0 : i32
    %c0_i32_1 = arith.constant 0 : i32
    return %c0_i32, %c0_i32_0 : i32, i32
  }
  func.func @transform_14(%arg0: i32) -> (i32, i32) {
    %c0_i32 = arith.constant 0 : i32
    %c0_i32_0 = arith.constant 0 : i32
    %c0_i32_1 = arith.constant 0 : i32
    return %c0_i32, %c0_i32_0 : i32, i32
  }
  func.func @transform_15(%arg0: i32) -> (i32, i32) {
    %c0_i32 = arith.constant 0 : i32
    %c0_i32_0 = arith.constant 0 : i32
    %c0_i32_1 = arith.constant 0 : i32
    return %c0_i32, %c0_i32_0 : i32, i32
  }
  func.func @transform_16(%arg0: i32) -> (i32, i32) {
    %c0_i32 = arith.constant 0 : i32
    %c0_i32_0 = arith.constant 0 : i32
    return %arg0, %c0_i32 : i32, i32
  }
  func.func @transform_17(%arg0: i32) -> (i32, i32) {
    %c0_i32 = arith.constant 0 : i32
    %c0_i32_0 = arith.constant 0 : i32
    return %arg0, %c0_i32 : i32, i32
  }
  func.func @transform_18(%arg0: i32) -> (i32, i32) {
    %c0_i32 = arith.constant 0 : i32
    %c0_i32_0 = arith.constant 0 : i32
    return %arg0, %c0_i32 : i32, i32
  }
}

</mosaic_0001>

<llo_original>
// kernel: tpu_custom_call.1
$region0: #{tpu_custom_call.1}
  #allocation0 [shape = 'u32[]', space=smem, size = 0x4, offset = 0x4, fixed_abs, tag = 'smem constant byte address 0x4 - core index']
  #allocation1 [shape = 'u32[72,128]{1,0:T(1,128)}', space=vmem, size = 0x9000, scoped, tag = 'internal scratch']
  %s0 = inlined_call_operand.vmem [shape: bf16[1024,16], index: 0, kind: input, shape index: {}]
  %s1 = inlined_call_operand.vmem [shape: f32[1024,10], index: 1, kind: input, shape index: {}]
  %s2 = inlined_call_operand.vmem [shape: bf16[16,128], index: 2, kind: input, shape index: {}]
  %s3 = inlined_call_operand.vmem [shape: f32[1,128], index: 3, kind: input, shape index: {}]
  %s4 = inlined_call_operand.vmem [shape: f32[128,64], index: 4, kind: input, shape index: {}]
  %s5 = inlined_call_operand.vmem [shape: f32[1,64], index: 5, kind: input, shape index: {}]
  %s6 = inlined_call_operand.vmem [shape: f32[64,10], index: 6, kind: input, shape index: {}]
  %s7 = inlined_call_operand.vmem [shape: f32[1,10], index: 7, kind: input, shape index: {}]
  %s8 = inlined_call_operand.vmem [shape: f32[64,10], index: 8, kind: input, shape index: {}]
  %s9 = inlined_call_operand.vmem [shape: f32[1,10], index: 9, kind: input, shape index: {}]
  %s10 = inlined_call_operand.vmem [shape: f32[10,64], index: 10, kind: input, shape index: {}]
  %s11 = inlined_call_operand.vmem [shape: f32[1,64], index: 11, kind: input, shape index: {}]
  %s12 = inlined_call_operand.vmem [shape: f32[64,128], index: 12, kind: input, shape index: {}]
  %s13 = inlined_call_operand.vmem [shape: f32[1,128], index: 13, kind: input, shape index: {}]
  %s14 = inlined_call_operand.vmem [shape: f32[128,16], index: 14, kind: input, shape index: {}]
  %s15 = inlined_call_operand.vmem [shape: f32[1,16], index: 15, kind: input, shape index: {}]
  %s16 = inlined_call_operand.vmem [shape: f32[1024,16], index: 16, kind: output, shape index: {0}]
  %s17 = inlined_call_operand.vmem [shape: f32[1024,10], index: 17, kind: output, shape index: {1}]
  %s18 = inlined_call_operand.vmem [shape: f32[1024,10], index: 18, kind: output, shape index: {2}]
  %19 = xla_tuple %s16, %s17, %s18
  %s20 = sld [smem:[#allocation0]]
  $region113: #{tpu_custom_call.1} parent=0
    _
  %s22 = ssub.s32 1, %s20
  %s23 = scalar_select 0, %s22, %s20
  loop: start=0, step=1, limit=4
  $region2: #{tpu_custom_call.1} parent=0 // loop_pre_header
    _
  $region3: #{tpu_custom_call.1} parent=0 // loop_header
    %s25 = sphi 0, %s29
    %p26 = scmp.ge.s32.totalorder %s25, 4
    %s35 = sphi 0, %s37
    %s38 = sphi 0, %s35
    %s39 = sphi 0, %s38
    %s55 = sphi 0, %s39
    %s61 = sphi 0, %s63
    %s64 = sphi 0, %s61
    %s65 = sphi 0, %s64
    %s81 = sphi 0, %s65
    %s85 = sphi 0, %s85
    %s87 = sphi 0, %s85
    %s88 = sphi 0, %s87
    %s102 = sphi 0, %s88
    %s106 = sphi 0, %s106
    %s108 = sphi 0, %s106
    %s109 = sphi 0, %s108
    %s123 = sphi 0, %s109
    %s127 = sphi 0, %s127
    %s129 = sphi 0, %s127
    %s130 = sphi 0, %s129
    %s144 = sphi 0, %s130
    %s148 = sphi 0, %s148
    %s150 = sphi 0, %s148
    %s151 = sphi 0, %s150
    %s165 = sphi 0, %s151
    %s169 = sphi 0, %s169
    %s171 = sphi 0, %s169
    %s172 = sphi 0, %s171
    %s186 = sphi 0, %s172
    %s190 = sphi 0, %s190
    %s192 = sphi 0, %s190
    %s193 = sphi 0, %s192
    %s207 = sphi 0, %s193
    %s211 = sphi 0, %s211
    %s213 = sphi 0, %s211
    %s214 = sphi 0, %s213
    %s228 = sphi 0, %s214
    %s232 = sphi 0, %s232
    %s234 = sphi 0, %s232
    %s235 = sphi 0, %s234
    %s249 = sphi 0, %s235
    %s253 = sphi 0, %s253
    %s255 = sphi 0, %s253
    %s256 = sphi 0, %s255
    %s270 = sphi 0, %s256
    %s274 = sphi 0, %s274
    %s276 = sphi 0, %s274
    %s277 = sphi 0, %s276
    %s291 = sphi 0, %s277
    %s295 = sphi 0, %s295
    %s297 = sphi 0, %s295
    %s298 = sphi 0, %s297
    %s312 = sphi 0, %s298
    %s316 = sphi 0, %s316
    %s318 = sphi 0, %s316
    %s319 = sphi 0, %s318
    %s333 = sphi 0, %s319
    %s337 = sphi 0, %s337
    %s339 = sphi 0, %s337
    %s340 = sphi 0, %s339
    %s354 = sphi 0, %s340
    %s358 = sphi 0, %s358
    %s360 = sphi 0, %s358
    %s361 = sphi 0, %s360
    %s375 = sphi 0, %s361
    %s381 = sphi 0, %s383
    %s384 = sphi 0, %s381
    %s385 = sphi 0, %s384
    %s401 = sphi 0, %s385
    %s407 = sphi 0, %s409
    %s410 = sphi 0, %s407
    %s411 = sphi 0, %s410
    %s427 = sphi 0, %s411
    %s433 = sphi 0, %s435
    %s436 = sphi 0, %s433
    %s437 = sphi 0, %s436
    %s453 = sphi 0, %s437
  $region4: #{tpu_custom_call.1} parent=0 // loop_header_branch
    %28 = sbr.rel (%p26) target = $region8
  $region5: #{tpu_custom_call.1} parent=0 // loop_body
    %s30 = ssub.s32 %s25, 1
    %s31 = ssub.s32 %s25, 2
    %s32 = sadd.s32 %s25, 1
    %s33 = ssub.s32 %s25, %s32
    %p34 = scmp.eq.s32.totalorder %s33, 0
    %s36 = sadd.s32 %s35, 1
    %s37 = scalar_select %p34, %s35, %s36
    %p40 = pneg %p34
    %p41 = scmp.eq.s32.totalorder %s25, 1
    %p42 = por %p40, %p41
    %p43 = scmp.ne.s32.totalorder %s35, %s38
    %p44 = scmp.eq.s32.totalorder %s25, 0
    %p45 = por %p43, %p44
    %p46 = scmp.ne.s32.totalorder %s35, %s38
    %p47 = scmp.eq.s32.totalorder %s30, 1
    %p48 = por %p46, %p47
    %p49 = scmp.ne.s32.totalorder %s38, %s39
    %p50 = scmp.eq.s32.totalorder %s30, 0
    %p51 = por %p49, %p50
    %p52 = scmp.ne.s32.totalorder %s38, %s39
    %p53 = scmp.eq.s32.totalorder %s31, 1
    %p54 = por %p52, %p53
    %p56 = scmp.ne.s32.totalorder %s39, %s55
    %p57 = scmp.eq.s32.totalorder %s31, 0
    %p58 = por %p56, %p57
    %s59 = ssub.s32 %s25, %s32
    %p60 = scmp.eq.s32.totalorder %s59, 0
    %s62 = sadd.s32 %s61, 1
    %s63 = scalar_select %p60, %s61, %s62
    %p66 = pneg %p60
    %p67 = scmp.eq.s32.totalorder %s25, 1
    %p68 = por %p66, %p67
    %p69 = scmp.ne.s32.totalorder %s61, %s64
    %p70 = scmp.eq.s32.totalorder %s25, 0
    %p71 = por %p69, %p70
    %p72 = scmp.ne.s32.totalorder %s61, %s64
    %p73 = scmp.eq.s32.totalorder %s30, 1
    %p74 = por %p72, %p73
    %p75 = scmp.ne.s32.totalorder %s64, %s65
    %p76 = scmp.eq.s32.totalorder %s30, 0
    %p77 = por %p75, %p76
    %p78 = scmp.ne.s32.totalorder %s64, %s65
    %p79 = scmp.eq.s32.totalorder %s31, 1
    %p80 = por %p78, %p79
    %p82 = scmp.ne.s32.totalorder %s65, %s81
    %p83 = scmp.eq.s32.totalorder %s31, 0
    %p84 = por %p82, %p83
    %s86 = sadd.s32 %s85, 1
    %p89 = scmp.eq.s32.totalorder %s25, 1
    %p90 = scmp.ne.s32.totalorder %s85, %s87
    %p91 = scmp.eq.s32.totalorder %s25, 0
    %p92 = por %p90, %p91
    %p93 = scmp.ne.s32.totalorder %s85, %s87
    %p94 = scmp.eq.s32.totalorder %s30, 1
    %p95 = por %p93, %p94
    %p96 = scmp.ne.s32.totalorder %s87, %s88
    %p97 = scmp.eq.s32.totalorder %s30, 0
    %p98 = por %p96, %p97
    %p99 = scmp.ne.s32.totalorder %s87, %s88
    %p100 = scmp.eq.s32.totalorder %s31, 1
    %p101 = por %p99, %p100
    %p103 = scmp.ne.s32.totalorder %s88, %s102
    %p104 = scmp.eq.s32.totalorder %s31, 0
    %p105 = por %p103, %p104
    %s107 = sadd.s32 %s106, 1
    %p110 = scmp.eq.s32.totalorder %s25, 1
    %p111 = scmp.ne.s32.totalorder %s106, %s108
    %p112 = scmp.eq.s32.totalorder %s25, 0
    %p113 = por %p111, %p112
    %p114 = scmp.ne.s32.totalorder %s106, %s108
    %p115 = scmp.eq.s32.totalorder %s30, 1
    %p116 = por %p114, %p115
    %p117 = scmp.ne.s32.totalorder %s108, %s109
    %p118 = scmp.eq.s32.totalorder %s30, 0
    %p119 = por %p117, %p118
    %p120 = scmp.ne.s32.totalorder %s108, %s109
    %p121 = scmp.eq.s32.totalorder %s31, 1
    %p122 = por %p120, %p121
    %p124 = scmp.ne.s32.totalorder %s109, %s123
    %p125 = scmp.eq.s32.totalorder %s31, 0
    %p126 = por %p124, %p125
    %s128 = sadd.s32 %s127, 1
    %p131 = scmp.eq.s32.totalorder %s25, 1
    %p132 = scmp.ne.s32.totalorder %s127, %s129
    %p133 = scmp.eq.s32.totalorder %s25, 0
    %p134 = por %p132, %p133
    %p135 = scmp.ne.s32.totalorder %s127, %s129
    %p136 = scmp.eq.s32.totalorder %s30, 1
    %p137 = por %p135, %p136
    %p138 = scmp.ne.s32.totalorder %s129, %s130
    %p139 = scmp.eq.s32.totalorder %s30, 0
    %p140 = por %p138, %p139
    %p141 = scmp.ne.s32.totalorder %s129, %s130
    %p142 = scmp.eq.s32.totalorder %s31, 1
    %p143 = por %p141, %p142
    %p145 = scmp.ne.s32.totalorder %s130, %s144
    %p146 = scmp.eq.s32.totalorder %s31, 0
    %p147 = por %p145, %p146
    %s149 = sadd.s32 %s148, 1
    %p152 = scmp.eq.s32.totalorder %s25, 1
    %p153 = scmp.ne.s32.totalorder %s148, %s150
    %p154 = scmp.eq.s32.totalorder %s25, 0
    %p155 = por %p153, %p154
    %p156 = scmp.ne.s32.totalorder %s148, %s150
    %p157 = scmp.eq.s32.totalorder %s30, 1
    %p158 = por %p156, %p157
    %p159 = scmp.ne.s32.totalorder %s150, %s151
    %p160 = scmp.eq.s32.totalorder %s30, 0
    %p161 = por %p159, %p160
    %p162 = scmp.ne.s32.totalorder %s150, %s151
    %p163 = scmp.eq.s32.totalorder %s31, 1
    %p164 = por %p162, %p163
    %p166 = scmp.ne.s32.totalorder %s151, %s165
    %p167 = scmp.eq.s32.totalorder %s31, 0
    %p168 = por %p166, %p167
    %s170 = sadd.s32 %s169, 1
    %p173 = scmp.eq.s32.totalorder %s25, 1
    %p174 = scmp.ne.s32.totalorder %s169, %s171
    %p175 = scmp.eq.s32.totalorder %s25, 0
    %p176 = por %p174, %p175
    %p177 = scmp.ne.s32.totalorder %s169, %s171
    %p178 = scmp.eq.s32.totalorder %s30, 1
    %p179 = por %p177, %p178
    %p180 = scmp.ne.s32.totalorder %s171, %s172
    %p181 = scmp.eq.s32.totalorder %s30, 0
    %p182 = por %p180, %p181
    %p183 = scmp.ne.s32.totalorder %s171, %s172
    %p184 = scmp.eq.s32.totalorder %s31, 1
    %p185 = por %p183, %p184
    %p187 = scmp.ne.s32.totalorder %s172, %s186
    %p188 = scmp.eq.s32.totalorder %s31, 0
    %p189 = por %p187, %p188
    %s191 = sadd.s32 %s190, 1
    %p194 = scmp.eq.s32.totalorder %s25, 1
    %p195 = scmp.ne.s32.totalorder %s190, %s192
    %p196 = scmp.eq.s32.totalorder %s25, 0
    %p197 = por %p195, %p196
    %p198 = scmp.ne.s32.totalorder %s190, %s192
    %p199 = scmp.eq.s32.totalorder %s30, 1
    %p200 = por %p198, %p199
    %p201 = scmp.ne.s32.totalorder %s192, %s193
    %p202 = scmp.eq.s32.totalorder %s30, 0
    %p203 = por %p201, %p202
    %p204 = scmp.ne.s32.totalorder %s192, %s193
    %p205 = scmp.eq.s32.totalorder %s31, 1
    %p206 = por %p204, %p205
    %p208 = scmp.ne.s32.totalorder %s193, %s207
    %p209 = scmp.eq.s32.totalorder %s31, 0
    %p210 = por %p208, %p209
    %s212 = sadd.s32 %s211, 1
    %p215 = scmp.eq.s32.totalorder %s25, 1
    %p216 = scmp.ne.s32.totalorder %s211, %s213
    %p217 = scmp.eq.s32.totalorder %s25, 0
    %p218 = por %p216, %p217
    %p219 = scmp.ne.s32.totalorder %s211, %s213
    %p220 = scmp.eq.s32.totalorder %s30, 1
    %p221 = por %p219, %p220
    %p222 = scmp.ne.s32.totalorder %s213, %s214
    %p223 = scmp.eq.s32.totalorder %s30, 0
    %p224 = por %p222, %p223
    %p225 = scmp.ne.s32.totalorder %s213, %s214
    %p226 = scmp.eq.s32.totalorder %s31, 1
    %p227 = por %p225, %p226
    %p229 = scmp.ne.s32.totalorder %s214, %s228
    %p230 = scmp.eq.s32.totalorder %s31, 0
    %p231 = por %p229, %p230
    %s233 = sadd.s32 %s232, 1
    %p236 = scmp.eq.s32.totalorder %s25, 1
    %p237 = scmp.ne.s32.totalorder %s232, %s234
    %p238 = scmp.eq.s32.totalorder %s25, 0
    %p239 = por %p237, %p238
    %p240 = scmp.ne.s32.totalorder %s232, %s234
    %p241 = scmp.eq.s32.totalorder %s30, 1
    %p242 = por %p240, %p241
    %p243 = scmp.ne.s32.totalorder %s234, %s235
    %p244 = scmp.eq.s32.totalorder %s30, 0
    %p245 = por %p243, %p244
    %p246 = scmp.ne.s32.totalorder %s234, %s235
    %p247 = scmp.eq.s32.totalorder %s31, 1
    %p248 = por %p246, %p247
    %p250 = scmp.ne.s32.totalorder %s235, %s249
    %p251 = scmp.eq.s32.totalorder %s31, 0
    %p252 = por %p250, %p251
    %s254 = sadd.s32 %s253, 1
    %p257 = scmp.eq.s32.totalorder %s25, 1
    %p258 = scmp.ne.s32.totalorder %s253, %s255
    %p259 = scmp.eq.s32.totalorder %s25, 0
    %p260 = por %p258, %p259
    %p261 = scmp.ne.s32.totalorder %s253, %s255
    %p262 = scmp.eq.s32.totalorder %s30, 1
    %p263 = por %p261, %p262
    %p264 = scmp.ne.s32.totalorder %s255, %s256
    %p265 = scmp.eq.s32.totalorder %s30, 0
    %p266 = por %p264, %p265
    %p267 = scmp.ne.s32.totalorder %s255, %s256
    %p268 = scmp.eq.s32.totalorder %s31, 1
    %p269 = por %p267, %p268
    %p271 = scmp.ne.s32.totalorder %s256, %s270
    %p272 = scmp.eq.s32.totalorder %s31, 0
    %p273 = por %p271, %p272
    %s275 = sadd.s32 %s274, 1
    %p278 = scmp.eq.s32.totalorder %s25, 1
    %p279 = scmp.ne.s32.totalorder %s274, %s276
    %p280 = scmp.eq.s32.totalorder %s25, 0
    %p281 = por %p279, %p280
    %p282 = scmp.ne.s32.totalorder %s274, %s276
    %p283 = scmp.eq.s32.totalorder %s30, 1
    %p284 = por %p282, %p283
    %p285 = scmp.ne.s32.totalorder %s276, %s277
    %p286 = scmp.eq.s32.totalorder %s30, 0
    %p287 = por %p285, %p286
    %p288 = scmp.ne.s32.totalorder %s276, %s277
    %p289 = scmp.eq.s32.totalorder %s31, 1
    %p290 = por %p288, %p289
    %p292 = scmp.ne.s32.totalorder %s277, %s291
    %p293 = scmp.eq.s32.totalorder %s31, 0
    %p294 = por %p292, %p293
    %s296 = sadd.s32 %s295, 1
    %p299 = scmp.eq.s32.totalorder %s25, 1
    %p300 = scmp.ne.s32.totalorder %s295, %s297
    %p301 = scmp.eq.s32.totalorder %s25, 0
    %p302 = por %p300, %p301
    %p303 = scmp.ne.s32.totalorder %s295, %s297
    %p304 = scmp.eq.s32.totalorder %s30, 1
    %p305 = por %p303, %p304
    %p306 = scmp.ne.s32.totalorder %s297, %s298
    %p307 = scmp.eq.s32.totalorder %s30, 0
    %p308 = por %p306, %p307
    %p309 = scmp.ne.s32.totalorder %s297, %s298
    %p310 = scmp.eq.s32.totalorder %s31, 1
    %p311 = por %p309, %p310
    %p313 = scmp.ne.s32.totalorder %s298, %s312
    %p314 = scmp.eq.s32.totalorder %s31, 0
    %p315 = por %p313, %p314
    %s317 = sadd.s32 %s316, 1
    %p320 = scmp.eq.s32.totalorder %s25, 1
    %p321 = scmp.ne.s32.totalorder %s316, %s318
    %p322 = scmp.eq.s32.totalorder %s25, 0
    %p323 = por %p321, %p322
    %p324 = scmp.ne.s32.totalorder %s316, %s318
    %p325 = scmp.eq.s32.totalorder %s30, 1
    %p326 = por %p324, %p325
    %p327 = scmp.ne.s32.totalorder %s318, %s319
    %p328 = scmp.eq.s32.totalorder %s30, 0
    %p329 = por %p327, %p328
    %p330 = scmp.ne.s32.totalorder %s318, %s319
    %p331 = scmp.eq.s32.totalorder %s31, 1
    %p332 = por %p330, %p331
    %p334 = scmp.ne.s32.totalorder %s319, %s333
    %p335 = scmp.eq.s32.totalorder %s31, 0
    %p336 = por %p334, %p335
    %s338 = sadd.s32 %s337, 1
    %p341 = scmp.eq.s32.totalorder %s25, 1
    %p342 = scmp.ne.s32.totalorder %s337, %s339
    %p343 = scmp.eq.s32.totalorder %s25, 0
    %p344 = por %p342, %p343
    %p345 = scmp.ne.s32.totalorder %s337, %s339
    %p346 = scmp.eq.s32.totalorder %s30, 1
    %p347 = por %p345, %p346
    %p348 = scmp.ne.s32.totalorder %s339, %s340
    %p349 = scmp.eq.s32.totalorder %s30, 0
    %p350 = por %p348, %p349
    %p351 = scmp.ne.s32.totalorder %s339, %s340
    %p352 = scmp.eq.s32.totalorder %s31, 1
    %p353 = por %p351, %p352
    %p355 = scmp.ne.s32.totalorder %s340, %s354
    %p356 = scmp.eq.s32.totalorder %s31, 0
    %p357 = por %p355, %p356
    %s359 = sadd.s32 %s358, 1
    %p362 = scmp.eq.s32.totalorder %s25, 1
    %p363 = scmp.ne.s32.totalorder %s358, %s360
    %p364 = scmp.eq.s32.totalorder %s25, 0
    %p365 = por %p363, %p364
    %p366 = scmp.ne.s32.totalorder %s358, %s360
    %p367 = scmp.eq.s32.totalorder %s30, 1
    %p368 = por %p366, %p367
    %p369 = scmp.ne.s32.totalorder %s360, %s361
    %p370 = scmp.eq.s32.totalorder %s30, 0
    %p371 = por %p369, %p370
    %p372 = scmp.ne.s32.totalorder %s360, %s361
    %p373 = scmp.eq.s32.totalorder %s31, 1
    %p374 = por %p372, %p373
    %p376 = scmp.ne.s32.totalorder %s361, %s375
    %p377 = scmp.eq.s32.totalorder %s31, 0
    %p378 = por %p376, %p377
    %s379 = ssub.s32 %s25, %s32
    %p380 = scmp.eq.s32.totalorder %s379, 0
    %s382 = sadd.s32 %s381, 1
    %s383 = scalar_select %p380, %s381, %s382
    %p386 = pneg %p380
    %p387 = scmp.eq.s32.totalorder %s25, 1
    %p388 = por %p386, %p387
    %p389 = scmp.ne.s32.totalorder %s381, %s384
    %p390 = scmp.eq.s32.totalorder %s25, 0
    %p391 = por %p389, %p390
    %p392 = scmp.ne.s32.totalorder %s381, %s384
    %p393 = scmp.eq.s32.totalorder %s30, 1
    %p394 = por %p392, %p393
    %p395 = scmp.ne.s32.totalorder %s384, %s385
    %p396 = scmp.eq.s32.totalorder %s30, 0
    %p397 = por %p395, %p396
    %p398 = scmp.ne.s32.totalorder %s384, %s385
    %p399 = scmp.eq.s32.totalorder %s31, 1
    %p400 = por %p398, %p399
    %p402 = scmp.ne.s32.totalorder %s385, %s401
    %p403 = scmp.eq.s32.totalorder %s31, 0
    %p404 = por %p402, %p403
    %s405 = ssub.s32 %s25, %s32
    %p406 = scmp.eq.s32.totalorder %s405, 0
    %s408 = sadd.s32 %s407, 1
    %s409 = scalar_select %p406, %s407, %s408
    %p412 = pneg %p406
    %p413 = scmp.eq.s32.totalorder %s25, 1
    %p414 = por %p412, %p413
    %p415 = scmp.ne.s32.totalorder %s407, %s410
    %p416 = scmp.eq.s32.totalorder %s25, 0
    %p417 = por %p415, %p416
    %p418 = scmp.ne.s32.totalorder %s407, %s410
    %p419 = scmp.eq.s32.totalorder %s30, 1
    %p420 = por %p418, %p419
    %p421 = scmp.ne.s32.totalorder %s410, %s411
    %p422 = scmp.eq.s32.totalorder %s30, 0
    %p423 = por %p421, %p422
    %p424 = scmp.ne.s32.totalorder %s410, %s411
    %p425 = scmp.eq.s32.totalorder %s31, 1
    %p426 = por %p424, %p425
    %p428 = scmp.ne.s32.totalorder %s411, %s427
    %p429 = scmp.eq.s32.totalorder %s31, 0
    %p430 = por %p428, %p429
    %s431 = ssub.s32 %s25, %s32
    %p432 = scmp.eq.s32.totalorder %s431, 0
    %s434 = sadd.s32 %s433, 1
    %s435 = scalar_select %p432, %s433, %s434
    %p438 = pneg %p432
    %p439 = scmp.eq.s32.totalorder %s25, 1
    %p440 = por %p438, %p439
    %p441 = scmp.ne.s32.totalorder %s433, %s436
    %p442 = scmp.eq.s32.totalorder %s25, 0
    %p443 = por %p441, %p442
    %p444 = scmp.ne.s32.totalorder %s433, %s436
    %p445 = scmp.eq.s32.totalorder %s30, 1
    %p446 = por %p444, %p445
    %p447 = scmp.ne.s32.totalorder %s436, %s437
    %p448 = scmp.eq.s32.totalorder %s30, 0
    %p449 = por %p447, %p448
    %p450 = scmp.ne.s32.totalorder %s436, %s437
    %p451 = scmp.eq.s32.totalorder %s31, 1
    %p452 = por %p450, %p451
    %p454 = scmp.ne.s32.totalorder %s437, %s453
    %p455 = scmp.eq.s32.totalorder %s31, 0
    %p456 = por %p454, %p455
    %p457 = scmp.le.s32.totalorder 1, %s25
    %p458 = scmp.lt.s32.totalorder %s25, 3
    %p459 = pnand %p457, %p458
    %p460 = pneg %p459
    // Predicated region
    $region9: #{tpu_custom_call.1} parent=5 // pred_check
      _
    $region10: #{tpu_custom_call.1} parent=5 // pred_check_branch
      %462 = sbr.rel (%p459) target = $region12
    $region11: #{tpu_custom_call.1} parent=5 // pred_region
      %s463 = ssub.s32 %s25, 1
      // Predicated region
      $region13: #{tpu_custom_call.1} parent=11 // pred_check
        %p464 = pneg %p98
      $region14: #{tpu_custom_call.1} parent=11 // pred_check_branch
        %466 = sbr.rel (%p464) target = $region16
      $region15: #{tpu_custom_call.1} parent=11 // pred_region
        _
      $region16: #{tpu_custom_call.1} parent=11 // pred_fallthru
        _
      // Predicated region
      $region17: #{tpu_custom_call.1} parent=11 // pred_check
        %p467 = pneg %p119
      $region18: #{tpu_custom_call.1} parent=11 // pred_check_branch
        %469 = sbr.rel (%p467) target = $region20
      $region19: #{tpu_custom_call.1} parent=11 // pred_region
        _
      $region20: #{tpu_custom_call.1} parent=11 // pred_fallthru
        _
      // Predicated region
      $region21: #{tpu_custom_call.1} parent=11 // pred_check
        %p470 = pneg %p140
      $region22: #{tpu_custom_call.1} parent=11 // pred_check_branch
        %472 = sbr.rel (%p470) target = $region24
      $region23: #{tpu_custom_call.1} parent=11 // pred_region
        _
      $region24: #{tpu_custom_call.1} parent=11 // pred_fallthru
        _
      // Predicated region
      $region25: #{tpu_custom_call.1} parent=11 // pred_check
        %p473 = pneg %p161
      $region26: #{tpu_custom_call.1} parent=11 // pred_check_branch
        %475 = sbr.rel (%p473) target = $region28
      $region27: #{tpu_custom_call.1} parent=11 // pred_region
        _
      $region28: #{tpu_custom_call.1} parent=11 // pred_fallthru
        _
      // Predicated region
      $region29: #{tpu_custom_call.1} parent=11 // pred_check
        %p476 = pneg %p182
      $region30: #{tpu_custom_call.1} parent=11 // pred_check_branch
        %478 = sbr.rel (%p476) target = $region32
      $region31: #{tpu_custom_call.1} parent=11 // pred_region
        _
      $region32: #{tpu_custom_call.1} parent=11 // pred_fallthru
        _
      // Predicated region
      $region33: #{tpu_custom_call.1} parent=11 // pred_check
        %p479 = pneg %p203
      $region34: #{tpu_custom_call.1} parent=11 // pred_check_branch
        %481 = sbr.rel (%p479) target = $region36
      $region35: #{tpu_custom_call.1} parent=11 // pred_region
        _
      $region36: #{tpu_custom_call.1} parent=11 // pred_fallthru
        _
      // Predicated region
      $region37: #{tpu_custom_call.1} parent=11 // pred_check
        %p482 = pneg %p224
      $region38: #{tpu_custom_call.1} parent=11 // pred_check_branch
        %484 = sbr.rel (%p482) target = $region40
      $region39: #{tpu_custom_call.1} parent=11 // pred_region
        _
      $region40: #{tpu_custom_call.1} parent=11 // pred_fallthru
        _
      // Predicated region
      $region41: #{tpu_custom_call.1} parent=11 // pred_check
        %p485 = pneg %p245
      $region42: #{tpu_custom_call.1} parent=11 // pred_check_branch
        %487 = sbr.rel (%p485) target = $region44
      $region43: #{tpu_custom_call.1} parent=11 // pred_region
        _
      $region44: #{tpu_custom_call.1} parent=11 // pred_fallthru
        _
      // Predicated region
      $region45: #{tpu_custom_call.1} parent=11 // pred_check
        %p488 = pneg %p266
      $region46: #{tpu_custom_call.1} parent=11 // pred_check_branch
        %490 = sbr.rel (%p488) target = $region48
      $region47: #{tpu_custom_call.1} parent=11 // pred_region
        _
      $region48: #{tpu_custom_call.1} parent=11 // pred_fallthru
        _
      // Predicated region
      $region49: #{tpu_custom_call.1} parent=11 // pred_check
        %p491 = pneg %p287
      $region50: #{tpu_custom_call.1} parent=11 // pred_check_branch
        %493 = sbr.rel (%p491) target = $region52
      $region51: #{tpu_custom_call.1} parent=11 // pred_region
        _
      $region52: #{tpu_custom_call.1} parent=11 // pred_fallthru
        _
      // Predicated region
      $region53: #{tpu_custom_call.1} parent=11 // pred_check
        %p494 = pneg %p308
      $region54: #{tpu_custom_call.1} parent=11 // pred_check_branch
        %496 = sbr.rel (%p494) target = $region56
      $region55: #{tpu_custom_call.1} parent=11 // pred_region
        _
      $region56: #{tpu_custom_call.1} parent=11 // pred_fallthru
        _
      // Predicated region
      $region57: #{tpu_custom_call.1} parent=11 // pred_check
        %p497 = pneg %p329
      $region58: #{tpu_custom_call.1} parent=11 // pred_check_branch
        %499 = sbr.rel (%p497) target = $region60
      $region59: #{tpu_custom_call.1} parent=11 // pred_region
        _
      $region60: #{tpu_custom_call.1} parent=11 // pred_fallthru
        _
      // Predicated region
      $region61: #{tpu_custom_call.1} parent=11 // pred_check
        %p500 = pneg %p350
      $region62: #{tpu_custom_call.1} parent=11 // pred_check_branch
        %502 = sbr.rel (%p500) target = $region64
      $region63: #{tpu_custom_call.1} parent=11 // pred_region
        _
      $region64: #{tpu_custom_call.1} parent=11 // pred_fallthru
        _
      // Predicated region
      $region65: #{tpu_custom_call.1} parent=11 // pred_check
        %p503 = pneg %p371
      $region66: #{tpu_custom_call.1} parent=11 // pred_check_branch
        %505 = sbr.rel (%p503) target = $region68
      $region67: #{tpu_custom_call.1} parent=11 // pred_region
        _
      $region68: #{tpu_custom_call.1} parent=11 // pred_fallthru
        _
    $region12: #{tpu_custom_call.1} parent=5 // pred_fallthru
      _
    %p506 = scmp.lt.s32.totalorder %s25, 2
    // Predicated region
    $region69: #{tpu_custom_call.1} parent=5 // pred_check
      %p507 = pneg %p506
    $region70: #{tpu_custom_call.1} parent=5 // pred_check_branch
      %509 = sbr.rel (%p507) target = $region72
    $region71: #{tpu_custom_call.1} parent=5 // pred_region
      // Predicated region
      $region73: #{tpu_custom_call.1} parent=71 // pred_check
        %p510 = pneg %p45
      $region74: #{tpu_custom_call.1} parent=71 // pred_check_branch
        %512 = sbr.rel (%p510) target = $region76
      $region75: #{tpu_custom_call.1} parent=71 // pred_region
        %s513 = smul.u32 64, %s25
        %p514 = scmp.lt.s32.totalorder %s513, 127
        %s515 = scalar_select %p514, %s513, 127
        %s516 = smul.addr %s515, 4
        %s517 = scalar_lea.vmem %s0, %s516
        %s518 = smul.u32 64, %s25
      $region76: #{tpu_custom_call.1} parent=71 // pred_fallthru
        _
      // Predicated region
      $region77: #{tpu_custom_call.1} parent=71 // pred_check
        %p519 = pneg %p71
      $region78: #{tpu_custom_call.1} parent=71 // pred_check_branch
        %521 = sbr.rel (%p519) target = $region80
      $region79: #{tpu_custom_call.1} parent=71 // pred_region
        %s522 = smul.u32 64, %s25
        %p523 = scmp.lt.s32.totalorder %s522, 127
        %s524 = scalar_select %p523, %s522, 127
        %s525 = smul.addr %s524, 8
        %s526 = scalar_lea.vmem %s1, %s525
        %s527 = smul.u32 64, %s25
      $region80: #{tpu_custom_call.1} parent=71 // pred_fallthru
        _
    $region72: #{tpu_custom_call.1} parent=5 // pred_fallthru
      _
    %p528 = scmp.le.s32.totalorder 1, %s25
    %p529 = scmp.lt.s32.totalorder %s25, 3
    %p530 = pnand %p528, %p529
    %p531 = pneg %p530
    // Predicated region
    $region81: #{tpu_custom_call.1} parent=5 // pred_check
      _
    $region82: #{tpu_custom_call.1} parent=5 // pred_check_branch
      %533 = sbr.rel (%p530) target = $region84
    $region83: #{tpu_custom_call.1} parent=5 // pred_region
      %s534 = ssub.s32 %s25, 1
      %s535 = smul.u32 64, %s30
      %p536 = scmp.lt.s32.totalorder %s535, 127
      %s537 = scalar_select %p536, %s535, 127
      %s538 = smul.addr %s537, 4
      %s539 = scalar_lea.vmem %s0, %s538
      %p540 = pneg %p51
      %p541 = pneg %p48
      %s542 = smul.u32 64, %s30
      %p543 = scmp.lt.s32.totalorder %s542, 127
      %s544 = scalar_select %p543, %s542, 127
      %s545 = smul.addr %s544, 8
      %s546 = scalar_lea.vmem %s1, %s545
      %p547 = pneg %p77
      %p548 = pneg %p74
      %p549 = pneg %p98
      %p550 = pneg %p95
      %p551 = pneg %p119
      %p552 = pneg %p116
      %p553 = pneg %p140
      %p554 = pneg %p137
      %p555 = pneg %p161
      %p556 = pneg %p158
      %p557 = pneg %p182
      %p558 = pneg %p179
      %p559 = pneg %p203
      %p560 = pneg %p200
      %p561 = pneg %p224
      %p562 = pneg %p221
      %p563 = pneg %p245
      %p564 = pneg %p242
      %p565 = pneg %p266
      %p566 = pneg %p263
      %p567 = pneg %p287
      %p568 = pneg %p284
      %p569 = pneg %p308
      %p570 = pneg %p305
      %p571 = pneg %p329
      %p572 = pneg %p326
      %p573 = pneg %p350
      %p574 = pneg %p347
      %p575 = pneg %p371
      %p576 = pneg %p368
      %p577 = pneg %p397
      %p578 = pneg %p394
      %s579 = smul.u32 64, %s30
      %p580 = scmp.lt.s32.totalorder %s579, 127
      %s581 = scalar_select %p580, %s579, 127
      %s582 = smul.addr %s581, 8
      %s583 = scalar_lea.vmem %s16, %s582
      %p584 = pneg %p423
      %p585 = pneg %p420
      %s586 = smul.u32 64, %s30
      %p587 = scmp.lt.s32.totalorder %s586, 127
      %s588 = scalar_select %p587, %s586, 127
      %s589 = smul.addr %s588, 8
      %s590 = scalar_lea.vmem %s17, %s589
      %p591 = pneg %p449
      %p592 = pneg %p446
      %s593 = smul.u32 64, %s30
      %p594 = scmp.lt.s32.totalorder %s593, 127
      %s595 = scalar_select %p594, %s593, 127
      %s596 = smul.addr %s595, 8
      %s597 = scalar_lea.vmem %s18, %s596
      %s598 = smul.u32 64, %s30
      %p599 = scmp.lt.s32.totalorder %s598, 127
      %s600 = scalar_select %p599, %s598, 127
      %s601 = smul.addr %s600, 4
      %s602 = scalar_lea.vmem %s0, %s601
      %s603 = smul.u32 64, %s30
      %s604 = smul.u32 64, %s30
      %p605 = scmp.lt.s32.totalorder %s604, 127
      %s606 = scalar_select %p605, %s604, 127
      %s607 = smul.addr %s606, 8
      %s608 = scalar_lea.vmem %s1, %s607
      %s609 = smul.u32 64, %s30
      %s610 = smul.u32 64, %s30
      %p611 = scmp.lt.s32.totalorder %s610, 127
      %s612 = scalar_select %p611, %s610, 127
      %s613 = smul.addr %s612, 8
      %s614 = scalar_lea.vmem %s16, %s613
      %s615 = smul.u32 64, %s30
      %s616 = smul.u32 64, %s30
      %p617 = scmp.lt.s32.totalorder %s616, 127
      %s618 = scalar_select %p617, %s616, 127
      %s619 = smul.addr %s618, 8
      %s620 = scalar_lea.vmem %s17, %s619
      %s621 = smul.u32 64, %s30
      %s622 = smul.u32 64, %s30
      %p623 = scmp.lt.s32.totalorder %s622, 127
      %s624 = scalar_select %p623, %s622, 127
      %s625 = smul.addr %s624, 8
      %s626 = scalar_lea.vmem %s18, %s625
      %s627 = smul.u32 64, %s30
      %v629 = vld [vmem:[%s602] sm:$0xf]
      %v630 = vld [vmem:[%s602 + $0x4] sm:$0xf]
      %v631 = vld [vmem:[%s602 + $0x8] sm:$0xf]
      %v632 = vld [vmem:[%s602 + $0xc] sm:$0xf]
      %v633 = vld [vmem:[%s602 + $0x10] sm:$0xf]
      %v634 = vld [vmem:[%s602 + $0x14] sm:$0xf]
      %v635 = vld [vmem:[%s602 + $0x18] sm:$0xf]
      %v636 = vld [vmem:[%s602 + $0x1c] sm:$0xf]
      %v637 = vld [vmem:[%s602 + $0x20] sm:$0xf]
      %v638 = vld [vmem:[%s602 + $0x24] sm:$0xf]
      %v639 = vld [vmem:[%s602 + $0x28] sm:$0xf]
      %v640 = vld [vmem:[%s602 + $0x2c] sm:$0xf]
      %v641 = vld [vmem:[%s602 + $0x30] sm:$0xf]
      %v642 = vld [vmem:[%s602 + $0x34] sm:$0xf]
      %v643 = vld [vmem:[%s602 + $0x38] sm:$0xf]
      %v644 = vld [vmem:[%s602 + $0x3c] sm:$0xf]
      %v645 = vld [vmem:[%s602 + $0x40] sm:$0xf]
      %v646 = vld [vmem:[%s602 + $0x44] sm:$0xf]
      %v647 = vld [vmem:[%s602 + $0x48] sm:$0xf]
      %v648 = vld [vmem:[%s602 + $0x4c] sm:$0xf]
      %v649 = vld [vmem:[%s602 + $0x50] sm:$0xf]
      %v650 = vld [vmem:[%s602 + $0x54] sm:$0xf]
      %v651 = vld [vmem:[%s602 + $0x58] sm:$0xf]
      %v652 = vld [vmem:[%s602 + $0x5c] sm:$0xf]
      %v653 = vld [vmem:[%s602 + $0x60] sm:$0xf]
      %v654 = vld [vmem:[%s602 + $0x64] sm:$0xf]
      %v655 = vld [vmem:[%s602 + $0x68] sm:$0xf]
      %v656 = vld [vmem:[%s602 + $0x6c] sm:$0xf]
      %v657 = vld [vmem:[%s602 + $0x70] sm:$0xf]
      %v658 = vld [vmem:[%s602 + $0x74] sm:$0xf]
      %v659 = vld [vmem:[%s602 + $0x78] sm:$0xf]
      %v660 = vld [vmem:[%s602 + $0x7c] sm:$0xf]
      %v661 = vld [vmem:[%s602 + $0x80] sm:$0xf]
      %v662 = vld [vmem:[%s602 + $0x84] sm:$0xf]
      %v663 = vld [vmem:[%s602 + $0x88] sm:$0xf]
      %v664 = vld [vmem:[%s602 + $0x8c] sm:$0xf]
      %v665 = vld [vmem:[%s602 + $0x90] sm:$0xf]
      %v666 = vld [vmem:[%s602 + $0x94] sm:$0xf]
      %v667 = vld [vmem:[%s602 + $0x98] sm:$0xf]
      %v668 = vld [vmem:[%s602 + $0x9c] sm:$0xf]
      %v669 = vld [vmem:[%s602 + $0xa0] sm:$0xf]
      %v670 = vld [vmem:[%s602 + $0xa4] sm:$0xf]
      %v671 = vld [vmem:[%s602 + $0xa8] sm:$0xf]
      %v672 = vld [vmem:[%s602 + $0xac] sm:$0xf]
      %v673 = vld [vmem:[%s602 + $0xb0] sm:$0xf]
      %v674 = vld [vmem:[%s602 + $0xb4] sm:$0xf]
      %v675 = vld [vmem:[%s602 + $0xb8] sm:$0xf]
      %v676 = vld [vmem:[%s602 + $0xbc] sm:$0xf]
      %v677 = vld [vmem:[%s602 + $0xc0] sm:$0xf]
      %v678 = vld [vmem:[%s602 + $0xc4] sm:$0xf]
      %v679 = vld [vmem:[%s602 + $0xc8] sm:$0xf]
      %v680 = vld [vmem:[%s602 + $0xcc] sm:$0xf]
      %v681 = vld [vmem:[%s602 + $0xd0] sm:$0xf]
      %v682 = vld [vmem:[%s602 + $0xd4] sm:$0xf]
      %v683 = vld [vmem:[%s602 + $0xd8] sm:$0xf]
      %v684 = vld [vmem:[%s602 + $0xdc] sm:$0xf]
      %v685 = vld [vmem:[%s602 + $0xe0] sm:$0xf]
      %v686 = vld [vmem:[%s602 + $0xe4] sm:$0xf]
      %v687 = vld [vmem:[%s602 + $0xe8] sm:$0xf]
      %v688 = vld [vmem:[%s602 + $0xec] sm:$0xf]
      %v689 = vld [vmem:[%s602 + $0xf0] sm:$0xf]
      %v690 = vld [vmem:[%s602 + $0xf4] sm:$0xf]
      %v691 = vld [vmem:[%s602 + $0xf8] sm:$0xf]
      %v692 = vld [vmem:[%s602 + $0xfc] sm:$0xf]
      %v693 = vld [vmem:[%s2] sm:$0xf]
      %v694 = vld [vmem:[%s2 + $0x4] sm:$0xf]
      %v695 = vld [vmem:[%s3] sm:$0x1]
      %v697 = vperm.slane %v695, 0
      %v763 = vunpack.c.l.b16 %v629
      %v764 = vunpack.c.l.b16 %v630
      %v765 = vunpack.c.l.b16 %v631
      %v766 = vunpack.c.l.b16 %v632
      %v767 = vunpack.c.l.b16 %v633
      %v768 = vunpack.c.l.b16 %v634
      %v769 = vunpack.c.l.b16 %v635
      %v770 = vunpack.c.l.b16 %v636
      %v771 = vunpack.c.l.b16 %v637
      %v772 = vunpack.c.l.b16 %v638
      %v773 = vunpack.c.l.b16 %v639
      %v774 = vunpack.c.l.b16 %v640
      %v775 = vunpack.c.l.b16 %v641
      %v776 = vunpack.c.l.b16 %v642
      %v777 = vunpack.c.l.b16 %v643
      %v778 = vunpack.c.l.b16 %v644
      %v779 = vunpack.c.l.b16 %v645
      %v780 = vunpack.c.l.b16 %v646
      %v781 = vunpack.c.l.b16 %v647
      %v782 = vunpack.c.l.b16 %v648
      %v783 = vunpack.c.l.b16 %v649
      %v784 = vunpack.c.l.b16 %v650
      %v785 = vunpack.c.l.b16 %v651
      %v786 = vunpack.c.l.b16 %v652
      %v787 = vunpack.c.l.b16 %v653
      %v788 = vunpack.c.l.b16 %v654
      %v789 = vunpack.c.l.b16 %v655
      %v790 = vunpack.c.l.b16 %v656
      %v791 = vunpack.c.l.b16 %v657
      %v792 = vunpack.c.l.b16 %v658
      %v793 = vunpack.c.l.b16 %v659
      %v794 = vunpack.c.l.b16 %v660
      %v795 = vunpack.c.l.b16 %v661
      %v796 = vunpack.c.l.b16 %v662
      %v797 = vunpack.c.l.b16 %v663
      %v798 = vunpack.c.l.b16 %v664
      %v799 = vunpack.c.l.b16 %v665
      %v800 = vunpack.c.l.b16 %v666
      %v801 = vunpack.c.l.b16 %v667
      %v802 = vunpack.c.l.b16 %v668
      %v803 = vunpack.c.l.b16 %v669
      %v804 = vunpack.c.l.b16 %v670
      %v805 = vunpack.c.l.b16 %v671
      %v806 = vunpack.c.l.b16 %v672
      %v807 = vunpack.c.l.b16 %v673
      %v808 = vunpack.c.l.b16 %v674
      %v809 = vunpack.c.l.b16 %v675
      %v810 = vunpack.c.l.b16 %v676
      %v811 = vunpack.c.l.b16 %v677
      %v812 = vunpack.c.l.b16 %v678
      %v813 = vunpack.c.l.b16 %v679
      %v814 = vunpack.c.l.b16 %v680
      %v815 = vunpack.c.l.b16 %v681
      %v816 = vunpack.c.l.b16 %v682
      %v817 = vunpack.c.l.b16 %v683
      %v818 = vunpack.c.l.b16 %v684
      %v819 = vunpack.c.l.b16 %v685
      %v820 = vunpack.c.l.b16 %v686
      %v821 = vunpack.c.l.b16 %v687
      %v822 = vunpack.c.l.b16 %v688
      %v823 = vunpack.c.l.b16 %v689
      %v824 = vunpack.c.l.b16 %v690
      %v825 = vunpack.c.l.b16 %v691
      %v826 = vunpack.c.l.b16 %v692
      %v827 = vpack.c.b16 %v764, %v763
      %v828 = vpack.c.b16 %v766, %v765
      %v829 = vpack.c.b16 %v768, %v767
      %v830 = vpack.c.b16 %v770, %v769
      %v831 = vpack.c.b16 %v772, %v771
      %v832 = vpack.c.b16 %v774, %v773
      %v833 = vpack.c.b16 %v776, %v775
      %v834 = vpack.c.b16 %v778, %v777
      %v835 = vpack.c.b16 %v780, %v779
      %v836 = vpack.c.b16 %v782, %v781
      %v837 = vpack.c.b16 %v784, %v783
      %v838 = vpack.c.b16 %v786, %v785
      %v839 = vpack.c.b16 %v788, %v787
      %v840 = vpack.c.b16 %v790, %v789
      %v841 = vpack.c.b16 %v792, %v791
      %v842 = vpack.c.b16 %v794, %v793
      %v843 = vpack.c.b16 %v796, %v795
      %v844 = vpack.c.b16 %v798, %v797
      %v845 = vpack.c.b16 %v800, %v799
      %v846 = vpack.c.b16 %v802, %v801
      %v847 = vpack.c.b16 %v804, %v803
      %v848 = vpack.c.b16 %v806, %v805
      %v849 = vpack.c.b16 %v808, %v807
      %v850 = vpack.c.b16 %v810, %v809
      %v851 = vpack.c.b16 %v812, %v811
      %v852 = vpack.c.b16 %v814, %v813
      %v853 = vpack.c.b16 %v816, %v815
      %v854 = vpack.c.b16 %v818, %v817
      %v855 = vpack.c.b16 %v820, %v819
      %v856 = vpack.c.b16 %v822, %v821
      %v857 = vpack.c.b16 %v824, %v823
      %v858 = vpack.c.b16 %v826, %v825
      %v861 = vunpack.c.l.b16 %v693
      %v862 = vunpack.c.l.b16 %v694
      %v863 = vpack.c.b16 %v862, %v861
      %vm865 = vcmask 130048
      %v867 = vsel %vm865, %v827, 0
      %v870 = vsel %vm865, %v828, 0
      %v873 = vsel %vm865, %v829, 0
      %v876 = vsel %vm865, %v830, 0
      %v879 = vsel %vm865, %v831, 0
      %v882 = vsel %vm865, %v832, 0
      %v885 = vsel %vm865, %v833, 0
      %v888 = vsel %vm865, %v834, 0
      %v891 = vsel %vm865, %v835, 0
      %v894 = vsel %vm865, %v836, 0
      %v897 = vsel %vm865, %v837, 0
      %v900 = vsel %vm865, %v838, 0
      %v903 = vsel %vm865, %v839, 0
      %v906 = vsel %vm865, %v840, 0
      %v909 = vsel %vm865, %v841, 0
      %v912 = vsel %vm865, %v842, 0
      %v915 = vsel %vm865, %v843, 0
      %v918 = vsel %vm865, %v844, 0
      %v921 = vsel %vm865, %v845, 0
      %v924 = vsel %vm865, %v846, 0
      %v927 = vsel %vm865, %v847, 0
      %v930 = vsel %vm865, %v848, 0
      %v933 = vsel %vm865, %v849, 0
      %v936 = vsel %vm865, %v850, 0
      %v939 = vsel %vm865, %v851, 0
      %v942 = vsel %vm865, %v852, 0
      %v945 = vsel %vm865, %v853, 0
      %v948 = vsel %vm865, %v854, 0
      %v951 = vsel %vm865, %v855, 0
      %v954 = vsel %vm865, %v856, 0
      %v957 = vsel %vm865, %v857, 0
      %v960 = vsel %vm865, %v858, 0
      %962 = vmatpush.bf16.msra.mxu0 0
      %963 = vmatpush.bf16.msra.mxu0 0
      %964 = vmatpush.bf16.msra.mxu0 0
      %965 = vmatpush.bf16.msra.mxu0 0
      %966 = vmatpush.bf16.msra.mxu0 0
      %967 = vmatpush.bf16.msra.mxu0 0
      %968 = vmatpush.bf16.msra.mxu0 0
      %969 = vmatpush.bf16.msra.mxu0 %v863
      %970 = vmatmul.bf16.gmra.mxu0 %v867
      %v971 = vpop.f32.mrf.mxu0
      %v972 = vadd.f32 %v697, %v971
      %v973 = vpop.f32.mrf.mxu0
      %v974 = vadd.f32 %v697, %v973
      %975 = vmatmul.bf16.gmra.mxu0 %v870
      %v976 = vpop.f32.mrf.mxu0
      %v977 = vadd.f32 %v697, %v976
      %v978 = vpop.f32.mrf.mxu0
      %v979 = vadd.f32 %v697, %v978
      %980 = vmatmul.bf16.gmra.mxu0 %v873
      %v981 = vpop.f32.mrf.mxu0
      %v982 = vadd.f32 %v697, %v981
      %v983 = vpop.f32.mrf.mxu0
      %v984 = vadd.f32 %v697, %v983
      %985 = vmatmul.bf16.gmra.mxu0 %v876
      %v986 = vpop.f32.mrf.mxu0
      %v987 = vadd.f32 %v697, %v986
      %v988 = vpop.f32.mrf.mxu0
      %v989 = vadd.f32 %v697, %v988
      %990 = vmatmul.bf16.gmra.mxu0 %v879
      %v991 = vpop.f32.mrf.mxu0
      %v992 = vadd.f32 %v697, %v991
      %v993 = vpop.f32.mrf.mxu0
      %v994 = vadd.f32 %v697, %v993
      %995 = vmatmul.bf16.gmra.mxu0 %v882
      %v996 = vpop.f32.mrf.mxu0
      %v997 = vadd.f32 %v697, %v996
      %v998 = vpop.f32.mrf.mxu0
      %v999 = vadd.f32 %v697, %v998
      %1000 = vmatmul.bf16.gmra.mxu0 %v885
      %v1001 = vpop.f32.mrf.mxu0
      %v1002 = vadd.f32 %v697, %v1001
      %v1003 = vpop.f32.mrf.mxu0
      %v1004 = vadd.f32 %v697, %v1003
      %1005 = vmatmul.bf16.gmra.mxu0 %v888
      %v1006 = vpop.f32.mrf.mxu0
      %v1007 = vadd.f32 %v697, %v1006
      %v1008 = vpop.f32.mrf.mxu0
      %v1009 = vadd.f32 %v697, %v1008
      %1010 = vmatmul.bf16.gmra.mxu0 %v891
      %v1011 = vpop.f32.mrf.mxu0
      %v1012 = vadd.f32 %v697, %v1011
      %v1013 = vpop.f32.mrf.mxu0
      %v1014 = vadd.f32 %v697, %v1013
      %1015 = vmatmul.bf16.gmra.mxu0 %v894
      %v1016 = vpop.f32.mrf.mxu0
      %v1017 = vadd.f32 %v697, %v1016
      %v1018 = vpop.f32.mrf.mxu0
      %v1019 = vadd.f32 %v697, %v1018
      %1020 = vmatmul.bf16.gmra.mxu0 %v897
      %v1021 = vpop.f32.mrf.mxu0
      %v1022 = vadd.f32 %v697, %v1021
      %v1023 = vpop.f32.mrf.mxu0
      %v1024 = vadd.f32 %v697, %v1023
      %1025 = vmatmul.bf16.gmra.mxu0 %v900
      %v1026 = vpop.f32.mrf.mxu0
      %v1027 = vadd.f32 %v697, %v1026
      %v1028 = vpop.f32.mrf.mxu0
      %v1029 = vadd.f32 %v697, %v1028
      %1030 = vmatmul.bf16.gmra.mxu0 %v903
      %v1031 = vpop.f32.mrf.mxu0
      %v1032 = vadd.f32 %v697, %v1031
      %v1033 = vpop.f32.mrf.mxu0
      %v1034 = vadd.f32 %v697, %v1033
      %1035 = vmatmul.bf16.gmra.mxu0 %v906
      %v1036 = vpop.f32.mrf.mxu0
      %v1037 = vadd.f32 %v697, %v1036
      %v1038 = vpop.f32.mrf.mxu0
      %v1039 = vadd.f32 %v697, %v1038
      %1040 = vmatmul.bf16.gmra.mxu0 %v909
      %v1041 = vpop.f32.mrf.mxu0
      %v1042 = vadd.f32 %v697, %v1041
      %v1043 = vpop.f32.mrf.mxu0
      %v1044 = vadd.f32 %v697, %v1043
      %1045 = vmatmul.bf16.gmra.mxu0 %v912
      %v1046 = vpop.f32.mrf.mxu0
      %v1047 = vadd.f32 %v697, %v1046
      %v1048 = vpop.f32.mrf.mxu0
      %v1049 = vadd.f32 %v697, %v1048
      %1050 = vmatmul.bf16.gmra.mxu0 %v915
      %v1051 = vpop.f32.mrf.mxu0
      %v1052 = vadd.f32 %v697, %v1051
      %v1053 = vpop.f32.mrf.mxu0
      %v1054 = vadd.f32 %v697, %v1053
      %1055 = vmatmul.bf16.gmra.mxu0 %v918
      %v1056 = vpop.f32.mrf.mxu0
      %v1057 = vadd.f32 %v697, %v1056
      %v1058 = vpop.f32.mrf.mxu0
      %v1059 = vadd.f32 %v697, %v1058
      %1060 = vmatmul.bf16.gmra.mxu0 %v921
      %v1061 = vpop.f32.mrf.mxu0
      %v1062 = vadd.f32 %v697, %v1061
      %v1063 = vpop.f32.mrf.mxu0
      %v1064 = vadd.f32 %v697, %v1063
      %1065 = vmatmul.bf16.gmra.mxu0 %v924
      %v1066 = vpop.f32.mrf.mxu0
      %v1067 = vadd.f32 %v697, %v1066
      %v1068 = vpop.f32.mrf.mxu0
      %v1069 = vadd.f32 %v697, %v1068
      %1070 = vmatmul.bf16.gmra.mxu0 %v927
      %v1071 = vpop.f32.mrf.mxu0
      %v1072 = vadd.f32 %v697, %v1071
      %v1073 = vpop.f32.mrf.mxu0
      %v1074 = vadd.f32 %v697, %v1073
      %1075 = vmatmul.bf16.gmra.mxu0 %v930
      %v1076 = vpop.f32.mrf.mxu0
      %v1077 = vadd.f32 %v697, %v1076
      %v1078 = vpop.f32.mrf.mxu0
      %v1079 = vadd.f32 %v697, %v1078
      %1080 = vmatmul.bf16.gmra.mxu0 %v933
      %v1081 = vpop.f32.mrf.mxu0
      %v1082 = vadd.f32 %v697, %v1081
      %v1083 = vpop.f32.mrf.mxu0
      %v1084 = vadd.f32 %v697, %v1083
      %1085 = vmatmul.bf16.gmra.mxu0 %v936
      %v1086 = vpop.f32.mrf.mxu0
      %v1087 = vadd.f32 %v697, %v1086
      %v1088 = vpop.f32.mrf.mxu0
      %v1089 = vadd.f32 %v697, %v1088
      %1090 = vmatmul.bf16.gmra.mxu0 %v939
      %v1091 = vpop.f32.mrf.mxu0
      %v1092 = vadd.f32 %v697, %v1091
      %v1093 = vpop.f32.mrf.mxu0
      %v1094 = vadd.f32 %v697, %v1093
      %1095 = vmatmul.bf16.gmra.mxu0 %v942
      %v1096 = vpop.f32.mrf.mxu0
      %v1097 = vadd.f32 %v697, %v1096
      %v1098 = vpop.f32.mrf.mxu0
      %v1099 = vadd.f32 %v697, %v1098
      %1100 = vmatmul.bf16.gmra.mxu0 %v945
      %v1101 = vpop.f32.mrf.mxu0
      %v1102 = vadd.f32 %v697, %v1101
      %v1103 = vpop.f32.mrf.mxu0
      %v1104 = vadd.f32 %v697, %v1103
      %1105 = vmatmul.bf16.gmra.mxu0 %v948
      %v1106 = vpop.f32.mrf.mxu0
      %v1107 = vadd.f32 %v697, %v1106
      %v1108 = vpop.f32.mrf.mxu0
      %v1109 = vadd.f32 %v697, %v1108
      %1110 = vmatmul.bf16.gmra.mxu0 %v951
      %v1111 = vpop.f32.mrf.mxu0
      %v1112 = vadd.f32 %v697, %v1111
      %v1113 = vpop.f32.mrf.mxu0
      %v1114 = vadd.f32 %v697, %v1113
      %1115 = vmatmul.bf16.gmra.mxu0 %v954
      %v1116 = vpop.f32.mrf.mxu0
      %v1117 = vadd.f32 %v697, %v1116
      %v1118 = vpop.f32.mrf.mxu0
      %v1119 = vadd.f32 %v697, %v1118
      %1120 = vmatmul.bf16.gmra.mxu0 %v957
      %v1121 = vpop.f32.mrf.mxu0
      %v1122 = vadd.f32 %v697, %v1121
      %v1123 = vpop.f32.mrf.mxu0
      %v1124 = vadd.f32 %v697, %v1123
      %1125 = vmatmul.bf16.gmra.mxu0 %v960
      %v1126 = vpop.f32.mrf.mxu0
      %v1127 = vadd.f32 %v697, %v1126
      %v1128 = vpop.f32.mrf.mxu0
      %v1129 = vadd.f32 %v697, %v1128
      %1130 = vdwg.mxu0
      %vm1131 = vcmp.gt.f32.partialorder %v972, 0.0
      %vm1132 = vcmp.gt.f32.partialorder %v974, 0.0
      %vm1133 = vcmp.gt.f32.partialorder %v977, 0.0
      %vm1134 = vcmp.gt.f32.partialorder %v979, 0.0
      %vm1135 = vcmp.gt.f32.partialorder %v982, 0.0
      %vm1136 = vcmp.gt.f32.partialorder %v984, 0.0
      %vm1137 = vcmp.gt.f32.partialorder %v987, 0.0
      %vm1138 = vcmp.gt.f32.partialorder %v989, 0.0
      %vm1139 = vcmp.gt.f32.partialorder %v992, 0.0
      %vm1140 = vcmp.gt.f32.partialorder %v994, 0.0
      %vm1141 = vcmp.gt.f32.partialorder %v997, 0.0
      %vm1142 = vcmp.gt.f32.partialorder %v999, 0.0
      %vm1143 = vcmp.gt.f32.partialorder %v1002, 0.0
      %vm1144 = vcmp.gt.f32.partialorder %v1004, 0.0
      %vm1145 = vcmp.gt.f32.partialorder %v1007, 0.0
      %vm1146 = vcmp.gt.f32.partialorder %v1009, 0.0
      %vm1147 = vcmp.gt.f32.partialorder %v1012, 0.0
      %vm1148 = vcmp.gt.f32.partialorder %v1014, 0.0
      %vm1149 = vcmp.gt.f32.partialorder %v1017, 0.0
      %vm1150 = vcmp.gt.f32.partialorder %v1019, 0.0
      %vm1151 = vcmp.gt.f32.partialorder %v1022, 0.0
      %vm1152 = vcmp.gt.f32.partialorder %v1024, 0.0
      %vm1153 = vcmp.gt.f32.partialorder %v1027, 0.0
      %vm1154 = vcmp.gt.f32.partialorder %v1029, 0.0
      %vm1155 = vcmp.gt.f32.partialorder %v1032, 0.0
      %vm1156 = vcmp.gt.f32.partialorder %v1034, 0.0
      %vm1157 = vcmp.gt.f32.partialorder %v1037, 0.0
      %vm1158 = vcmp.gt.f32.partialorder %v1039, 0.0
      %vm1159 = vcmp.gt.f32.partialorder %v1042, 0.0
      %vm1160 = vcmp.gt.f32.partialorder %v1044, 0.0
      %vm1161 = vcmp.gt.f32.partialorder %v1047, 0.0
      %vm1162 = vcmp.gt.f32.partialorder %v1049, 0.0
      %vm1163 = vcmp.gt.f32.partialorder %v1052, 0.0
      %vm1164 = vcmp.gt.f32.partialorder %v1054, 0.0
      %vm1165 = vcmp.gt.f32.partialorder %v1057, 0.0
      %vm1166 = vcmp.gt.f32.partialorder %v1059, 0.0
      %vm1167 = vcmp.gt.f32.partialorder %v1062, 0.0
      %vm1168 = vcmp.gt.f32.partialorder %v1064, 0.0
      %vm1169 = vcmp.gt.f32.partialorder %v1067, 0.0
      %vm1170 = vcmp.gt.f32.partialorder %v1069, 0.0
      %vm1171 = vcmp.gt.f32.partialorder %v1072, 0.0
      %vm1172 = vcmp.gt.f32.partialorder %v1074, 0.0
      %vm1173 = vcmp.gt.f32.partialorder %v1077, 0.0
      %vm1174 = vcmp.gt.f32.partialorder %v1079, 0.0
      %vm1175 = vcmp.gt.f32.partialorder %v1082, 0.0
      %vm1176 = vcmp.gt.f32.partialorder %v1084, 0.0
      %vm1177 = vcmp.gt.f32.partialorder %v1087, 0.0
      %vm1178 = vcmp.gt.f32.partialorder %v1089, 0.0
      %vm1179 = vcmp.gt.f32.partialorder %v1092, 0.0
      %vm1180 = vcmp.gt.f32.partialorder %v1094, 0.0
      %vm1181 = vcmp.gt.f32.partialorder %v1097, 0.0
      %vm1182 = vcmp.gt.f32.partialorder %v1099, 0.0
      %vm1183 = vcmp.gt.f32.partialorder %v1102, 0.0
      %vm1184 = vcmp.gt.f32.partialorder %v1104, 0.0
      %vm1185 = vcmp.gt.f32.partialorder %v1107, 0.0
      %vm1186 = vcmp.gt.f32.partialorder %v1109, 0.0
      %vm1187 = vcmp.gt.f32.partialorder %v1112, 0.0
      %vm1188 = vcmp.gt.f32.partialorder %v1114, 0.0
      %vm1189 = vcmp.gt.f32.partialorder %v1117, 0.0
      %vm1190 = vcmp.gt.f32.partialorder %v1119, 0.0
      %vm1191 = vcmp.gt.f32.partialorder %v1122, 0.0
      %vm1192 = vcmp.gt.f32.partialorder %v1124, 0.0
      %vm1193 = vcmp.gt.f32.partialorder %v1127, 0.0
      %vm1194 = vcmp.gt.f32.partialorder %v1129, 0.0
      %v1195 = vmul.f32 %v972, 0.2
      %v1196 = vmul.f32 %v974, 0.2
      %v1197 = vmul.f32 %v977, 0.2
      %v1198 = vmul.f32 %v979, 0.2
      %v1199 = vmul.f32 %v982, 0.2
      %v1200 = vmul.f32 %v984, 0.2
      %v1201 = vmul.f32 %v987, 0.2
      %v1202 = vmul.f32 %v989, 0.2
      %v1203 = vmul.f32 %v992, 0.2
      %v1204 = vmul.f32 %v994, 0.2
      %v1205 = vmul.f32 %v997, 0.2
      %v1206 = vmul.f32 %v999, 0.2
      %v1207 = vmul.f32 %v1002, 0.2
      %v1208 = vmul.f32 %v1004, 0.2
      %v1209 = vmul.f32 %v1007, 0.2
      %v1210 = vmul.f32 %v1009, 0.2
      %v1211 = vmul.f32 %v1012, 0.2
      %v1212 = vmul.f32 %v1014, 0.2
      %v1213 = vmul.f32 %v1017, 0.2
      %v1214 = vmul.f32 %v1019, 0.2
      %v1215 = vmul.f32 %v1022, 0.2
      %v1216 = vmul.f32 %v1024, 0.2
      %v1217 = vmul.f32 %v1027, 0.2
      %v1218 = vmul.f32 %v1029, 0.2
      %v1219 = vmul.f32 %v1032, 0.2
      %v1220 = vmul.f32 %v1034, 0.2
      %v1221 = vmul.f32 %v1037, 0.2
      %v1222 = vmul.f32 %v1039, 0.2
      %v1223 = vmul.f32 %v1042, 0.2
      %v1224 = vmul.f32 %v1044, 0.2
      %v1225 = vmul.f32 %v1047, 0.2
      %v1226 = vmul.f32 %v1049, 0.2
      %v1227 = vmul.f32 %v1052, 0.2
      %v1228 = vmul.f32 %v1054, 0.2
      %v1229 = vmul.f32 %v1057, 0.2
      %v1230 = vmul.f32 %v1059, 0.2
      %v1231 = vmul.f32 %v1062, 0.2
      %v1232 = vmul.f32 %v1064, 0.2
      %v1233 = vmul.f32 %v1067, 0.2
      %v1234 = vmul.f32 %v1069, 0.2
      %v1235 = vmul.f32 %v1072, 0.2
      %v1236 = vmul.f32 %v1074, 0.2
      %v1237 = vmul.f32 %v1077, 0.2
      %v1238 = vmul.f32 %v1079, 0.2
      %v1239 = vmul.f32 %v1082, 0.2
      %v1240 = vmul.f32 %v1084, 0.2
      %v1241 = vmul.f32 %v1087, 0.2
      %v1242 = vmul.f32 %v1089, 0.2
      %v1243 = vmul.f32 %v1092, 0.2
      %v1244 = vmul.f32 %v1094, 0.2
      %v1245 = vmul.f32 %v1097, 0.2
      %v1246 = vmul.f32 %v1099, 0.2
      %v1247 = vmul.f32 %v1102, 0.2
      %v1248 = vmul.f32 %v1104, 0.2
      %v1249 = vmul.f32 %v1107, 0.2
      %v1250 = vmul.f32 %v1109, 0.2
      %v1251 = vmul.f32 %v1112, 0.2
      %v1252 = vmul.f32 %v1114, 0.2
      %v1253 = vmul.f32 %v1117, 0.2
      %v1254 = vmul.f32 %v1119, 0.2
      %v1255 = vmul.f32 %v1122, 0.2
      %v1256 = vmul.f32 %v1124, 0.2
      %v1257 = vmul.f32 %v1127, 0.2
      %v1258 = vmul.f32 %v1129, 0.2
      %v1259 = vsel %vm1131, %v972, %v1195
      %v1260 = vsel %vm1132, %v974, %v1196
      %v1261 = vsel %vm1133, %v977, %v1197
      %v1262 = vsel %vm1134, %v979, %v1198
      %v1263 = vsel %vm1135, %v982, %v1199
      %v1264 = vsel %vm1136, %v984, %v1200
      %v1265 = vsel %vm1137, %v987, %v1201
      %v1266 = vsel %vm1138, %v989, %v1202
      %v1267 = vsel %vm1139, %v992, %v1203
      %v1268 = vsel %vm1140, %v994, %v1204
      %v1269 = vsel %vm1141, %v997, %v1205
      %v1270 = vsel %vm1142, %v999, %v1206
      %v1271 = vsel %vm1143, %v1002, %v1207
      %v1272 = vsel %vm1144, %v1004, %v1208
      %v1273 = vsel %vm1145, %v1007, %v1209
      %v1274 = vsel %vm1146, %v1009, %v1210
      %v1275 = vsel %vm1147, %v1012, %v1211
      %v1276 = vsel %vm1148, %v1014, %v1212
      %v1277 = vsel %vm1149, %v1017, %v1213
      %v1278 = vsel %vm1150, %v1019, %v1214
      %v1279 = vsel %vm1151, %v1022, %v1215
      %v1280 = vsel %vm1152, %v1024, %v1216
      %v1281 = vsel %vm1153, %v1027, %v1217
      %v1282 = vsel %vm1154, %v1029, %v1218
      %v1283 = vsel %vm1155, %v1032, %v1219
      %v1284 = vsel %vm1156, %v1034, %v1220
      %v1285 = vsel %vm1157, %v1037, %v1221
      %v1286 = vsel %vm1158, %v1039, %v1222
      %v1287 = vsel %vm1159, %v1042, %v1223
      %v1288 = vsel %vm1160, %v1044, %v1224
      %v1289 = vsel %vm1161, %v1047, %v1225
      %v1290 = vsel %vm1162, %v1049, %v1226
      %v1291 = vsel %vm1163, %v1052, %v1227
      %v1292 = vsel %vm1164, %v1054, %v1228
      %v1293 = vsel %vm1165, %v1057, %v1229
      %v1294 = vsel %vm1166, %v1059, %v1230
      %v1295 = vsel %vm1167, %v1062, %v1231
      %v1296 = vsel %vm1168, %v1064, %v1232
      %v1297 = vsel %vm1169, %v1067, %v1233
      %v1298 = vsel %vm1170, %v1069, %v1234
      %v1299 = vsel %vm1171, %v1072, %v1235
      %v1300 = vsel %vm1172, %v1074, %v1236
      %v1301 = vsel %vm1173, %v1077, %v1237
      %v1302 = vsel %vm1174, %v1079, %v1238
      %v1303 = vsel %vm1175, %v1082, %v1239
      %v1304 = vsel %vm1176, %v1084, %v1240
      %v1305 = vsel %vm1177, %v1087, %v1241
      %v1306 = vsel %vm1178, %v1089, %v1242
      %v1307 = vsel %vm1179, %v1092, %v1243
      %v1308 = vsel %vm1180, %v1094, %v1244
      %v1309 = vsel %vm1181, %v1097, %v1245
      %v1310 = vsel %vm1182, %v1099, %v1246
      %v1311 = vsel %vm1183, %v1102, %v1247
      %v1312 = vsel %vm1184, %v1104, %v1248
      %v1313 = vsel %vm1185, %v1107, %v1249
      %v1314 = vsel %vm1186, %v1109, %v1250
      %v1315 = vsel %vm1187, %v1112, %v1251
      %v1316 = vsel %vm1188, %v1114, %v1252
      %v1317 = vsel %vm1189, %v1117, %v1253
      %v1318 = vsel %vm1190, %v1119, %v1254
      %v1319 = vsel %vm1191, %v1122, %v1255
      %v1320 = vsel %vm1192, %v1124, %v1256
      %v1321 = vsel %vm1193, %v1127, %v1257
      %v1322 = vsel %vm1194, %v1129, %v1258
      %v1323 = vld [vmem:[%s4] sm:$0xff]
      %v1324 = vld [vmem:[%s4 + $0x8] sm:$0xff]
      %v1325 = vld [vmem:[%s4 + $0x10] sm:$0xff]
      %v1326 = vld [vmem:[%s4 + $0x18] sm:$0xff]
      %v1327 = vld [vmem:[%s4 + $0x20] sm:$0xff]
      %v1328 = vld [vmem:[%s4 + $0x28] sm:$0xff]
      %v1329 = vld [vmem:[%s4 + $0x30] sm:$0xff]
      %v1330 = vld [vmem:[%s4 + $0x38] sm:$0xff]
      %v1331 = vld [vmem:[%s4 + $0x40] sm:$0xff]
      %v1332 = vld [vmem:[%s4 + $0x48] sm:$0xff]
      %v1333 = vld [vmem:[%s4 + $0x50] sm:$0xff]
      %v1334 = vld [vmem:[%s4 + $0x58] sm:$0xff]
      %v1335 = vld [vmem:[%s4 + $0x60] sm:$0xff]
      %v1336 = vld [vmem:[%s4 + $0x68] sm:$0xff]
      %v1337 = vld [vmem:[%s4 + $0x70] sm:$0xff]
      %v1338 = vld [vmem:[%s4 + $0x78] sm:$0xff]
      %v1339 = vld [vmem:[%s5] sm:$0x1]
      %v1341 = vperm.slane %v1339, 0
      %1343 = vmatpush.msra.mxu0 %v1338
      %1344 = vmatpush.msra.mxu0 %v1337
      %1345 = vmatpush.msra.mxu0 %v1336
      %1346 = vmatpush.msra.mxu0 %v1335
      %1347 = vmatpush.msra.mxu0 %v1334
      %1348 = vmatpush.msra.mxu0 %v1333
      %1349 = vmatpush.msra.mxu0 %v1332
      %1350 = vmatpush.msra.mxu0 %v1331
      %1351 = vmatpush.msra.mxu0 %v1330
      %1352 = vmatpush.msra.mxu0 %v1329
      %1353 = vmatpush.msra.mxu0 %v1328
      %1354 = vmatpush.msra.mxu0 %v1327
      %1355 = vmatpush.msra.mxu0 %v1326
      %1356 = vmatpush.msra.mxu0 %v1325
      %1357 = vmatpush.msra.mxu0 %v1324
      %1358 = vmatpush.msra.mxu0 %v1323
      %1359 = vmatmul.f32.gmra.mxu0 %v1259
      %v1360 = vpop.f32.mrf.mxu0
      %v1361 = vadd.f32 %v1341, %v1360
      %1362 = vmatmul.f32.gmra.mxu0 %v1260
      %v1363 = vpop.f32.mrf.mxu0
      %v1364 = vadd.f32 %v1341, %v1363
      %1365 = vmatmul.f32.gmra.mxu0 %v1261
      %v1366 = vpop.f32.mrf.mxu0
      %v1367 = vadd.f32 %v1341, %v1366
      %1368 = vmatmul.f32.gmra.mxu0 %v1262
      %v1369 = vpop.f32.mrf.mxu0
      %v1370 = vadd.f32 %v1341, %v1369
      %1371 = vmatmul.f32.gmra.mxu0 %v1263
      %v1372 = vpop.f32.mrf.mxu0
      %v1373 = vadd.f32 %v1341, %v1372
      %1374 = vmatmul.f32.gmra.mxu0 %v1264
      %v1375 = vpop.f32.mrf.mxu0
      %v1376 = vadd.f32 %v1341, %v1375
      %1377 = vmatmul.f32.gmra.mxu0 %v1265
      %v1378 = vpop.f32.mrf.mxu0
      %v1379 = vadd.f32 %v1341, %v1378
      %1380 = vmatmul.f32.gmra.mxu0 %v1266
      %v1381 = vpop.f32.mrf.mxu0
      %v1382 = vadd.f32 %v1341, %v1381
      %1383 = vmatmul.f32.gmra.mxu0 %v1267
      %v1384 = vpop.f32.mrf.mxu0
      %v1385 = vadd.f32 %v1341, %v1384
      %1386 = vmatmul.f32.gmra.mxu0 %v1268
      %v1387 = vpop.f32.mrf.mxu0
      %v1388 = vadd.f32 %v1341, %v1387
      %1389 = vmatmul.f32.gmra.mxu0 %v1269
      %v1390 = vpop.f32.mrf.mxu0
      %v1391 = vadd.f32 %v1341, %v1390
      %1392 = vmatmul.f32.gmra.mxu0 %v1270
      %v1393 = vpop.f32.mrf.mxu0
      %v1394 = vadd.f32 %v1341, %v1393
      %1395 = vmatmul.f32.gmra.mxu0 %v1271
      %v1396 = vpop.f32.mrf.mxu0
      %v1397 = vadd.f32 %v1341, %v1396
      %1398 = vmatmul.f32.gmra.mxu0 %v1272
      %v1399 = vpop.f32.mrf.mxu0
      %v1400 = vadd.f32 %v1341, %v1399
      %1401 = vmatmul.f32.gmra.mxu0 %v1273
      %v1402 = vpop.f32.mrf.mxu0
      %v1403 = vadd.f32 %v1341, %v1402
      %1404 = vmatmul.f32.gmra.mxu0 %v1274
      %v1405 = vpop.f32.mrf.mxu0
      %v1406 = vadd.f32 %v1341, %v1405
      %1407 = vmatmul.f32.gmra.mxu0 %v1275
      %v1408 = vpop.f32.mrf.mxu0
      %v1409 = vadd.f32 %v1341, %v1408
      %1410 = vmatmul.f32.gmra.mxu0 %v1276
      %v1411 = vpop.f32.mrf.mxu0
      %v1412 = vadd.f32 %v1341, %v1411
      %1413 = vmatmul.f32.gmra.mxu0 %v1277
      %v1414 = vpop.f32.mrf.mxu0
      %v1415 = vadd.f32 %v1341, %v1414
      %1416 = vmatmul.f32.gmra.mxu0 %v1278
      %v1417 = vpop.f32.mrf.mxu0
      %v1418 = vadd.f32 %v1341, %v1417
      %1419 = vmatmul.f32.gmra.mxu0 %v1279
      %v1420 = vpop.f32.mrf.mxu0
      %v1421 = vadd.f32 %v1341, %v1420
      %1422 = vmatmul.f32.gmra.mxu0 %v1280
      %v1423 = vpop.f32.mrf.mxu0
      %v1424 = vadd.f32 %v1341, %v1423
      %1425 = vmatmul.f32.gmra.mxu0 %v1281
      %v1426 = vpop.f32.mrf.mxu0
      %v1427 = vadd.f32 %v1341, %v1426
      %1428 = vmatmul.f32.gmra.mxu0 %v1282
      %v1429 = vpop.f32.mrf.mxu0
      %v1430 = vadd.f32 %v1341, %v1429
      %1431 = vmatmul.f32.gmra.mxu0 %v1283
      %v1432 = vpop.f32.mrf.mxu0
      %v1433 = vadd.f32 %v1341, %v1432
      %1434 = vmatmul.f32.gmra.mxu0 %v1284
      %v1435 = vpop.f32.mrf.mxu0
      %v1436 = vadd.f32 %v1341, %v1435
      %1437 = vmatmul.f32.gmra.mxu0 %v1285
      %v1438 = vpop.f32.mrf.mxu0
      %v1439 = vadd.f32 %v1341, %v1438
      %1440 = vmatmul.f32.gmra.mxu0 %v1286
      %v1441 = vpop.f32.mrf.mxu0
      %v1442 = vadd.f32 %v1341, %v1441
      %1443 = vmatmul.f32.gmra.mxu0 %v1287
      %v1444 = vpop.f32.mrf.mxu0
      %v1445 = vadd.f32 %v1341, %v1444
      %1446 = vmatmul.f32.gmra.mxu0 %v1288
      %v1447 = vpop.f32.mrf.mxu0
      %v1448 = vadd.f32 %v1341, %v1447
      %1449 = vmatmul.f32.gmra.mxu0 %v1289
      %v1450 = vpop.f32.mrf.mxu0
      %v1451 = vadd.f32 %v1341, %v1450
      %1452 = vmatmul.f32.gmra.mxu0 %v1290
      %v1453 = vpop.f32.mrf.mxu0
      %v1454 = vadd.f32 %v1341, %v1453
      %1455 = vmatmul.f32.gmra.mxu0 %v1291
      %v1456 = vpop.f32.mrf.mxu0
      %v1457 = vadd.f32 %v1341, %v1456
      %1458 = vmatmul.f32.gmra.mxu0 %v1292
      %v1459 = vpop.f32.mrf.mxu0
      %v1460 = vadd.f32 %v1341, %v1459
      %1461 = vmatmul.f32.gmra.mxu0 %v1293
      %v1462 = vpop.f32.mrf.mxu0
      %v1463 = vadd.f32 %v1341, %v1462
      %1464 = vmatmul.f32.gmra.mxu0 %v1294
      %v1465 = vpop.f32.mrf.mxu0
      %v1466 = vadd.f32 %v1341, %v1465
      %1467 = vmatmul.f32.gmra.mxu0 %v1295
      %v1468 = vpop.f32.mrf.mxu0
      %v1469 = vadd.f32 %v1341, %v1468
      %1470 = vmatmul.f32.gmra.mxu0 %v1296
      %v1471 = vpop.f32.mrf.mxu0
      %v1472 = vadd.f32 %v1341, %v1471
      %1473 = vmatmul.f32.gmra.mxu0 %v1297
      %v1474 = vpop.f32.mrf.mxu0
      %v1475 = vadd.f32 %v1341, %v1474
      %1476 = vmatmul.f32.gmra.mxu0 %v1298
      %v1477 = vpop.f32.mrf.mxu0
      %v1478 = vadd.f32 %v1341, %v1477
      %1479 = vmatmul.f32.gmra.mxu0 %v1299
      %v1480 = vpop.f32.mrf.mxu0
      %v1481 = vadd.f32 %v1341, %v1480
      %1482 = vmatmul.f32.gmra.mxu0 %v1300
      %v1483 = vpop.f32.mrf.mxu0
      %v1484 = vadd.f32 %v1341, %v1483
      %1485 = vmatmul.f32.gmra.mxu0 %v1301
      %v1486 = vpop.f32.mrf.mxu0
      %v1487 = vadd.f32 %v1341, %v1486
      %1488 = vmatmul.f32.gmra.mxu0 %v1302
      %v1489 = vpop.f32.mrf.mxu0
      %v1490 = vadd.f32 %v1341, %v1489
      %1491 = vmatmul.f32.gmra.mxu0 %v1303
      %v1492 = vpop.f32.mrf.mxu0
      %v1493 = vadd.f32 %v1341, %v1492
      %1494 = vmatmul.f32.gmra.mxu0 %v1304
      %v1495 = vpop.f32.mrf.mxu0
      %v1496 = vadd.f32 %v1341, %v1495
      %1497 = vmatmul.f32.gmra.mxu0 %v1305
      %v1498 = vpop.f32.mrf.mxu0
      %v1499 = vadd.f32 %v1341, %v1498
      %1500 = vmatmul.f32.gmra.mxu0 %v1306
      %v1501 = vpop.f32.mrf.mxu0
      %v1502 = vadd.f32 %v1341, %v1501
      %1503 = vmatmul.f32.gmra.mxu0 %v1307
      %v1504 = vpop.f32.mrf.mxu0
      %v1505 = vadd.f32 %v1341, %v1504
      %1506 = vmatmul.f32.gmra.mxu0 %v1308
      %v1507 = vpop.f32.mrf.mxu0
      %v1508 = vadd.f32 %v1341, %v1507
      %1509 = vmatmul.f32.gmra.mxu0 %v1309
      %v1510 = vpop.f32.mrf.mxu0
      %v1511 = vadd.f32 %v1341, %v1510
      %1512 = vmatmul.f32.gmra.mxu0 %v1310
      %v1513 = vpop.f32.mrf.mxu0
      %v1514 = vadd.f32 %v1341, %v1513
      %1515 = vmatmul.f32.gmra.mxu0 %v1311
      %v1516 = vpop.f32.mrf.mxu0
      %v1517 = vadd.f32 %v1341, %v1516
      %1518 = vmatmul.f32.gmra.mxu0 %v1312
      %v1519 = vpop.f32.mrf.mxu0
      %v1520 = vadd.f32 %v1341, %v1519
      %1521 = vmatmul.f32.gmra.mxu0 %v1313
      %v1522 = vpop.f32.mrf.mxu0
      %v1523 = vadd.f32 %v1341, %v1522
      %1524 = vmatmul.f32.gmra.mxu0 %v1314
      %v1525 = vpop.f32.mrf.mxu0
      %v1526 = vadd.f32 %v1341, %v1525
      %1527 = vmatmul.f32.gmra.mxu0 %v1315
      %v1528 = vpop.f32.mrf.mxu0
      %v1529 = vadd.f32 %v1341, %v1528
      %1530 = vmatmul.f32.gmra.mxu0 %v1316
      %v1531 = vpop.f32.mrf.mxu0
      %v1532 = vadd.f32 %v1341, %v1531
      %1533 = vmatmul.f32.gmra.mxu0 %v1317
      %v1534 = vpop.f32.mrf.mxu0
      %v1535 = vadd.f32 %v1341, %v1534
      %1536 = vmatmul.f32.gmra.mxu0 %v1318
      %v1537 = vpop.f32.mrf.mxu0
      %v1538 = vadd.f32 %v1341, %v1537
      %1539 = vmatmul.f32.gmra.mxu0 %v1319
      %v1540 = vpop.f32.mrf.mxu0
      %v1541 = vadd.f32 %v1341, %v1540
      %1542 = vmatmul.f32.gmra.mxu0 %v1320
      %v1543 = vpop.f32.mrf.mxu0
      %v1544 = vadd.f32 %v1341, %v1543
      %1545 = vmatmul.f32.gmra.mxu0 %v1321
      %v1546 = vpop.f32.mrf.mxu0
      %v1547 = vadd.f32 %v1341, %v1546
      %1548 = vmatmul.f32.gmra.mxu0 %v1322
      %v1549 = vpop.f32.mrf.mxu0
      %v1550 = vadd.f32 %v1341, %v1549
      %1551 = vdwg.mxu0
      %vm1552 = vcmp.gt.f32.partialorder %v1361, 0.0
      %vm1553 = vcmp.gt.f32.partialorder %v1364, 0.0
      %vm1554 = vcmp.gt.f32.partialorder %v1367, 0.0
      %vm1555 = vcmp.gt.f32.partialorder %v1370, 0.0
      %vm1556 = vcmp.gt.f32.partialorder %v1373, 0.0
      %vm1557 = vcmp.gt.f32.partialorder %v1376, 0.0
      %vm1558 = vcmp.gt.f32.partialorder %v1379, 0.0
      %vm1559 = vcmp.gt.f32.partialorder %v1382, 0.0
      %vm1560 = vcmp.gt.f32.partialorder %v1385, 0.0
      %vm1561 = vcmp.gt.f32.partialorder %v1388, 0.0
      %vm1562 = vcmp.gt.f32.partialorder %v1391, 0.0
      %vm1563 = vcmp.gt.f32.partialorder %v1394, 0.0
      %vm1564 = vcmp.gt.f32.partialorder %v1397, 0.0
      %vm1565 = vcmp.gt.f32.partialorder %v1400, 0.0
      %vm1566 = vcmp.gt.f32.partialorder %v1403, 0.0
      %vm1567 = vcmp.gt.f32.partialorder %v1406, 0.0
      %vm1568 = vcmp.gt.f32.partialorder %v1409, 0.0
      %vm1569 = vcmp.gt.f32.partialorder %v1412, 0.0
      %vm1570 = vcmp.gt.f32.partialorder %v1415, 0.0
      %vm1571 = vcmp.gt.f32.partialorder %v1418, 0.0
      %vm1572 = vcmp.gt.f32.partialorder %v1421, 0.0
      %vm1573 = vcmp.gt.f32.partialorder %v1424, 0.0
      %vm1574 = vcmp.gt.f32.partialorder %v1427, 0.0
      %vm1575 = vcmp.gt.f32.partialorder %v1430, 0.0
      %vm1576 = vcmp.gt.f32.partialorder %v1433, 0.0
      %vm1577 = vcmp.gt.f32.partialorder %v1436, 0.0
      %vm1578 = vcmp.gt.f32.partialorder %v1439, 0.0
      %vm1579 = vcmp.gt.f32.partialorder %v1442, 0.0
      %vm1580 = vcmp.gt.f32.partialorder %v1445, 0.0
      %vm1581 = vcmp.gt.f32.partialorder %v1448, 0.0
      %vm1582 = vcmp.gt.f32.partialorder %v1451, 0.0
      %vm1583 = vcmp.gt.f32.partialorder %v1454, 0.0
      %vm1584 = vcmp.gt.f32.partialorder %v1457, 0.0
      %vm1585 = vcmp.gt.f32.partialorder %v1460, 0.0
      %vm1586 = vcmp.gt.f32.partialorder %v1463, 0.0
      %vm1587 = vcmp.gt.f32.partialorder %v1466, 0.0
      %vm1588 = vcmp.gt.f32.partialorder %v1469, 0.0
      %vm1589 = vcmp.gt.f32.partialorder %v1472, 0.0
      %vm1590 = vcmp.gt.f32.partialorder %v1475, 0.0
      %vm1591 = vcmp.gt.f32.partialorder %v1478, 0.0
      %vm1592 = vcmp.gt.f32.partialorder %v1481, 0.0
      %vm1593 = vcmp.gt.f32.partialorder %v1484, 0.0
      %vm1594 = vcmp.gt.f32.partialorder %v1487, 0.0
      %vm1595 = vcmp.gt.f32.partialorder %v1490, 0.0
      %vm1596 = vcmp.gt.f32.partialorder %v1493, 0.0
      %vm1597 = vcmp.gt.f32.partialorder %v1496, 0.0
      %vm1598 = vcmp.gt.f32.partialorder %v1499, 0.0
      %vm1599 = vcmp.gt.f32.partialorder %v1502, 0.0
      %vm1600 = vcmp.gt.f32.partialorder %v1505, 0.0
      %vm1601 = vcmp.gt.f32.partialorder %v1508, 0.0
      %vm1602 = vcmp.gt.f32.partialorder %v1511, 0.0
      %vm1603 = vcmp.gt.f32.partialorder %v1514, 0.0
      %vm1604 = vcmp.gt.f32.partialorder %v1517, 0.0
      %vm1605 = vcmp.gt.f32.partialorder %v1520, 0.0
      %vm1606 = vcmp.gt.f32.partialorder %v1523, 0.0
      %vm1607 = vcmp.gt.f32.partialorder %v1526, 0.0
      %vm1608 = vcmp.gt.f32.partialorder %v1529, 0.0
      %vm1609 = vcmp.gt.f32.partialorder %v1532, 0.0
      %vm1610 = vcmp.gt.f32.partialorder %v1535, 0.0
      %vm1611 = vcmp.gt.f32.partialorder %v1538, 0.0
      %vm1612 = vcmp.gt.f32.partialorder %v1541, 0.0
      %vm1613 = vcmp.gt.f32.partialorder %v1544, 0.0
      %vm1614 = vcmp.gt.f32.partialorder %v1547, 0.0
      %vm1615 = vcmp.gt.f32.partialorder %v1550, 0.0
      %v1616 = vmul.f32 %v1361, 0.2
      %v1617 = vmul.f32 %v1364, 0.2
      %v1618 = vmul.f32 %v1367, 0.2
      %v1619 = vmul.f32 %v1370, 0.2
      %v1620 = vmul.f32 %v1373, 0.2
      %v1621 = vmul.f32 %v1376, 0.2
      %v1622 = vmul.f32 %v1379, 0.2
      %v1623 = vmul.f32 %v1382, 0.2
      %v1624 = vmul.f32 %v1385, 0.2
      %v1625 = vmul.f32 %v1388, 0.2
      %v1626 = vmul.f32 %v1391, 0.2
      %v1627 = vmul.f32 %v1394, 0.2
      %v1628 = vmul.f32 %v1397, 0.2
      %v1629 = vmul.f32 %v1400, 0.2
      %v1630 = vmul.f32 %v1403, 0.2
      %v1631 = vmul.f32 %v1406, 0.2
      %v1632 = vmul.f32 %v1409, 0.2
      %v1633 = vmul.f32 %v1412, 0.2
      %v1634 = vmul.f32 %v1415, 0.2
      %v1635 = vmul.f32 %v1418, 0.2
      %v1636 = vmul.f32 %v1421, 0.2
      %v1637 = vmul.f32 %v1424, 0.2
      %v1638 = vmul.f32 %v1427, 0.2
      %v1639 = vmul.f32 %v1430, 0.2
      %v1640 = vmul.f32 %v1433, 0.2
      %v1641 = vmul.f32 %v1436, 0.2
      %v1642 = vmul.f32 %v1439, 0.2
      %v1643 = vmul.f32 %v1442, 0.2
      %v1644 = vmul.f32 %v1445, 0.2
      %v1645 = vmul.f32 %v1448, 0.2
      %v1646 = vmul.f32 %v1451, 0.2
      %v1647 = vmul.f32 %v1454, 0.2
      %v1648 = vmul.f32 %v1457, 0.2
      %v1649 = vmul.f32 %v1460, 0.2
      %v1650 = vmul.f32 %v1463, 0.2
      %v1651 = vmul.f32 %v1466, 0.2
      %v1652 = vmul.f32 %v1469, 0.2
      %v1653 = vmul.f32 %v1472, 0.2
      %v1654 = vmul.f32 %v1475, 0.2
      %v1655 = vmul.f32 %v1478, 0.2
      %v1656 = vmul.f32 %v1481, 0.2
      %v1657 = vmul.f32 %v1484, 0.2
      %v1658 = vmul.f32 %v1487, 0.2
      %v1659 = vmul.f32 %v1490, 0.2
      %v1660 = vmul.f32 %v1493, 0.2
      %v1661 = vmul.f32 %v1496, 0.2
      %v1662 = vmul.f32 %v1499, 0.2
      %v1663 = vmul.f32 %v1502, 0.2
      %v1664 = vmul.f32 %v1505, 0.2
      %v1665 = vmul.f32 %v1508, 0.2
      %v1666 = vmul.f32 %v1511, 0.2
      %v1667 = vmul.f32 %v1514, 0.2
      %v1668 = vmul.f32 %v1517, 0.2
      %v1669 = vmul.f32 %v1520, 0.2
      %v1670 = vmul.f32 %v1523, 0.2
      %v1671 = vmul.f32 %v1526, 0.2
      %v1672 = vmul.f32 %v1529, 0.2
      %v1673 = vmul.f32 %v1532, 0.2
      %v1674 = vmul.f32 %v1535, 0.2
      %v1675 = vmul.f32 %v1538, 0.2
      %v1676 = vmul.f32 %v1541, 0.2
      %v1677 = vmul.f32 %v1544, 0.2
      %v1678 = vmul.f32 %v1547, 0.2
      %v1679 = vmul.f32 %v1550, 0.2
      %v1680 = vsel %vm1552, %v1361, %v1616
      %v1681 = vsel %vm1553, %v1364, %v1617
      %v1682 = vsel %vm1554, %v1367, %v1618
      %v1683 = vsel %vm1555, %v1370, %v1619
      %v1684 = vsel %vm1556, %v1373, %v1620
      %v1685 = vsel %vm1557, %v1376, %v1621
      %v1686 = vsel %vm1558, %v1379, %v1622
      %v1687 = vsel %vm1559, %v1382, %v1623
      %v1688 = vsel %vm1560, %v1385, %v1624
      %v1689 = vsel %vm1561, %v1388, %v1625
      %v1690 = vsel %vm1562, %v1391, %v1626
      %v1691 = vsel %vm1563, %v1394, %v1627
      %v1692 = vsel %vm1564, %v1397, %v1628
      %v1693 = vsel %vm1565, %v1400, %v1629
      %v1694 = vsel %vm1566, %v1403, %v1630
      %v1695 = vsel %vm1567, %v1406, %v1631
      %v1696 = vsel %vm1568, %v1409, %v1632
      %v1697 = vsel %vm1569, %v1412, %v1633
      %v1698 = vsel %vm1570, %v1415, %v1634
      %v1699 = vsel %vm1571, %v1418, %v1635
      %v1700 = vsel %vm1572, %v1421, %v1636
      %v1701 = vsel %vm1573, %v1424, %v1637
      %v1702 = vsel %vm1574, %v1427, %v1638
      %v1703 = vsel %vm1575, %v1430, %v1639
      %v1704 = vsel %vm1576, %v1433, %v1640
      %v1705 = vsel %vm1577, %v1436, %v1641
      %v1706 = vsel %vm1578, %v1439, %v1642
      %v1707 = vsel %vm1579, %v1442, %v1643
      %v1708 = vsel %vm1580, %v1445, %v1644
      %v1709 = vsel %vm1581, %v1448, %v1645
      %v1710 = vsel %vm1582, %v1451, %v1646
      %v1711 = vsel %vm1583, %v1454, %v1647
      %v1712 = vsel %vm1584, %v1457, %v1648
      %v1713 = vsel %vm1585, %v1460, %v1649
      %v1714 = vsel %vm1586, %v1463, %v1650
      %v1715 = vsel %vm1587, %v1466, %v1651
      %v1716 = vsel %vm1588, %v1469, %v1652
      %v1717 = vsel %vm1589, %v1472, %v1653
      %v1718 = vsel %vm1590, %v1475, %v1654
      %v1719 = vsel %vm1591, %v1478, %v1655
      %v1720 = vsel %vm1592, %v1481, %v1656
      %v1721 = vsel %vm1593, %v1484, %v1657
      %v1722 = vsel %vm1594, %v1487, %v1658
      %v1723 = vsel %vm1595, %v1490, %v1659
      %v1724 = vsel %vm1596, %v1493, %v1660
      %v1725 = vsel %vm1597, %v1496, %v1661
      %v1726 = vsel %vm1598, %v1499, %v1662
      %v1727 = vsel %vm1599, %v1502, %v1663
      %v1728 = vsel %vm1600, %v1505, %v1664
      %v1729 = vsel %vm1601, %v1508, %v1665
      %v1730 = vsel %vm1602, %v1511, %v1666
      %v1731 = vsel %vm1603, %v1514, %v1667
      %v1732 = vsel %vm1604, %v1517, %v1668
      %v1733 = vsel %vm1605, %v1520, %v1669
      %v1734 = vsel %vm1606, %v1523, %v1670
      %v1735 = vsel %vm1607, %v1526, %v1671
      %v1736 = vsel %vm1608, %v1529, %v1672
      %v1737 = vsel %vm1609, %v1532, %v1673
      %v1738 = vsel %vm1610, %v1535, %v1674
      %v1739 = vsel %vm1611, %v1538, %v1675
      %v1740 = vsel %vm1612, %v1541, %v1676
      %v1741 = vsel %vm1613, %v1544, %v1677
      %v1742 = vsel %vm1614, %v1547, %v1678
      %v1743 = vsel %vm1615, %v1550, %v1679
      %v1744 = vld [vmem:[%s6] sm:$0xff]
      %v1745 = vld [vmem:[%s6 + $0x8] sm:$0xff]
      %v1746 = vld [vmem:[%s6 + $0x10] sm:$0xff]
      %v1747 = vld [vmem:[%s6 + $0x18] sm:$0xff]
      %v1748 = vld [vmem:[%s6 + $0x20] sm:$0xff]
      %v1749 = vld [vmem:[%s6 + $0x28] sm:$0xff]
      %v1750 = vld [vmem:[%s6 + $0x30] sm:$0xff]
      %v1751 = vld [vmem:[%s6 + $0x38] sm:$0xff]
      %v1752 = vld [vmem:[%s7] sm:$0x1]
      %v1754 = vperm.slane %v1752, 0
      %vm1756 = vcmask 523264
      %v1758 = vsel %vm1756, %v1680, 0
      %v1761 = vsel %vm1756, %v1681, 0
      %v1764 = vsel %vm1756, %v1682, 0
      %v1767 = vsel %vm1756, %v1683, 0
      %v1770 = vsel %vm1756, %v1684, 0
      %v1773 = vsel %vm1756, %v1685, 0
      %v1776 = vsel %vm1756, %v1686, 0
      %v1779 = vsel %vm1756, %v1687, 0
      %v1782 = vsel %vm1756, %v1688, 0
      %v1785 = vsel %vm1756, %v1689, 0
      %v1788 = vsel %vm1756, %v1690, 0
      %v1791 = vsel %vm1756, %v1691, 0
      %v1794 = vsel %vm1756, %v1692, 0
      %v1797 = vsel %vm1756, %v1693, 0
      %v1800 = vsel %vm1756, %v1694, 0
      %v1803 = vsel %vm1756, %v1695, 0
      %v1806 = vsel %vm1756, %v1696, 0
      %v1809 = vsel %vm1756, %v1697, 0
      %v1812 = vsel %vm1756, %v1698, 0
      %v1815 = vsel %vm1756, %v1699, 0
      %v1818 = vsel %vm1756, %v1700, 0
      %v1821 = vsel %vm1756, %v1701, 0
      %v1824 = vsel %vm1756, %v1702, 0
      %v1827 = vsel %vm1756, %v1703, 0
      %v1830 = vsel %vm1756, %v1704, 0
      %v1833 = vsel %vm1756, %v1705, 0
      %v1836 = vsel %vm1756, %v1706, 0
      %v1839 = vsel %vm1756, %v1707, 0
      %v1842 = vsel %vm1756, %v1708, 0
      %v1845 = vsel %vm1756, %v1709, 0
      %v1848 = vsel %vm1756, %v1710, 0
      %v1851 = vsel %vm1756, %v1711, 0
      %v1854 = vsel %vm1756, %v1712, 0
      %v1857 = vsel %vm1756, %v1713, 0
      %v1860 = vsel %vm1756, %v1714, 0
      %v1863 = vsel %vm1756, %v1715, 0
      %v1866 = vsel %vm1756, %v1716, 0
      %v1869 = vsel %vm1756, %v1717, 0
      %v1872 = vsel %vm1756, %v1718, 0
      %v1875 = vsel %vm1756, %v1719, 0
      %v1878 = vsel %vm1756, %v1720, 0
      %v1881 = vsel %vm1756, %v1721, 0
      %v1884 = vsel %vm1756, %v1722, 0
      %v1887 = vsel %vm1756, %v1723, 0
      %v1890 = vsel %vm1756, %v1724, 0
      %v1893 = vsel %vm1756, %v1725, 0
      %v1896 = vsel %vm1756, %v1726, 0
      %v1899 = vsel %vm1756, %v1727, 0
      %v1902 = vsel %vm1756, %v1728, 0
      %v1905 = vsel %vm1756, %v1729, 0
      %v1908 = vsel %vm1756, %v1730, 0
      %v1911 = vsel %vm1756, %v1731, 0
      %v1914 = vsel %vm1756, %v1732, 0
      %v1917 = vsel %vm1756, %v1733, 0
      %v1920 = vsel %vm1756, %v1734, 0
      %v1923 = vsel %vm1756, %v1735, 0
      %v1926 = vsel %vm1756, %v1736, 0
      %v1929 = vsel %vm1756, %v1737, 0
      %v1932 = vsel %vm1756, %v1738, 0
      %v1935 = vsel %vm1756, %v1739, 0
      %v1938 = vsel %vm1756, %v1740, 0
      %v1941 = vsel %vm1756, %v1741, 0
      %v1944 = vsel %vm1756, %v1742, 0
      %v1947 = vsel %vm1756, %v1743, 0
      %1949 = vmatpush.msra.mxu0 0.0
      %1950 = vmatpush.msra.mxu0 0.0
      %1951 = vmatpush.msra.mxu0 0.0
      %1952 = vmatpush.msra.mxu0 0.0
      %1953 = vmatpush.msra.mxu0 0.0
      %1954 = vmatpush.msra.mxu0 0.0
      %1955 = vmatpush.msra.mxu0 0.0
      %1956 = vmatpush.msra.mxu0 0.0
      %1957 = vmatpush.msra.mxu0 %v1751
      %1958 = vmatpush.msra.mxu0 %v1750
      %1959 = vmatpush.msra.mxu0 %v1749
      %1960 = vmatpush.msra.mxu0 %v1748
      %1961 = vmatpush.msra.mxu0 %v1747
      %1962 = vmatpush.msra.mxu0 %v1746
      %1963 = vmatpush.msra.mxu0 %v1745
      %1964 = vmatpush.msra.mxu0 %v1744
      %1965 = vmatmul.f32.gmra.mxu0 %v1758
      %v1966 = vpop.f32.mrf.mxu0
      %v1967 = vadd.f32 %v1754, %v1966
      %1968 = vmatmul.f32.gmra.mxu0 %v1761
      %v1969 = vpop.f32.mrf.mxu0
      %v1970 = vadd.f32 %v1754, %v1969
      %1971 = vmatmul.f32.gmra.mxu0 %v1764
      %v1972 = vpop.f32.mrf.mxu0
      %v1973 = vadd.f32 %v1754, %v1972
      %1974 = vmatmul.f32.gmra.mxu0 %v1767
      %v1975 = vpop.f32.mrf.mxu0
      %v1976 = vadd.f32 %v1754, %v1975
      %1977 = vmatmul.f32.gmra.mxu0 %v1770
      %v1978 = vpop.f32.mrf.mxu0
      %v1979 = vadd.f32 %v1754, %v1978
      %1980 = vmatmul.f32.gmra.mxu0 %v1773
      %v1981 = vpop.f32.mrf.mxu0
      %v1982 = vadd.f32 %v1754, %v1981
      %1983 = vmatmul.f32.gmra.mxu0 %v1776
      %v1984 = vpop.f32.mrf.mxu0
      %v1985 = vadd.f32 %v1754, %v1984
      %1986 = vmatmul.f32.gmra.mxu0 %v1779
      %v1987 = vpop.f32.mrf.mxu0
      %v1988 = vadd.f32 %v1754, %v1987
      %1989 = vmatmul.f32.gmra.mxu0 %v1782
      %v1990 = vpop.f32.mrf.mxu0
      %v1991 = vadd.f32 %v1754, %v1990
      %1992 = vmatmul.f32.gmra.mxu0 %v1785
      %v1993 = vpop.f32.mrf.mxu0
      %v1994 = vadd.f32 %v1754, %v1993
      %1995 = vmatmul.f32.gmra.mxu0 %v1788
      %v1996 = vpop.f32.mrf.mxu0
      %v1997 = vadd.f32 %v1754, %v1996
      %1998 = vmatmul.f32.gmra.mxu0 %v1791
      %v1999 = vpop.f32.mrf.mxu0
      %v2000 = vadd.f32 %v1754, %v1999
      %2001 = vmatmul.f32.gmra.mxu0 %v1794
      %v2002 = vpop.f32.mrf.mxu0
      %v2003 = vadd.f32 %v1754, %v2002
      %2004 = vmatmul.f32.gmra.mxu0 %v1797
      %v2005 = vpop.f32.mrf.mxu0
      %v2006 = vadd.f32 %v1754, %v2005
      %2007 = vmatmul.f32.gmra.mxu0 %v1800
      %v2008 = vpop.f32.mrf.mxu0
      %v2009 = vadd.f32 %v1754, %v2008
      %2010 = vmatmul.f32.gmra.mxu0 %v1803
      %v2011 = vpop.f32.mrf.mxu0
      %v2012 = vadd.f32 %v1754, %v2011
      %2013 = vmatmul.f32.gmra.mxu0 %v1806
      %v2014 = vpop.f32.mrf.mxu0
      %v2015 = vadd.f32 %v1754, %v2014
      %2016 = vmatmul.f32.gmra.mxu0 %v1809
      %v2017 = vpop.f32.mrf.mxu0
      %v2018 = vadd.f32 %v1754, %v2017
      %2019 = vmatmul.f32.gmra.mxu0 %v1812
      %v2020 = vpop.f32.mrf.mxu0
      %v2021 = vadd.f32 %v1754, %v2020
      %2022 = vmatmul.f32.gmra.mxu0 %v1815
      %v2023 = vpop.f32.mrf.mxu0
      %v2024 = vadd.f32 %v1754, %v2023
      %2025 = vmatmul.f32.gmra.mxu0 %v1818
      %v2026 = vpop.f32.mrf.mxu0
      %v2027 = vadd.f32 %v1754, %v2026
      %2028 = vmatmul.f32.gmra.mxu0 %v1821
      %v2029 = vpop.f32.mrf.mxu0
      %v2030 = vadd.f32 %v1754, %v2029
      %2031 = vmatmul.f32.gmra.mxu0 %v1824
      %v2032 = vpop.f32.mrf.mxu0
      %v2033 = vadd.f32 %v1754, %v2032
      %2034 = vmatmul.f32.gmra.mxu0 %v1827
      %v2035 = vpop.f32.mrf.mxu0
      %v2036 = vadd.f32 %v1754, %v2035
      %2037 = vmatmul.f32.gmra.mxu0 %v1830
      %v2038 = vpop.f32.mrf.mxu0
      %v2039 = vadd.f32 %v1754, %v2038
      %2040 = vmatmul.f32.gmra.mxu0 %v1833
      %v2041 = vpop.f32.mrf.mxu0
      %v2042 = vadd.f32 %v1754, %v2041
      %2043 = vmatmul.f32.gmra.mxu0 %v1836
      %v2044 = vpop.f32.mrf.mxu0
      %v2045 = vadd.f32 %v1754, %v2044
      %2046 = vmatmul.f32.gmra.mxu0 %v1839
      %v2047 = vpop.f32.mrf.mxu0
      %v2048 = vadd.f32 %v1754, %v2047
      %2049 = vmatmul.f32.gmra.mxu0 %v1842
      %v2050 = vpop.f32.mrf.mxu0
      %v2051 = vadd.f32 %v1754, %v2050
      %2052 = vmatmul.f32.gmra.mxu0 %v1845
      %v2053 = vpop.f32.mrf.mxu0
      %v2054 = vadd.f32 %v1754, %v2053
      %2055 = vmatmul.f32.gmra.mxu0 %v1848
      %v2056 = vpop.f32.mrf.mxu0
      %v2057 = vadd.f32 %v1754, %v2056
      %2058 = vmatmul.f32.gmra.mxu0 %v1851
      %v2059 = vpop.f32.mrf.mxu0
      %v2060 = vadd.f32 %v1754, %v2059
      %2061 = vmatmul.f32.gmra.mxu0 %v1854
      %v2062 = vpop.f32.mrf.mxu0
      %v2063 = vadd.f32 %v1754, %v2062
      %2064 = vmatmul.f32.gmra.mxu0 %v1857
      %v2065 = vpop.f32.mrf.mxu0
      %v2066 = vadd.f32 %v1754, %v2065
      %2067 = vmatmul.f32.gmra.mxu0 %v1860
      %v2068 = vpop.f32.mrf.mxu0
      %v2069 = vadd.f32 %v1754, %v2068
      %2070 = vmatmul.f32.gmra.mxu0 %v1863
      %v2071 = vpop.f32.mrf.mxu0
      %v2072 = vadd.f32 %v1754, %v2071
      %2073 = vmatmul.f32.gmra.mxu0 %v1866
      %v2074 = vpop.f32.mrf.mxu0
      %v2075 = vadd.f32 %v1754, %v2074
      %2076 = vmatmul.f32.gmra.mxu0 %v1869
      %v2077 = vpop.f32.mrf.mxu0
      %v2078 = vadd.f32 %v1754, %v2077
      %2079 = vmatmul.f32.gmra.mxu0 %v1872
      %v2080 = vpop.f32.mrf.mxu0
      %v2081 = vadd.f32 %v1754, %v2080
      %2082 = vmatmul.f32.gmra.mxu0 %v1875
      %v2083 = vpop.f32.mrf.mxu0
      %v2084 = vadd.f32 %v1754, %v2083
      %2085 = vmatmul.f32.gmra.mxu0 %v1878
      %v2086 = vpop.f32.mrf.mxu0
      %v2087 = vadd.f32 %v1754, %v2086
      %2088 = vmatmul.f32.gmra.mxu0 %v1881
      %v2089 = vpop.f32.mrf.mxu0
      %v2090 = vadd.f32 %v1754, %v2089
      %2091 = vmatmul.f32.gmra.mxu0 %v1884
      %v2092 = vpop.f32.mrf.mxu0
      %v2093 = vadd.f32 %v1754, %v2092
      %2094 = vmatmul.f32.gmra.mxu0 %v1887
      %v2095 = vpop.f32.mrf.mxu0
      %v2096 = vadd.f32 %v1754, %v2095
      %2097 = vmatmul.f32.gmra.mxu0 %v1890
      %v2098 = vpop.f32.mrf.mxu0
      %v2099 = vadd.f32 %v1754, %v2098
      %2100 = vmatmul.f32.gmra.mxu0 %v1893
      %v2101 = vpop.f32.mrf.mxu0
      %v2102 = vadd.f32 %v1754, %v2101
      %2103 = vmatmul.f32.gmra.mxu0 %v1896
      %v2104 = vpop.f32.mrf.mxu0
      %v2105 = vadd.f32 %v1754, %v2104
      %2106 = vmatmul.f32.gmra.mxu0 %v1899
      %v2107 = vpop.f32.mrf.mxu0
      %v2108 = vadd.f32 %v1754, %v2107
      %2109 = vmatmul.f32.gmra.mxu0 %v1902
      %v2110 = vpop.f32.mrf.mxu0
      %v2111 = vadd.f32 %v1754, %v2110
      %2112 = vmatmul.f32.gmra.mxu0 %v1905
      %v2113 = vpop.f32.mrf.mxu0
      %v2114 = vadd.f32 %v1754, %v2113
      %2115 = vmatmul.f32.gmra.mxu0 %v1908
      %v2116 = vpop.f32.mrf.mxu0
      %v2117 = vadd.f32 %v1754, %v2116
      %2118 = vmatmul.f32.gmra.mxu0 %v1911
      %v2119 = vpop.f32.mrf.mxu0
      %v2120 = vadd.f32 %v1754, %v2119
      %2121 = vmatmul.f32.gmra.mxu0 %v1914
      %v2122 = vpop.f32.mrf.mxu0
      %v2123 = vadd.f32 %v1754, %v2122
      %2124 = vmatmul.f32.gmra.mxu0 %v1917
      %v2125 = vpop.f32.mrf.mxu0
      %v2126 = vadd.f32 %v1754, %v2125
      %2127 = vmatmul.f32.gmra.mxu0 %v1920
      %v2128 = vpop.f32.mrf.mxu0
      %v2129 = vadd.f32 %v1754, %v2128
      %2130 = vmatmul.f32.gmra.mxu0 %v1923
      %v2131 = vpop.f32.mrf.mxu0
      %v2132 = vadd.f32 %v1754, %v2131
      %2133 = vmatmul.f32.gmra.mxu0 %v1926
      %v2134 = vpop.f32.mrf.mxu0
      %v2135 = vadd.f32 %v1754, %v2134
      %2136 = vmatmul.f32.gmra.mxu0 %v1929
      %v2137 = vpop.f32.mrf.mxu0
      %v2138 = vadd.f32 %v1754, %v2137
      %2139 = vmatmul.f32.gmra.mxu0 %v1932
      %v2140 = vpop.f32.mrf.mxu0
      %v2141 = vadd.f32 %v1754, %v2140
      %2142 = vmatmul.f32.gmra.mxu0 %v1935
      %v2143 = vpop.f32.mrf.mxu0
      %v2144 = vadd.f32 %v1754, %v2143
      %2145 = vmatmul.f32.gmra.mxu0 %v1938
      %v2146 = vpop.f32.mrf.mxu0
      %v2147 = vadd.f32 %v1754, %v2146
      %2148 = vmatmul.f32.gmra.mxu0 %v1941
      %v2149 = vpop.f32.mrf.mxu0
      %v2150 = vadd.f32 %v1754, %v2149
      %2151 = vmatmul.f32.gmra.mxu0 %v1944
      %v2152 = vpop.f32.mrf.mxu0
      %v2153 = vadd.f32 %v1754, %v2152
      %2154 = vmatmul.f32.gmra.mxu0 %v1947
      %v2155 = vpop.f32.mrf.mxu0
      %v2156 = vadd.f32 %v1754, %v2155
      %2157 = vdwg.mxu0
      %v2158 = vld [vmem:[%s8] sm:$0xff]
      %v2159 = vld [vmem:[%s8 + $0x8] sm:$0xff]
      %v2160 = vld [vmem:[%s8 + $0x10] sm:$0xff]
      %v2161 = vld [vmem:[%s8 + $0x18] sm:$0xff]
      %v2162 = vld [vmem:[%s8 + $0x20] sm:$0xff]
      %v2163 = vld [vmem:[%s8 + $0x28] sm:$0xff]
      %v2164 = vld [vmem:[%s8 + $0x30] sm:$0xff]
      %v2165 = vld [vmem:[%s8 + $0x38] sm:$0xff]
      %v2166 = vld [vmem:[%s9] sm:$0x1]
      %v2168 = vperm.slane %v2166, 0
      %2170 = vmatpush.msra.mxu0 0.0
      %2171 = vmatpush.msra.mxu0 0.0
      %2172 = vmatpush.msra.mxu0 0.0
      %2173 = vmatpush.msra.mxu0 0.0
      %2174 = vmatpush.msra.mxu0 0.0
      %2175 = vmatpush.msra.mxu0 0.0
      %2176 = vmatpush.msra.mxu0 0.0
      %2177 = vmatpush.msra.mxu0 0.0
      %2178 = vmatpush.msra.mxu0 %v2165
      %2179 = vmatpush.msra.mxu0 %v2164
      %2180 = vmatpush.msra.mxu0 %v2163
      %2181 = vmatpush.msra.mxu0 %v2162
      %2182 = vmatpush.msra.mxu0 %v2161
      %2183 = vmatpush.msra.mxu0 %v2160
      %2184 = vmatpush.msra.mxu0 %v2159
      %2185 = vmatpush.msra.mxu0 %v2158
      %2186 = vmatmul.f32.gmra.mxu0 %v1758
      %v2187 = vpop.f32.mrf.mxu0
      %v2188 = vadd.f32 %v2168, %v2187
      %2189 = vmatmul.f32.gmra.mxu0 %v1761
      %v2190 = vpop.f32.mrf.mxu0
      %v2191 = vadd.f32 %v2168, %v2190
      %2192 = vmatmul.f32.gmra.mxu0 %v1764
      %v2193 = vpop.f32.mrf.mxu0
      %v2194 = vadd.f32 %v2168, %v2193
      %2195 = vmatmul.f32.gmra.mxu0 %v1767
      %v2196 = vpop.f32.mrf.mxu0
      %v2197 = vadd.f32 %v2168, %v2196
      %2198 = vmatmul.f32.gmra.mxu0 %v1770
      %v2199 = vpop.f32.mrf.mxu0
      %v2200 = vadd.f32 %v2168, %v2199
      %2201 = vmatmul.f32.gmra.mxu0 %v1773
      %v2202 = vpop.f32.mrf.mxu0
      %v2203 = vadd.f32 %v2168, %v2202
      %2204 = vmatmul.f32.gmra.mxu0 %v1776
      %v2205 = vpop.f32.mrf.mxu0
      %v2206 = vadd.f32 %v2168, %v2205
      %2207 = vmatmul.f32.gmra.mxu0 %v1779
      %v2208 = vpop.f32.mrf.mxu0
      %v2209 = vadd.f32 %v2168, %v2208
      %2210 = vmatmul.f32.gmra.mxu0 %v1782
      %v2211 = vpop.f32.mrf.mxu0
      %v2212 = vadd.f32 %v2168, %v2211
      %2213 = vmatmul.f32.gmra.mxu0 %v1785
      %v2214 = vpop.f32.mrf.mxu0
      %v2215 = vadd.f32 %v2168, %v2214
      %2216 = vmatmul.f32.gmra.mxu0 %v1788
      %v2217 = vpop.f32.mrf.mxu0
      %v2218 = vadd.f32 %v2168, %v2217
      %2219 = vmatmul.f32.gmra.mxu0 %v1791
      %v2220 = vpop.f32.mrf.mxu0
      %v2221 = vadd.f32 %v2168, %v2220
      %2222 = vmatmul.f32.gmra.mxu0 %v1794
      %v2223 = vpop.f32.mrf.mxu0
      %v2224 = vadd.f32 %v2168, %v2223
      %2225 = vmatmul.f32.gmra.mxu0 %v1797
      %v2226 = vpop.f32.mrf.mxu0
      %v2227 = vadd.f32 %v2168, %v2226
      %2228 = vmatmul.f32.gmra.mxu0 %v1800
      %v2229 = vpop.f32.mrf.mxu0
      %v2230 = vadd.f32 %v2168, %v2229
      %2231 = vmatmul.f32.gmra.mxu0 %v1803
      %v2232 = vpop.f32.mrf.mxu0
      %v2233 = vadd.f32 %v2168, %v2232
      %2234 = vmatmul.f32.gmra.mxu0 %v1806
      %v2235 = vpop.f32.mrf.mxu0
      %v2236 = vadd.f32 %v2168, %v2235
      %2237 = vmatmul.f32.gmra.mxu0 %v1809
      %v2238 = vpop.f32.mrf.mxu0
      %v2239 = vadd.f32 %v2168, %v2238
      %2240 = vmatmul.f32.gmra.mxu0 %v1812
      %v2241 = vpop.f32.mrf.mxu0
      %v2242 = vadd.f32 %v2168, %v2241
      %2243 = vmatmul.f32.gmra.mxu0 %v1815
      %v2244 = vpop.f32.mrf.mxu0
      %v2245 = vadd.f32 %v2168, %v2244
      %2246 = vmatmul.f32.gmra.mxu0 %v1818
      %v2247 = vpop.f32.mrf.mxu0
      %v2248 = vadd.f32 %v2168, %v2247
      %2249 = vmatmul.f32.gmra.mxu0 %v1821
      %v2250 = vpop.f32.mrf.mxu0
      %v2251 = vadd.f32 %v2168, %v2250
      %2252 = vmatmul.f32.gmra.mxu0 %v1824
      %v2253 = vpop.f32.mrf.mxu0
      %v2254 = vadd.f32 %v2168, %v2253
      %2255 = vmatmul.f32.gmra.mxu0 %v1827
      %v2256 = vpop.f32.mrf.mxu0
      %v2257 = vadd.f32 %v2168, %v2256
      %2258 = vmatmul.f32.gmra.mxu0 %v1830
      %v2259 = vpop.f32.mrf.mxu0
      %v2260 = vadd.f32 %v2168, %v2259
      %2261 = vmatmul.f32.gmra.mxu0 %v1833
      %v2262 = vpop.f32.mrf.mxu0
      %v2263 = vadd.f32 %v2168, %v2262
      %2264 = vmatmul.f32.gmra.mxu0 %v1836
      %v2265 = vpop.f32.mrf.mxu0
      %v2266 = vadd.f32 %v2168, %v2265
      %2267 = vmatmul.f32.gmra.mxu0 %v1839
      %v2268 = vpop.f32.mrf.mxu0
      %v2269 = vadd.f32 %v2168, %v2268
      %2270 = vmatmul.f32.gmra.mxu0 %v1842
      %v2271 = vpop.f32.mrf.mxu0
      %v2272 = vadd.f32 %v2168, %v2271
      %2273 = vmatmul.f32.gmra.mxu0 %v1845
      %v2274 = vpop.f32.mrf.mxu0
      %v2275 = vadd.f32 %v2168, %v2274
      %2276 = vmatmul.f32.gmra.mxu0 %v1848
      %v2277 = vpop.f32.mrf.mxu0
      %v2278 = vadd.f32 %v2168, %v2277
      %2279 = vmatmul.f32.gmra.mxu0 %v1851
      %v2280 = vpop.f32.mrf.mxu0
      %v2281 = vadd.f32 %v2168, %v2280
      %2282 = vmatmul.f32.gmra.mxu0 %v1854
      %v2283 = vpop.f32.mrf.mxu0
      %v2284 = vadd.f32 %v2168, %v2283
      %2285 = vmatmul.f32.gmra.mxu0 %v1857
      %v2286 = vpop.f32.mrf.mxu0
      %v2287 = vadd.f32 %v2168, %v2286
      %2288 = vmatmul.f32.gmra.mxu0 %v1860
      %v2289 = vpop.f32.mrf.mxu0
      %v2290 = vadd.f32 %v2168, %v2289
      %2291 = vmatmul.f32.gmra.mxu0 %v1863
      %v2292 = vpop.f32.mrf.mxu0
      %v2293 = vadd.f32 %v2168, %v2292
      %2294 = vmatmul.f32.gmra.mxu0 %v1866
      %v2295 = vpop.f32.mrf.mxu0
      %v2296 = vadd.f32 %v2168, %v2295
      %2297 = vmatmul.f32.gmra.mxu0 %v1869
      %v2298 = vpop.f32.mrf.mxu0
      %v2299 = vadd.f32 %v2168, %v2298
      %2300 = vmatmul.f32.gmra.mxu0 %v1872
      %v2301 = vpop.f32.mrf.mxu0
      %v2302 = vadd.f32 %v2168, %v2301
      %2303 = vmatmul.f32.gmra.mxu0 %v1875
      %v2304 = vpop.f32.mrf.mxu0
      %v2305 = vadd.f32 %v2168, %v2304
      %2306 = vmatmul.f32.gmra.mxu0 %v1878
      %v2307 = vpop.f32.mrf.mxu0
      %v2308 = vadd.f32 %v2168, %v2307
      %2309 = vmatmul.f32.gmra.mxu0 %v1881
      %v2310 = vpop.f32.mrf.mxu0
      %v2311 = vadd.f32 %v2168, %v2310
      %2312 = vmatmul.f32.gmra.mxu0 %v1884
      %v2313 = vpop.f32.mrf.mxu0
      %v2314 = vadd.f32 %v2168, %v2313
      %2315 = vmatmul.f32.gmra.mxu0 %v1887
      %v2316 = vpop.f32.mrf.mxu0
      %v2317 = vadd.f32 %v2168, %v2316
      %2318 = vmatmul.f32.gmra.mxu0 %v1890
      %v2319 = vpop.f32.mrf.mxu0
      %v2320 = vadd.f32 %v2168, %v2319
      %2321 = vmatmul.f32.gmra.mxu0 %v1893
      %v2322 = vpop.f32.mrf.mxu0
      %v2323 = vadd.f32 %v2168, %v2322
      %2324 = vmatmul.f32.gmra.mxu0 %v1896
      %v2325 = vpop.f32.mrf.mxu0
      %v2326 = vadd.f32 %v2168, %v2325
      %2327 = vmatmul.f32.gmra.mxu0 %v1899
      %v2328 = vpop.f32.mrf.mxu0
      %v2329 = vadd.f32 %v2168, %v2328
      %2330 = vmatmul.f32.gmra.mxu0 %v1902
      %v2331 = vpop.f32.mrf.mxu0
      %v2332 = vadd.f32 %v2168, %v2331
      %2333 = vmatmul.f32.gmra.mxu0 %v1905
      %v2334 = vpop.f32.mrf.mxu0
      %v2335 = vadd.f32 %v2168, %v2334
      %2336 = vmatmul.f32.gmra.mxu0 %v1908
      %v2337 = vpop.f32.mrf.mxu0
      %v2338 = vadd.f32 %v2168, %v2337
      %2339 = vmatmul.f32.gmra.mxu0 %v1911
      %v2340 = vpop.f32.mrf.mxu0
      %v2341 = vadd.f32 %v2168, %v2340
      %2342 = vmatmul.f32.gmra.mxu0 %v1914
      %v2343 = vpop.f32.mrf.mxu0
      %v2344 = vadd.f32 %v2168, %v2343
      %2345 = vmatmul.f32.gmra.mxu0 %v1917
      %v2346 = vpop.f32.mrf.mxu0
      %v2347 = vadd.f32 %v2168, %v2346
      %2348 = vmatmul.f32.gmra.mxu0 %v1920
      %v2349 = vpop.f32.mrf.mxu0
      %v2350 = vadd.f32 %v2168, %v2349
      %2351 = vmatmul.f32.gmra.mxu0 %v1923
      %v2352 = vpop.f32.mrf.mxu0
      %v2353 = vadd.f32 %v2168, %v2352
      %2354 = vmatmul.f32.gmra.mxu0 %v1926
      %v2355 = vpop.f32.mrf.mxu0
      %v2356 = vadd.f32 %v2168, %v2355
      %2357 = vmatmul.f32.gmra.mxu0 %v1929
      %v2358 = vpop.f32.mrf.mxu0
      %v2359 = vadd.f32 %v2168, %v2358
      %2360 = vmatmul.f32.gmra.mxu0 %v1932
      %v2361 = vpop.f32.mrf.mxu0
      %v2362 = vadd.f32 %v2168, %v2361
      %2363 = vmatmul.f32.gmra.mxu0 %v1935
      %v2364 = vpop.f32.mrf.mxu0
      %v2365 = vadd.f32 %v2168, %v2364
      %2366 = vmatmul.f32.gmra.mxu0 %v1938
      %v2367 = vpop.f32.mrf.mxu0
      %v2368 = vadd.f32 %v2168, %v2367
      %2369 = vmatmul.f32.gmra.mxu0 %v1941
      %v2370 = vpop.f32.mrf.mxu0
      %v2371 = vadd.f32 %v2168, %v2370
      %2372 = vmatmul.f32.gmra.mxu0 %v1944
      %v2373 = vpop.f32.mrf.mxu0
      %v2374 = vadd.f32 %v2168, %v2373
      %2375 = vmatmul.f32.gmra.mxu0 %v1947
      %v2376 = vpop.f32.mrf.mxu0
      %v2377 = vadd.f32 %v2168, %v2376
      %2378 = vdwg.mxu0
      %v2379 = vmax.f32 %v2188, -10.0
      %v2380 = vmax.f32 %v2191, -10.0
      %v2381 = vmax.f32 %v2194, -10.0
      %v2382 = vmax.f32 %v2197, -10.0
      %v2383 = vmax.f32 %v2200, -10.0
      %v2384 = vmax.f32 %v2203, -10.0
      %v2385 = vmax.f32 %v2206, -10.0
      %v2386 = vmax.f32 %v2209, -10.0
      %v2387 = vmax.f32 %v2212, -10.0
      %v2388 = vmax.f32 %v2215, -10.0
      %v2389 = vmax.f32 %v2218, -10.0
      %v2390 = vmax.f32 %v2221, -10.0
      %v2391 = vmax.f32 %v2224, -10.0
      %v2392 = vmax.f32 %v2227, -10.0
      %v2393 = vmax.f32 %v2230, -10.0
      %v2394 = vmax.f32 %v2233, -10.0
      %v2395 = vmax.f32 %v2236, -10.0
      %v2396 = vmax.f32 %v2239, -10.0
      %v2397 = vmax.f32 %v2242, -10.0
      %v2398 = vmax.f32 %v2245, -10.0
      %v2399 = vmax.f32 %v2248, -10.0
      %v2400 = vmax.f32 %v2251, -10.0
      %v2401 = vmax.f32 %v2254, -10.0
      %v2402 = vmax.f32 %v2257, -10.0
      %v2403 = vmax.f32 %v2260, -10.0
      %v2404 = vmax.f32 %v2263, -10.0
      %v2405 = vmax.f32 %v2266, -10.0
      %v2406 = vmax.f32 %v2269, -10.0
      %v2407 = vmax.f32 %v2272, -10.0
      %v2408 = vmax.f32 %v2275, -10.0
      %v2409 = vmax.f32 %v2278, -10.0
      %v2410 = vmax.f32 %v2281, -10.0
      %v2411 = vmax.f32 %v2284, -10.0
      %v2412 = vmax.f32 %v2287, -10.0
      %v2413 = vmax.f32 %v2290, -10.0
      %v2414 = vmax.f32 %v2293, -10.0
      %v2415 = vmax.f32 %v2296, -10.0
      %v2416 = vmax.f32 %v2299, -10.0
      %v2417 = vmax.f32 %v2302, -10.0
      %v2418 = vmax.f32 %v2305, -10.0
      %v2419 = vmax.f32 %v2308, -10.0
      %v2420 = vmax.f32 %v2311, -10.0
      %v2421 = vmax.f32 %v2314, -10.0
      %v2422 = vmax.f32 %v2317, -10.0
      %v2423 = vmax.f32 %v2320, -10.0
      %v2424 = vmax.f32 %v2323, -10.0
      %v2425 = vmax.f32 %v2326, -10.0
      %v2426 = vmax.f32 %v2329, -10.0
      %v2427 = vmax.f32 %v2332, -10.0
      %v2428 = vmax.f32 %v2335, -10.0
      %v2429 = vmax.f32 %v2338, -10.0
      %v2430 = vmax.f32 %v2341, -10.0
      %v2431 = vmax.f32 %v2344, -10.0
      %v2432 = vmax.f32 %v2347, -10.0
      %v2433 = vmax.f32 %v2350, -10.0
      %v2434 = vmax.f32 %v2353, -10.0
      %v2435 = vmax.f32 %v2356, -10.0
      %v2436 = vmax.f32 %v2359, -10.0
      %v2437 = vmax.f32 %v2362, -10.0
      %v2438 = vmax.f32 %v2365, -10.0
      %v2439 = vmax.f32 %v2368, -10.0
      %v2440 = vmax.f32 %v2371, -10.0
      %v2441 = vmax.f32 %v2374, -10.0
      %v2442 = vmax.f32 %v2377, -10.0
      %v2443 = vmin.f32 %v2379, 10.0
      %v2444 = vmin.f32 %v2380, 10.0
      %v2445 = vmin.f32 %v2381, 10.0
      %v2446 = vmin.f32 %v2382, 10.0
      %v2447 = vmin.f32 %v2383, 10.0
      %v2448 = vmin.f32 %v2384, 10.0
      %v2449 = vmin.f32 %v2385, 10.0
      %v2450 = vmin.f32 %v2386, 10.0
      %v2451 = vmin.f32 %v2387, 10.0
      %v2452 = vmin.f32 %v2388, 10.0
      %v2453 = vmin.f32 %v2389, 10.0
      %v2454 = vmin.f32 %v2390, 10.0
      %v2455 = vmin.f32 %v2391, 10.0
      %v2456 = vmin.f32 %v2392, 10.0
      %v2457 = vmin.f32 %v2393, 10.0
      %v2458 = vmin.f32 %v2394, 10.0
      %v2459 = vmin.f32 %v2395, 10.0
      %v2460 = vmin.f32 %v2396, 10.0
      %v2461 = vmin.f32 %v2397, 10.0
      %v2462 = vmin.f32 %v2398, 10.0
      %v2463 = vmin.f32 %v2399, 10.0
      %v2464 = vmin.f32 %v2400, 10.0
      %v2465 = vmin.f32 %v2401, 10.0
      %v2466 = vmin.f32 %v2402, 10.0
      %v2467 = vmin.f32 %v2403, 10.0
      %v2468 = vmin.f32 %v2404, 10.0
      %v2469 = vmin.f32 %v2405, 10.0
      %v2470 = vmin.f32 %v2406, 10.0
      %v2471 = vmin.f32 %v2407, 10.0
      %v2472 = vmin.f32 %v2408, 10.0
      %v2473 = vmin.f32 %v2409, 10.0
      %v2474 = vmin.f32 %v2410, 10.0
      %v2475 = vmin.f32 %v2411, 10.0
      %v2476 = vmin.f32 %v2412, 10.0
      %v2477 = vmin.f32 %v2413, 10.0
      %v2478 = vmin.f32 %v2414, 10.0
      %v2479 = vmin.f32 %v2415, 10.0
      %v2480 = vmin.f32 %v2416, 10.0
      %v2481 = vmin.f32 %v2417, 10.0
      %v2482 = vmin.f32 %v2418, 10.0
      %v2483 = vmin.f32 %v2419, 10.0
      %v2484 = vmin.f32 %v2420, 10.0
      %v2485 = vmin.f32 %v2421, 10.0
      %v2486 = vmin.f32 %v2422, 10.0
      %v2487 = vmin.f32 %v2423, 10.0
      %v2488 = vmin.f32 %v2424, 10.0
      %v2489 = vmin.f32 %v2425, 10.0
      %v2490 = vmin.f32 %v2426, 10.0
      %v2491 = vmin.f32 %v2427, 10.0
      %v2492 = vmin.f32 %v2428, 10.0
      %v2493 = vmin.f32 %v2429, 10.0
      %v2494 = vmin.f32 %v2430, 10.0
      %v2495 = vmin.f32 %v2431, 10.0
      %v2496 = vmin.f32 %v2432, 10.0
      %v2497 = vmin.f32 %v2433, 10.0
      %v2498 = vmin.f32 %v2434, 10.0
      %v2499 = vmin.f32 %v2435, 10.0
      %v2500 = vmin.f32 %v2436, 10.0
      %v2501 = vmin.f32 %v2437, 10.0
      %v2502 = vmin.f32 %v2438, 10.0
      %v2503 = vmin.f32 %v2439, 10.0
      %v2504 = vmin.f32 %v2440, 10.0
      %v2505 = vmin.f32 %v2441, 10.0
      %v2506 = vmin.f32 %v2442, 10.0
      %v2507 = vld [vmem:[%s608] sm:$0xff]
      %v2508 = vld [vmem:[%s608 + $0x8] sm:$0xff]
      %v2509 = vld [vmem:[%s608 + $0x10] sm:$0xff]
      %v2510 = vld [vmem:[%s608 + $0x18] sm:$0xff]
      %v2511 = vld [vmem:[%s608 + $0x20] sm:$0xff]
      %v2512 = vld [vmem:[%s608 + $0x28] sm:$0xff]
      %v2513 = vld [vmem:[%s608 + $0x30] sm:$0xff]
      %v2514 = vld [vmem:[%s608 + $0x38] sm:$0xff]
      %v2515 = vld [vmem:[%s608 + $0x40] sm:$0xff]
      %v2516 = vld [vmem:[%s608 + $0x48] sm:$0xff]
      %v2517 = vld [vmem:[%s608 + $0x50] sm:$0xff]
      %v2518 = vld [vmem:[%s608 + $0x58] sm:$0xff]
      %v2519 = vld [vmem:[%s608 + $0x60] sm:$0xff]
      %v2520 = vld [vmem:[%s608 + $0x68] sm:$0xff]
      %v2521 = vld [vmem:[%s608 + $0x70] sm:$0xff]
      %v2522 = vld [vmem:[%s608 + $0x78] sm:$0xff]
      %v2523 = vld [vmem:[%s608 + $0x80] sm:$0xff]
      %v2524 = vld [vmem:[%s608 + $0x88] sm:$0xff]
      %v2525 = vld [vmem:[%s608 + $0x90] sm:$0xff]
      %v2526 = vld [vmem:[%s608 + $0x98] sm:$0xff]
      %v2527 = vld [vmem:[%s608 + $0xa0] sm:$0xff]
      %v2528 = vld [vmem:[%s608 + $0xa8] sm:$0xff]
      %v2529 = vld [vmem:[%s608 + $0xb0] sm:$0xff]
      %v2530 = vld [vmem:[%s608 + $0xb8] sm:$0xff]
      %v2531 = vld [vmem:[%s608 + $0xc0] sm:$0xff]
      %v2532 = vld [vmem:[%s608 + $0xc8] sm:$0xff]
      %v2533 = vld [vmem:[%s608 + $0xd0] sm:$0xff]
      %v2534 = vld [vmem:[%s608 + $0xd8] sm:$0xff]
      %v2535 = vld [vmem:[%s608 + $0xe0] sm:$0xff]
      %v2536 = vld [vmem:[%s608 + $0xe8] sm:$0xff]
      %v2537 = vld [vmem:[%s608 + $0xf0] sm:$0xff]
      %v2538 = vld [vmem:[%s608 + $0xf8] sm:$0xff]
      %v2539 = vld [vmem:[%s608 + $0x100] sm:$0xff]
      %v2540 = vld [vmem:[%s608 + $0x108] sm:$0xff]
      %v2541 = vld [vmem:[%s608 + $0x110] sm:$0xff]
      %v2542 = vld [vmem:[%s608 + $0x118] sm:$0xff]
      %v2543 = vld [vmem:[%s608 + $0x120] sm:$0xff]
      %v2544 = vld [vmem:[%s608 + $0x128] sm:$0xff]
      %v2545 = vld [vmem:[%s608 + $0x130] sm:$0xff]
      %v2546 = vld [vmem:[%s608 + $0x138] sm:$0xff]
      %v2547 = vld [vmem:[%s608 + $0x140] sm:$0xff]
      %v2548 = vld [vmem:[%s608 + $0x148] sm:$0xff]
      %v2549 = vld [vmem:[%s608 + $0x150] sm:$0xff]
      %v2550 = vld [vmem:[%s608 + $0x158] sm:$0xff]
      %v2551 = vld [vmem:[%s608 + $0x160] sm:$0xff]
      %v2552 = vld [vmem:[%s608 + $0x168] sm:$0xff]
      %v2553 = vld [vmem:[%s608 + $0x170] sm:$0xff]
      %v2554 = vld [vmem:[%s608 + $0x178] sm:$0xff]
      %v2555 = vld [vmem:[%s608 + $0x180] sm:$0xff]
      %v2556 = vld [vmem:[%s608 + $0x188] sm:$0xff]
      %v2557 = vld [vmem:[%s608 + $0x190] sm:$0xff]
      %v2558 = vld [vmem:[%s608 + $0x198] sm:$0xff]
      %v2559 = vld [vmem:[%s608 + $0x1a0] sm:$0xff]
      %v2560 = vld [vmem:[%s608 + $0x1a8] sm:$0xff]
      %v2561 = vld [vmem:[%s608 + $0x1b0] sm:$0xff]
      %v2562 = vld [vmem:[%s608 + $0x1b8] sm:$0xff]
      %v2563 = vld [vmem:[%s608 + $0x1c0] sm:$0xff]
      %v2564 = vld [vmem:[%s608 + $0x1c8] sm:$0xff]
      %v2565 = vld [vmem:[%s608 + $0x1d0] sm:$0xff]
      %v2566 = vld [vmem:[%s608 + $0x1d8] sm:$0xff]
      %v2567 = vld [vmem:[%s608 + $0x1e0] sm:$0xff]
      %v2568 = vld [vmem:[%s608 + $0x1e8] sm:$0xff]
      %v2569 = vld [vmem:[%s608 + $0x1f0] sm:$0xff]
      %v2570 = vld [vmem:[%s608 + $0x1f8] sm:$0xff]
      %v2571 = vmul.f32 %v2443, 0.5
      %v2572 = vmul.f32 %v2444, 0.5
      %v2573 = vmul.f32 %v2445, 0.5
      %v2574 = vmul.f32 %v2446, 0.5
      %v2575 = vmul.f32 %v2447, 0.5
      %v2576 = vmul.f32 %v2448, 0.5
      %v2577 = vmul.f32 %v2449, 0.5
      %v2578 = vmul.f32 %v2450, 0.5
      %v2579 = vmul.f32 %v2451, 0.5
      %v2580 = vmul.f32 %v2452, 0.5
      %v2581 = vmul.f32 %v2453, 0.5
      %v2582 = vmul.f32 %v2454, 0.5
      %v2583 = vmul.f32 %v2455, 0.5
      %v2584 = vmul.f32 %v2456, 0.5
      %v2585 = vmul.f32 %v2457, 0.5
      %v2586 = vmul.f32 %v2458, 0.5
      %v2587 = vmul.f32 %v2459, 0.5
      %v2588 = vmul.f32 %v2460, 0.5
      %v2589 = vmul.f32 %v2461, 0.5
      %v2590 = vmul.f32 %v2462, 0.5
      %v2591 = vmul.f32 %v2463, 0.5
      %v2592 = vmul.f32 %v2464, 0.5
      %v2593 = vmul.f32 %v2465, 0.5
      %v2594 = vmul.f32 %v2466, 0.5
      %v2595 = vmul.f32 %v2467, 0.5
      %v2596 = vmul.f32 %v2468, 0.5
      %v2597 = vmul.f32 %v2469, 0.5
      %v2598 = vmul.f32 %v2470, 0.5
      %v2599 = vmul.f32 %v2471, 0.5
      %v2600 = vmul.f32 %v2472, 0.5
      %v2601 = vmul.f32 %v2473, 0.5
      %v2602 = vmul.f32 %v2474, 0.5
      %v2603 = vmul.f32 %v2475, 0.5
      %v2604 = vmul.f32 %v2476, 0.5
      %v2605 = vmul.f32 %v2477, 0.5
      %v2606 = vmul.f32 %v2478, 0.5
      %v2607 = vmul.f32 %v2479, 0.5
      %v2608 = vmul.f32 %v2480, 0.5
      %v2609 = vmul.f32 %v2481, 0.5
      %v2610 = vmul.f32 %v2482, 0.5
      %v2611 = vmul.f32 %v2483, 0.5
      %v2612 = vmul.f32 %v2484, 0.5
      %v2613 = vmul.f32 %v2485, 0.5
      %v2614 = vmul.f32 %v2486, 0.5
      %v2615 = vmul.f32 %v2487, 0.5
      %v2616 = vmul.f32 %v2488, 0.5
      %v2617 = vmul.f32 %v2489, 0.5
      %v2618 = vmul.f32 %v2490, 0.5
      %v2619 = vmul.f32 %v2491, 0.5
      %v2620 = vmul.f32 %v2492, 0.5
      %v2621 = vmul.f32 %v2493, 0.5
      %v2622 = vmul.f32 %v2494, 0.5
      %v2623 = vmul.f32 %v2495, 0.5
      %v2624 = vmul.f32 %v2496, 0.5
      %v2625 = vmul.f32 %v2497, 0.5
      %v2626 = vmul.f32 %v2498, 0.5
      %v2627 = vmul.f32 %v2499, 0.5
      %v2628 = vmul.f32 %v2500, 0.5
      %v2629 = vmul.f32 %v2501, 0.5
      %v2630 = vmul.f32 %v2502, 0.5
      %v2631 = vmul.f32 %v2503, 0.5
      %v2632 = vmul.f32 %v2504, 0.5
      %v2633 = vmul.f32 %v2505, 0.5
      %v2634 = vmul.f32 %v2506, 0.5
      %v2635 = vmul.f32 %v2571, 1.442695
      %v2636 = vpow.pop %v2635
      %v2637 = vmul.f32 %v2572, 1.442695
      %v2638 = vpow.pop %v2637
      %v2639 = vmul.f32 %v2573, 1.442695
      %v2640 = vpow.pop %v2639
      %v2641 = vmul.f32 %v2574, 1.442695
      %v2642 = vpow.pop %v2641
      %v2643 = vmul.f32 %v2575, 1.442695
      %v2644 = vpow.pop %v2643
      %v2645 = vmul.f32 %v2576, 1.442695
      %v2646 = vpow.pop %v2645
      %v2647 = vmul.f32 %v2577, 1.442695
      %v2648 = vpow.pop %v2647
      %v2649 = vmul.f32 %v2578, 1.442695
      %v2650 = vpow.pop %v2649
      %v2651 = vmul.f32 %v2579, 1.442695
      %v2652 = vpow.pop %v2651
      %v2653 = vmul.f32 %v2580, 1.442695
      %v2654 = vpow.pop %v2653
      %v2655 = vmul.f32 %v2581, 1.442695
      %v2656 = vpow.pop %v2655
      %v2657 = vmul.f32 %v2582, 1.442695
      %v2658 = vpow.pop %v2657
      %v2659 = vmul.f32 %v2583, 1.442695
      %v2660 = vpow.pop %v2659
      %v2661 = vmul.f32 %v2584, 1.442695
      %v2662 = vpow.pop %v2661
      %v2663 = vmul.f32 %v2585, 1.442695
      %v2664 = vpow.pop %v2663
      %v2665 = vmul.f32 %v2586, 1.442695
      %v2666 = vpow.pop %v2665
      %v2667 = vmul.f32 %v2587, 1.442695
      %v2668 = vpow.pop %v2667
      %v2669 = vmul.f32 %v2588, 1.442695
      %v2670 = vpow.pop %v2669
      %v2671 = vmul.f32 %v2589, 1.442695
      %v2672 = vpow.pop %v2671
      %v2673 = vmul.f32 %v2590, 1.442695
      %v2674 = vpow.pop %v2673
      %v2675 = vmul.f32 %v2591, 1.442695
      %v2676 = vpow.pop %v2675
      %v2677 = vmul.f32 %v2592, 1.442695
      %v2678 = vpow.pop %v2677
      %v2679 = vmul.f32 %v2593, 1.442695
      %v2680 = vpow.pop %v2679
      %v2681 = vmul.f32 %v2594, 1.442695
      %v2682 = vpow.pop %v2681
      %v2683 = vmul.f32 %v2595, 1.442695
      %v2684 = vpow.pop %v2683
      %v2685 = vmul.f32 %v2596, 1.442695
      %v2686 = vpow.pop %v2685
      %v2687 = vmul.f32 %v2597, 1.442695
      %v2688 = vpow.pop %v2687
      %v2689 = vmul.f32 %v2598, 1.442695
      %v2690 = vpow.pop %v2689
      %v2691 = vmul.f32 %v2599, 1.442695
      %v2692 = vpow.pop %v2691
      %v2693 = vmul.f32 %v2600, 1.442695
      %v2694 = vpow.pop %v2693
      %v2695 = vmul.f32 %v2601, 1.442695
      %v2696 = vpow.pop %v2695
      %v2697 = vmul.f32 %v2602, 1.442695
      %v2698 = vpow.pop %v2697
      %v2699 = vmul.f32 %v2603, 1.442695
      %v2700 = vpow.pop %v2699
      %v2701 = vmul.f32 %v2604, 1.442695
      %v2702 = vpow.pop %v2701
      %v2703 = vmul.f32 %v2605, 1.442695
      %v2704 = vpow.pop %v2703
      %v2705 = vmul.f32 %v2606, 1.442695
      %v2706 = vpow.pop %v2705
      %v2707 = vmul.f32 %v2607, 1.442695
      %v2708 = vpow.pop %v2707
      %v2709 = vmul.f32 %v2608, 1.442695
      %v2710 = vpow.pop %v2709
      %v2711 = vmul.f32 %v2609, 1.442695
      %v2712 = vpow.pop %v2711
      %v2713 = vmul.f32 %v2610, 1.442695
      %v2714 = vpow.pop %v2713
      %v2715 = vmul.f32 %v2611, 1.442695
      %v2716 = vpow.pop %v2715
      %v2717 = vmul.f32 %v2612, 1.442695
      %v2718 = vpow.pop %v2717
      %v2719 = vmul.f32 %v2613, 1.442695
      %v2720 = vpow.pop %v2719
      %v2721 = vmul.f32 %v2614, 1.442695
      %v2722 = vpow.pop %v2721
      %v2723 = vmul.f32 %v2615, 1.442695
      %v2724 = vpow.pop %v2723
      %v2725 = vmul.f32 %v2616, 1.442695
      %v2726 = vpow.pop %v2725
      %v2727 = vmul.f32 %v2617, 1.442695
      %v2728 = vpow.pop %v2727
      %v2729 = vmul.f32 %v2618, 1.442695
      %v2730 = vpow.pop %v2729
      %v2731 = vmul.f32 %v2619, 1.442695
      %v2732 = vpow.pop %v2731
      %v2733 = vmul.f32 %v2620, 1.442695
      %v2734 = vpow.pop %v2733
      %v2735 = vmul.f32 %v2621, 1.442695
      %v2736 = vpow.pop %v2735
      %v2737 = vmul.f32 %v2622, 1.442695
      %v2738 = vpow.pop %v2737
      %v2739 = vmul.f32 %v2623, 1.442695
      %v2740 = vpow.pop %v2739
      %v2741 = vmul.f32 %v2624, 1.442695
      %v2742 = vpow.pop %v2741
      %v2743 = vmul.f32 %v2625, 1.442695
      %v2744 = vpow.pop %v2743
      %v2745 = vmul.f32 %v2626, 1.442695
      %v2746 = vpow.pop %v2745
      %v2747 = vmul.f32 %v2627, 1.442695
      %v2748 = vpow.pop %v2747
      %v2749 = vmul.f32 %v2628, 1.442695
      %v2750 = vpow.pop %v2749
      %v2751 = vmul.f32 %v2629, 1.442695
      %v2752 = vpow.pop %v2751
      %v2753 = vmul.f32 %v2630, 1.442695
      %v2754 = vpow.pop %v2753
      %v2755 = vmul.f32 %v2631, 1.442695
      %v2756 = vpow.pop %v2755
      %v2757 = vmul.f32 %v2632, 1.442695
      %v2758 = vpow.pop %v2757
      %v2759 = vmul.f32 %v2633, 1.442695
      %v2760 = vpow.pop %v2759
      %v2761 = vmul.f32 %v2634, 1.442695
      %v2762 = vpow.pop %v2761
      %v2763 = vmul.f32 %v2507, %v2636
      %v2764 = vmul.f32 %v2508, %v2638
      %v2765 = vmul.f32 %v2509, %v2640
      %v2766 = vmul.f32 %v2510, %v2642
      %v2767 = vmul.f32 %v2511, %v2644
      %v2768 = vmul.f32 %v2512, %v2646
      %v2769 = vmul.f32 %v2513, %v2648
      %v2770 = vmul.f32 %v2514, %v2650
      %v2771 = vmul.f32 %v2515, %v2652
      %v2772 = vmul.f32 %v2516, %v2654
      %v2773 = vmul.f32 %v2517, %v2656
      %v2774 = vmul.f32 %v2518, %v2658
      %v2775 = vmul.f32 %v2519, %v2660
      %v2776 = vmul.f32 %v2520, %v2662
      %v2777 = vmul.f32 %v2521, %v2664
      %v2778 = vmul.f32 %v2522, %v2666
      %v2779 = vmul.f32 %v2523, %v2668
      %v2780 = vmul.f32 %v2524, %v2670
      %v2781 = vmul.f32 %v2525, %v2672
      %v2782 = vmul.f32 %v2526, %v2674
      %v2783 = vmul.f32 %v2527, %v2676
      %v2784 = vmul.f32 %v2528, %v2678
      %v2785 = vmul.f32 %v2529, %v2680
      %v2786 = vmul.f32 %v2530, %v2682
      %v2787 = vmul.f32 %v2531, %v2684
      %v2788 = vmul.f32 %v2532, %v2686
      %v2789 = vmul.f32 %v2533, %v2688
      %v2790 = vmul.f32 %v2534, %v2690
      %v2791 = vmul.f32 %v2535, %v2692
      %v2792 = vmul.f32 %v2536, %v2694
      %v2793 = vmul.f32 %v2537, %v2696
      %v2794 = vmul.f32 %v2538, %v2698
      %v2795 = vmul.f32 %v2539, %v2700
      %v2796 = vmul.f32 %v2540, %v2702
      %v2797 = vmul.f32 %v2541, %v2704
      %v2798 = vmul.f32 %v2542, %v2706
      %v2799 = vmul.f32 %v2543, %v2708
      %v2800 = vmul.f32 %v2544, %v2710
      %v2801 = vmul.f32 %v2545, %v2712
      %v2802 = vmul.f32 %v2546, %v2714
      %v2803 = vmul.f32 %v2547, %v2716
      %v2804 = vmul.f32 %v2548, %v2718
      %v2805 = vmul.f32 %v2549, %v2720
      %v2806 = vmul.f32 %v2550, %v2722
      %v2807 = vmul.f32 %v2551, %v2724
      %v2808 = vmul.f32 %v2552, %v2726
      %v2809 = vmul.f32 %v2553, %v2728
      %v2810 = vmul.f32 %v2554, %v2730
      %v2811 = vmul.f32 %v2555, %v2732
      %v2812 = vmul.f32 %v2556, %v2734
      %v2813 = vmul.f32 %v2557, %v2736
      %v2814 = vmul.f32 %v2558, %v2738
      %v2815 = vmul.f32 %v2559, %v2740
      %v2816 = vmul.f32 %v2560, %v2742
      %v2817 = vmul.f32 %v2561, %v2744
      %v2818 = vmul.f32 %v2562, %v2746
      %v2819 = vmul.f32 %v2563, %v2748
      %v2820 = vmul.f32 %v2564, %v2750
      %v2821 = vmul.f32 %v2565, %v2752
      %v2822 = vmul.f32 %v2566, %v2754
      %v2823 = vmul.f32 %v2567, %v2756
      %v2824 = vmul.f32 %v2568, %v2758
      %v2825 = vmul.f32 %v2569, %v2760
      %v2826 = vmul.f32 %v2570, %v2762
      %v2827 = vadd.f32 %v1967, %v2763
      %v2828 = vadd.f32 %v1970, %v2764
      %v2829 = vadd.f32 %v1973, %v2765
      %v2830 = vadd.f32 %v1976, %v2766
      %v2831 = vadd.f32 %v1979, %v2767
      %v2832 = vadd.f32 %v1982, %v2768
      %v2833 = vadd.f32 %v1985, %v2769
      %v2834 = vadd.f32 %v1988, %v2770
      %v2835 = vadd.f32 %v1991, %v2771
      %v2836 = vadd.f32 %v1994, %v2772
      %v2837 = vadd.f32 %v1997, %v2773
      %v2838 = vadd.f32 %v2000, %v2774
      %v2839 = vadd.f32 %v2003, %v2775
      %v2840 = vadd.f32 %v2006, %v2776
      %v2841 = vadd.f32 %v2009, %v2777
      %v2842 = vadd.f32 %v2012, %v2778
      %v2843 = vadd.f32 %v2015, %v2779
      %v2844 = vadd.f32 %v2018, %v2780
      %v2845 = vadd.f32 %v2021, %v2781
      %v2846 = vadd.f32 %v2024, %v2782
      %v2847 = vadd.f32 %v2027, %v2783
      %v2848 = vadd.f32 %v2030, %v2784
      %v2849 = vadd.f32 %v2033, %v2785
      %v2850 = vadd.f32 %v2036, %v2786
      %v2851 = vadd.f32 %v2039, %v2787
      %v2852 = vadd.f32 %v2042, %v2788
      %v2853 = vadd.f32 %v2045, %v2789
      %v2854 = vadd.f32 %v2048, %v2790
      %v2855 = vadd.f32 %v2051, %v2791
      %v2856 = vadd.f32 %v2054, %v2792
      %v2857 = vadd.f32 %v2057, %v2793
      %v2858 = vadd.f32 %v2060, %v2794
      %v2859 = vadd.f32 %v2063, %v2795
      %v2860 = vadd.f32 %v2066, %v2796
      %v2861 = vadd.f32 %v2069, %v2797
      %v2862 = vadd.f32 %v2072, %v2798
      %v2863 = vadd.f32 %v2075, %v2799
      %v2864 = vadd.f32 %v2078, %v2800
      %v2865 = vadd.f32 %v2081, %v2801
      %v2866 = vadd.f32 %v2084, %v2802
      %v2867 = vadd.f32 %v2087, %v2803
      %v2868 = vadd.f32 %v2090, %v2804
      %v2869 = vadd.f32 %v2093, %v2805
      %v2870 = vadd.f32 %v2096, %v2806
      %v2871 = vadd.f32 %v2099, %v2807
      %v2872 = vadd.f32 %v2102, %v2808
      %v2873 = vadd.f32 %v2105, %v2809
      %v2874 = vadd.f32 %v2108, %v2810
      %v2875 = vadd.f32 %v2111, %v2811
      %v2876 = vadd.f32 %v2114, %v2812
      %v2877 = vadd.f32 %v2117, %v2813
      %v2878 = vadd.f32 %v2120, %v2814
      %v2879 = vadd.f32 %v2123, %v2815
      %v2880 = vadd.f32 %v2126, %v2816
      %v2881 = vadd.f32 %v2129, %v2817
      %v2882 = vadd.f32 %v2132, %v2818
      %v2883 = vadd.f32 %v2135, %v2819
      %v2884 = vadd.f32 %v2138, %v2820
      %v2885 = vadd.f32 %v2141, %v2821
      %v2886 = vadd.f32 %v2144, %v2822
      %v2887 = vadd.f32 %v2147, %v2823
      %v2888 = vadd.f32 %v2150, %v2824
      %v2889 = vadd.f32 %v2153, %v2825
      %v2890 = vadd.f32 %v2156, %v2826
      %v2891 = vld [vmem:[%s10] sm:$0xff]
      %v2892 = vld [vmem:[%s10 + $0x8] sm:$0x3]
      %v2893 = vld [vmem:[%s11] sm:$0x1]
      %v2895 = vperm.slane %v2893, 0
      %vm2897 = vcmask 80896
      %v2899 = vsel %vm2897, %v2827, 0
      %v2902 = vsel %vm2897, %v2828, 0
      %v2905 = vsel %vm2897, %v2829, 0
      %v2908 = vsel %vm2897, %v2830, 0
      %v2911 = vsel %vm2897, %v2831, 0
      %v2914 = vsel %vm2897, %v2832, 0
      %v2917 = vsel %vm2897, %v2833, 0
      %v2920 = vsel %vm2897, %v2834, 0
      %v2923 = vsel %vm2897, %v2835, 0
      %v2926 = vsel %vm2897, %v2836, 0
      %v2929 = vsel %vm2897, %v2837, 0
      %v2932 = vsel %vm2897, %v2838, 0
      %v2935 = vsel %vm2897, %v2839, 0
      %v2938 = vsel %vm2897, %v2840, 0
      %v2941 = vsel %vm2897, %v2841, 0
      %v2944 = vsel %vm2897, %v2842, 0
      %v2947 = vsel %vm2897, %v2843, 0
      %v2950 = vsel %vm2897, %v2844, 0
      %v2953 = vsel %vm2897, %v2845, 0
      %v2956 = vsel %vm2897, %v2846, 0
      %v2959 = vsel %vm2897, %v2847, 0
      %v2962 = vsel %vm2897, %v2848, 0
      %v2965 = vsel %vm2897, %v2849, 0
      %v2968 = vsel %vm2897, %v2850, 0
      %v2971 = vsel %vm2897, %v2851, 0
      %v2974 = vsel %vm2897, %v2852, 0
      %v2977 = vsel %vm2897, %v2853, 0
      %v2980 = vsel %vm2897, %v2854, 0
      %v2983 = vsel %vm2897, %v2855, 0
      %v2986 = vsel %vm2897, %v2856, 0
      %v2989 = vsel %vm2897, %v2857, 0
      %v2992 = vsel %vm2897, %v2858, 0
      %v2995 = vsel %vm2897, %v2859, 0
      %v2998 = vsel %vm2897, %v2860, 0
      %v3001 = vsel %vm2897, %v2861, 0
      %v3004 = vsel %vm2897, %v2862, 0
      %v3007 = vsel %vm2897, %v2863, 0
      %v3010 = vsel %vm2897, %v2864, 0
      %v3013 = vsel %vm2897, %v2865, 0
      %v3016 = vsel %vm2897, %v2866, 0
      %v3019 = vsel %vm2897, %v2867, 0
      %v3022 = vsel %vm2897, %v2868, 0
      %v3025 = vsel %vm2897, %v2869, 0
      %v3028 = vsel %vm2897, %v2870, 0
      %v3031 = vsel %vm2897, %v2871, 0
      %v3034 = vsel %vm2897, %v2872, 0
      %v3037 = vsel %vm2897, %v2873, 0
      %v3040 = vsel %vm2897, %v2874, 0
      %v3043 = vsel %vm2897, %v2875, 0
      %v3046 = vsel %vm2897, %v2876, 0
      %v3049 = vsel %vm2897, %v2877, 0
      %v3052 = vsel %vm2897, %v2878, 0
      %v3055 = vsel %vm2897, %v2879, 0
      %v3058 = vsel %vm2897, %v2880, 0
      %v3061 = vsel %vm2897, %v2881, 0
      %v3064 = vsel %vm2897, %v2882, 0
      %v3067 = vsel %vm2897, %v2883, 0
      %v3070 = vsel %vm2897, %v2884, 0
      %v3073 = vsel %vm2897, %v2885, 0
      %v3076 = vsel %vm2897, %v2886, 0
      %v3079 = vsel %vm2897, %v2887, 0
      %v3082 = vsel %vm2897, %v2888, 0
      %v3085 = vsel %vm2897, %v2889, 0
      %v3088 = vsel %vm2897, %v2890, 0
      %vm3090 = vcmask 1041408
      %v3092 = vsel %vm3090, %v2892, 0
      %3094 = vmatpush.msra.mxu0 0.0
      %3095 = vmatpush.msra.mxu0 0.0
      %3096 = vmatpush.msra.mxu0 0.0
      %3097 = vmatpush.msra.mxu0 0.0
      %3098 = vmatpush.msra.mxu0 0.0
      %3099 = vmatpush.msra.mxu0 0.0
      %3100 = vmatpush.msra.mxu0 0.0
      %3101 = vmatpush.msra.mxu0 0.0
      %3102 = vmatpush.msra.mxu0 0.0
      %3103 = vmatpush.msra.mxu0 0.0
      %3104 = vmatpush.msra.mxu0 0.0
      %3105 = vmatpush.msra.mxu0 0.0
      %3106 = vmatpush.msra.mxu0 0.0
      %3107 = vmatpush.msra.mxu0 0.0
      %3108 = vmatpush.msra.mxu0 %v3092
      %3109 = vmatpush.msra.mxu0 %v2891
      %3110 = vmatmul.f32.gmra.mxu0 %v2899
      %v3111 = vpop.f32.mrf.mxu0
      %v3112 = vadd.f32 %v2895, %v3111
      %3113 = vmatmul.f32.gmra.mxu0 %v2902
      %v3114 = vpop.f32.mrf.mxu0
      %v3115 = vadd.f32 %v2895, %v3114
      %3116 = vmatmul.f32.gmra.mxu0 %v2905
      %v3117 = vpop.f32.mrf.mxu0
      %v3118 = vadd.f32 %v2895, %v3117
      %3119 = vmatmul.f32.gmra.mxu0 %v2908
      %v3120 = vpop.f32.mrf.mxu0
      %v3121 = vadd.f32 %v2895, %v3120
      %3122 = vmatmul.f32.gmra.mxu0 %v2911
      %v3123 = vpop.f32.mrf.mxu0
      %v3124 = vadd.f32 %v2895, %v3123
      %3125 = vmatmul.f32.gmra.mxu0 %v2914
      %v3126 = vpop.f32.mrf.mxu0
      %v3127 = vadd.f32 %v2895, %v3126
      %3128 = vmatmul.f32.gmra.mxu0 %v2917
      %v3129 = vpop.f32.mrf.mxu0
      %v3130 = vadd.f32 %v2895, %v3129
      %3131 = vmatmul.f32.gmra.mxu0 %v2920
      %v3132 = vpop.f32.mrf.mxu0
      %v3133 = vadd.f32 %v2895, %v3132
      %3134 = vmatmul.f32.gmra.mxu0 %v2923
      %v3135 = vpop.f32.mrf.mxu0
      %v3136 = vadd.f32 %v2895, %v3135
      %3137 = vmatmul.f32.gmra.mxu0 %v2926
      %v3138 = vpop.f32.mrf.mxu0
      %v3139 = vadd.f32 %v2895, %v3138
      %3140 = vmatmul.f32.gmra.mxu0 %v2929
      %v3141 = vpop.f32.mrf.mxu0
      %v3142 = vadd.f32 %v2895, %v3141
      %3143 = vmatmul.f32.gmra.mxu0 %v2932
      %v3144 = vpop.f32.mrf.mxu0
      %v3145 = vadd.f32 %v2895, %v3144
      %3146 = vmatmul.f32.gmra.mxu0 %v2935
      %v3147 = vpop.f32.mrf.mxu0
      %v3148 = vadd.f32 %v2895, %v3147
      %3149 = vmatmul.f32.gmra.mxu0 %v2938
      %v3150 = vpop.f32.mrf.mxu0
      %v3151 = vadd.f32 %v2895, %v3150
      %3152 = vmatmul.f32.gmra.mxu0 %v2941
      %v3153 = vpop.f32.mrf.mxu0
      %v3154 = vadd.f32 %v2895, %v3153
      %3155 = vmatmul.f32.gmra.mxu0 %v2944
      %v3156 = vpop.f32.mrf.mxu0
      %v3157 = vadd.f32 %v2895, %v3156
      %3158 = vmatmul.f32.gmra.mxu0 %v2947
      %v3159 = vpop.f32.mrf.mxu0
      %v3160 = vadd.f32 %v2895, %v3159
      %3161 = vmatmul.f32.gmra.mxu0 %v2950
      %v3162 = vpop.f32.mrf.mxu0
      %v3163 = vadd.f32 %v2895, %v3162
      %3164 = vmatmul.f32.gmra.mxu0 %v2953
      %v3165 = vpop.f32.mrf.mxu0
      %v3166 = vadd.f32 %v2895, %v3165
      %3167 = vmatmul.f32.gmra.mxu0 %v2956
      %v3168 = vpop.f32.mrf.mxu0
      %v3169 = vadd.f32 %v2895, %v3168
      %3170 = vmatmul.f32.gmra.mxu0 %v2959
      %v3171 = vpop.f32.mrf.mxu0
      %v3172 = vadd.f32 %v2895, %v3171
      %3173 = vmatmul.f32.gmra.mxu0 %v2962
      %v3174 = vpop.f32.mrf.mxu0
      %v3175 = vadd.f32 %v2895, %v3174
      %3176 = vmatmul.f32.gmra.mxu0 %v2965
      %v3177 = vpop.f32.mrf.mxu0
      %v3178 = vadd.f32 %v2895, %v3177
      %3179 = vmatmul.f32.gmra.mxu0 %v2968
      %v3180 = vpop.f32.mrf.mxu0
      %v3181 = vadd.f32 %v2895, %v3180
      %3182 = vmatmul.f32.gmra.mxu0 %v2971
      %v3183 = vpop.f32.mrf.mxu0
      %v3184 = vadd.f32 %v2895, %v3183
      %3185 = vmatmul.f32.gmra.mxu0 %v2974
      %v3186 = vpop.f32.mrf.mxu0
      %v3187 = vadd.f32 %v2895, %v3186
      %3188 = vmatmul.f32.gmra.mxu0 %v2977
      %v3189 = vpop.f32.mrf.mxu0
      %v3190 = vadd.f32 %v2895, %v3189
      %3191 = vmatmul.f32.gmra.mxu0 %v2980
      %v3192 = vpop.f32.mrf.mxu0
      %v3193 = vadd.f32 %v2895, %v3192
      %3194 = vmatmul.f32.gmra.mxu0 %v2983
      %v3195 = vpop.f32.mrf.mxu0
      %v3196 = vadd.f32 %v2895, %v3195
      %3197 = vmatmul.f32.gmra.mxu0 %v2986
      %v3198 = vpop.f32.mrf.mxu0
      %v3199 = vadd.f32 %v2895, %v3198
      %3200 = vmatmul.f32.gmra.mxu0 %v2989
      %v3201 = vpop.f32.mrf.mxu0
      %v3202 = vadd.f32 %v2895, %v3201
      %3203 = vmatmul.f32.gmra.mxu0 %v2992
      %v3204 = vpop.f32.mrf.mxu0
      %v3205 = vadd.f32 %v2895, %v3204
      %3206 = vmatmul.f32.gmra.mxu0 %v2995
      %v3207 = vpop.f32.mrf.mxu0
      %v3208 = vadd.f32 %v2895, %v3207
      %3209 = vmatmul.f32.gmra.mxu0 %v2998
      %v3210 = vpop.f32.mrf.mxu0
      %v3211 = vadd.f32 %v2895, %v3210
      %3212 = vmatmul.f32.gmra.mxu0 %v3001
      %v3213 = vpop.f32.mrf.mxu0
      %v3214 = vadd.f32 %v2895, %v3213
      %3215 = vmatmul.f32.gmra.mxu0 %v3004
      %v3216 = vpop.f32.mrf.mxu0
      %v3217 = vadd.f32 %v2895, %v3216
      %3218 = vmatmul.f32.gmra.mxu0 %v3007
      %v3219 = vpop.f32.mrf.mxu0
      %v3220 = vadd.f32 %v2895, %v3219
      %3221 = vmatmul.f32.gmra.mxu0 %v3010
      %v3222 = vpop.f32.mrf.mxu0
      %v3223 = vadd.f32 %v2895, %v3222
      %3224 = vmatmul.f32.gmra.mxu0 %v3013
      %v3225 = vpop.f32.mrf.mxu0
      %v3226 = vadd.f32 %v2895, %v3225
      %3227 = vmatmul.f32.gmra.mxu0 %v3016
      %v3228 = vpop.f32.mrf.mxu0
      %v3229 = vadd.f32 %v2895, %v3228
      %3230 = vmatmul.f32.gmra.mxu0 %v3019
      %v3231 = vpop.f32.mrf.mxu0
      %v3232 = vadd.f32 %v2895, %v3231
      %3233 = vmatmul.f32.gmra.mxu0 %v3022
      %v3234 = vpop.f32.mrf.mxu0
      %v3235 = vadd.f32 %v2895, %v3234
      %3236 = vmatmul.f32.gmra.mxu0 %v3025
      %v3237 = vpop.f32.mrf.mxu0
      %v3238 = vadd.f32 %v2895, %v3237
      %3239 = vmatmul.f32.gmra.mxu0 %v3028
      %v3240 = vpop.f32.mrf.mxu0
      %v3241 = vadd.f32 %v2895, %v3240
      %3242 = vmatmul.f32.gmra.mxu0 %v3031
      %v3243 = vpop.f32.mrf.mxu0
      %v3244 = vadd.f32 %v2895, %v3243
      %3245 = vmatmul.f32.gmra.mxu0 %v3034
      %v3246 = vpop.f32.mrf.mxu0
      %v3247 = vadd.f32 %v2895, %v3246
      %3248 = vmatmul.f32.gmra.mxu0 %v3037
      %v3249 = vpop.f32.mrf.mxu0
      %v3250 = vadd.f32 %v2895, %v3249
      %3251 = vmatmul.f32.gmra.mxu0 %v3040
      %v3252 = vpop.f32.mrf.mxu0
      %v3253 = vadd.f32 %v2895, %v3252
      %3254 = vmatmul.f32.gmra.mxu0 %v3043
      %v3255 = vpop.f32.mrf.mxu0
      %v3256 = vadd.f32 %v2895, %v3255
      %3257 = vmatmul.f32.gmra.mxu0 %v3046
      %v3258 = vpop.f32.mrf.mxu0
      %v3259 = vadd.f32 %v2895, %v3258
      %3260 = vmatmul.f32.gmra.mxu0 %v3049
      %v3261 = vpop.f32.mrf.mxu0
      %v3262 = vadd.f32 %v2895, %v3261
      %3263 = vmatmul.f32.gmra.mxu0 %v3052
      %v3264 = vpop.f32.mrf.mxu0
      %v3265 = vadd.f32 %v2895, %v3264
      %3266 = vmatmul.f32.gmra.mxu0 %v3055
      %v3267 = vpop.f32.mrf.mxu0
      %v3268 = vadd.f32 %v2895, %v3267
      %3269 = vmatmul.f32.gmra.mxu0 %v3058
      %v3270 = vpop.f32.mrf.mxu0
      %v3271 = vadd.f32 %v2895, %v3270
      %3272 = vmatmul.f32.gmra.mxu0 %v3061
      %v3273 = vpop.f32.mrf.mxu0
      %v3274 = vadd.f32 %v2895, %v3273
      %3275 = vmatmul.f32.gmra.mxu0 %v3064
      %v3276 = vpop.f32.mrf.mxu0
      %v3277 = vadd.f32 %v2895, %v3276
      %3278 = vmatmul.f32.gmra.mxu0 %v3067
      %v3279 = vpop.f32.mrf.mxu0
      %v3280 = vadd.f32 %v2895, %v3279
      %3281 = vmatmul.f32.gmra.mxu0 %v3070
      %v3282 = vpop.f32.mrf.mxu0
      %v3283 = vadd.f32 %v2895, %v3282
      %3284 = vmatmul.f32.gmra.mxu0 %v3073
      %v3285 = vpop.f32.mrf.mxu0
      %v3286 = vadd.f32 %v2895, %v3285
      %3287 = vmatmul.f32.gmra.mxu0 %v3076
      %v3288 = vpop.f32.mrf.mxu0
      %v3289 = vadd.f32 %v2895, %v3288
      %3290 = vmatmul.f32.gmra.mxu0 %v3079
      %v3291 = vpop.f32.mrf.mxu0
      %v3292 = vadd.f32 %v2895, %v3291
      %3293 = vmatmul.f32.gmra.mxu0 %v3082
      %v3294 = vpop.f32.mrf.mxu0
      %v3295 = vadd.f32 %v2895, %v3294
      %3296 = vmatmul.f32.gmra.mxu0 %v3085
      %v3297 = vpop.f32.mrf.mxu0
      %v3298 = vadd.f32 %v2895, %v3297
      %3299 = vmatmul.f32.gmra.mxu0 %v3088
      %v3300 = vpop.f32.mrf.mxu0
      %v3301 = vadd.f32 %v2895, %v3300
      %3302 = vdwg.mxu0
      %vm3303 = vcmp.gt.f32.partialorder %v3112, 0.0
      %vm3304 = vcmp.gt.f32.partialorder %v3115, 0.0
      %vm3305 = vcmp.gt.f32.partialorder %v3118, 0.0
      %vm3306 = vcmp.gt.f32.partialorder %v3121, 0.0
      %vm3307 = vcmp.gt.f32.partialorder %v3124, 0.0
      %vm3308 = vcmp.gt.f32.partialorder %v3127, 0.0
      %vm3309 = vcmp.gt.f32.partialorder %v3130, 0.0
      %vm3310 = vcmp.gt.f32.partialorder %v3133, 0.0
      %vm3311 = vcmp.gt.f32.partialorder %v3136, 0.0
      %vm3312 = vcmp.gt.f32.partialorder %v3139, 0.0
      %vm3313 = vcmp.gt.f32.partialorder %v3142, 0.0
      %vm3314 = vcmp.gt.f32.partialorder %v3145, 0.0
      %vm3315 = vcmp.gt.f32.partialorder %v3148, 0.0
      %vm3316 = vcmp.gt.f32.partialorder %v3151, 0.0
      %vm3317 = vcmp.gt.f32.partialorder %v3154, 0.0
      %vm3318 = vcmp.gt.f32.partialorder %v3157, 0.0
      %vm3319 = vcmp.gt.f32.partialorder %v3160, 0.0
      %vm3320 = vcmp.gt.f32.partialorder %v3163, 0.0
      %vm3321 = vcmp.gt.f32.partialorder %v3166, 0.0
      %vm3322 = vcmp.gt.f32.partialorder %v3169, 0.0
      %vm3323 = vcmp.gt.f32.partialorder %v3172, 0.0
      %vm3324 = vcmp.gt.f32.partialorder %v3175, 0.0
      %vm3325 = vcmp.gt.f32.partialorder %v3178, 0.0
      %vm3326 = vcmp.gt.f32.partialorder %v3181, 0.0
      %vm3327 = vcmp.gt.f32.partialorder %v3184, 0.0
      %vm3328 = vcmp.gt.f32.partialorder %v3187, 0.0
      %vm3329 = vcmp.gt.f32.partialorder %v3190, 0.0
      %vm3330 = vcmp.gt.f32.partialorder %v3193, 0.0
      %vm3331 = vcmp.gt.f32.partialorder %v3196, 0.0
      %vm3332 = vcmp.gt.f32.partialorder %v3199, 0.0
      %vm3333 = vcmp.gt.f32.partialorder %v3202, 0.0
      %vm3334 = vcmp.gt.f32.partialorder %v3205, 0.0
      %vm3335 = vcmp.gt.f32.partialorder %v3208, 0.0
      %vm3336 = vcmp.gt.f32.partialorder %v3211, 0.0
      %vm3337 = vcmp.gt.f32.partialorder %v3214, 0.0
      %vm3338 = vcmp.gt.f32.partialorder %v3217, 0.0
      %vm3339 = vcmp.gt.f32.partialorder %v3220, 0.0
      %vm3340 = vcmp.gt.f32.partialorder %v3223, 0.0
      %vm3341 = vcmp.gt.f32.partialorder %v3226, 0.0
      %vm3342 = vcmp.gt.f32.partialorder %v3229, 0.0
      %vm3343 = vcmp.gt.f32.partialorder %v3232, 0.0
      %vm3344 = vcmp.gt.f32.partialorder %v3235, 0.0
      %vm3345 = vcmp.gt.f32.partialorder %v3238, 0.0
      %vm3346 = vcmp.gt.f32.partialorder %v3241, 0.0
      %vm3347 = vcmp.gt.f32.partialorder %v3244, 0.0
      %vm3348 = vcmp.gt.f32.partialorder %v3247, 0.0
      %vm3349 = vcmp.gt.f32.partialorder %v3250, 0.0
      %vm3350 = vcmp.gt.f32.partialorder %v3253, 0.0
      %vm3351 = vcmp.gt.f32.partialorder %v3256, 0.0
      %vm3352 = vcmp.gt.f32.partialorder %v3259, 0.0
      %vm3353 = vcmp.gt.f32.partialorder %v3262, 0.0
      %vm3354 = vcmp.gt.f32.partialorder %v3265, 0.0
      %vm3355 = vcmp.gt.f32.partialorder %v3268, 0.0
      %vm3356 = vcmp.gt.f32.partialorder %v3271, 0.0
      %vm3357 = vcmp.gt.f32.partialorder %v3274, 0.0
      %vm3358 = vcmp.gt.f32.partialorder %v3277, 0.0
      %vm3359 = vcmp.gt.f32.partialorder %v3280, 0.0
      %vm3360 = vcmp.gt.f32.partialorder %v3283, 0.0
      %vm3361 = vcmp.gt.f32.partialorder %v3286, 0.0
      %vm3362 = vcmp.gt.f32.partialorder %v3289, 0.0
      %vm3363 = vcmp.gt.f32.partialorder %v3292, 0.0
      %vm3364 = vcmp.gt.f32.partialorder %v3295, 0.0
      %vm3365 = vcmp.gt.f32.partialorder %v3298, 0.0
      %vm3366 = vcmp.gt.f32.partialorder %v3301, 0.0
      %v3367 = vmul.f32 %v3112, 0.2
      %v3368 = vmul.f32 %v3115, 0.2
      %v3369 = vmul.f32 %v3118, 0.2
      %v3370 = vmul.f32 %v3121, 0.2
      %v3371 = vmul.f32 %v3124, 0.2
      %v3372 = vmul.f32 %v3127, 0.2
      %v3373 = vmul.f32 %v3130, 0.2
      %v3374 = vmul.f32 %v3133, 0.2
      %v3375 = vmul.f32 %v3136, 0.2
      %v3376 = vmul.f32 %v3139, 0.2
      %v3377 = vmul.f32 %v3142, 0.2
      %v3378 = vmul.f32 %v3145, 0.2
      %v3379 = vmul.f32 %v3148, 0.2
      %v3380 = vmul.f32 %v3151, 0.2
      %v3381 = vmul.f32 %v3154, 0.2
      %v3382 = vmul.f32 %v3157, 0.2
      %v3383 = vmul.f32 %v3160, 0.2
      %v3384 = vmul.f32 %v3163, 0.2
      %v3385 = vmul.f32 %v3166, 0.2
      %v3386 = vmul.f32 %v3169, 0.2
      %v3387 = vmul.f32 %v3172, 0.2
      %v3388 = vmul.f32 %v3175, 0.2
      %v3389 = vmul.f32 %v3178, 0.2
      %v3390 = vmul.f32 %v3181, 0.2
      %v3391 = vmul.f32 %v3184, 0.2
      %v3392 = vmul.f32 %v3187, 0.2
      %v3393 = vmul.f32 %v3190, 0.2
      %v3394 = vmul.f32 %v3193, 0.2
      %v3395 = vmul.f32 %v3196, 0.2
      %v3396 = vmul.f32 %v3199, 0.2
      %v3397 = vmul.f32 %v3202, 0.2
      %v3398 = vmul.f32 %v3205, 0.2
      %v3399 = vmul.f32 %v3208, 0.2
      %v3400 = vmul.f32 %v3211, 0.2
      %v3401 = vmul.f32 %v3214, 0.2
      %v3402 = vmul.f32 %v3217, 0.2
      %v3403 = vmul.f32 %v3220, 0.2
      %v3404 = vmul.f32 %v3223, 0.2
      %v3405 = vmul.f32 %v3226, 0.2
      %v3406 = vmul.f32 %v3229, 0.2
      %v3407 = vmul.f32 %v3232, 0.2
      %v3408 = vmul.f32 %v3235, 0.2
      %v3409 = vmul.f32 %v3238, 0.2
      %v3410 = vmul.f32 %v3241, 0.2
      %v3411 = vmul.f32 %v3244, 0.2
      %v3412 = vmul.f32 %v3247, 0.2
      %v3413 = vmul.f32 %v3250, 0.2
      %v3414 = vmul.f32 %v3253, 0.2
      %v3415 = vmul.f32 %v3256, 0.2
      %v3416 = vmul.f32 %v3259, 0.2
      %v3417 = vmul.f32 %v3262, 0.2
      %v3418 = vmul.f32 %v3265, 0.2
      %v3419 = vmul.f32 %v3268, 0.2
      %v3420 = vmul.f32 %v3271, 0.2
      %v3421 = vmul.f32 %v3274, 0.2
      %v3422 = vmul.f32 %v3277, 0.2
      %v3423 = vmul.f32 %v3280, 0.2
      %v3424 = vmul.f32 %v3283, 0.2
      %v3425 = vmul.f32 %v3286, 0.2
      %v3426 = vmul.f32 %v3289, 0.2
      %v3427 = vmul.f32 %v3292, 0.2
      %v3428 = vmul.f32 %v3295, 0.2
      %v3429 = vmul.f32 %v3298, 0.2
      %v3430 = vmul.f32 %v3301, 0.2
      %v3431 = vsel %vm3303, %v3112, %v3367
      %v3432 = vsel %vm3304, %v3115, %v3368
      %v3433 = vsel %vm3305, %v3118, %v3369
      %v3434 = vsel %vm3306, %v3121, %v3370
      %v3435 = vsel %vm3307, %v3124, %v3371
      %v3436 = vsel %vm3308, %v3127, %v3372
      %v3437 = vsel %vm3309, %v3130, %v3373
      %v3438 = vsel %vm3310, %v3133, %v3374
      %v3439 = vsel %vm3311, %v3136, %v3375
      %v3440 = vsel %vm3312, %v3139, %v3376
      %v3441 = vsel %vm3313, %v3142, %v3377
      %v3442 = vsel %vm3314, %v3145, %v3378
      %v3443 = vsel %vm3315, %v3148, %v3379
      %v3444 = vsel %vm3316, %v3151, %v3380
      %v3445 = vsel %vm3317, %v3154, %v3381
      %v3446 = vsel %vm3318, %v3157, %v3382
      %v3447 = vsel %vm3319, %v3160, %v3383
      %v3448 = vsel %vm3320, %v3163, %v3384
      %v3449 = vsel %vm3321, %v3166, %v3385
      %v3450 = vsel %vm3322, %v3169, %v3386
      %v3451 = vsel %vm3323, %v3172, %v3387
      %v3452 = vsel %vm3324, %v3175, %v3388
      %v3453 = vsel %vm3325, %v3178, %v3389
      %v3454 = vsel %vm3326, %v3181, %v3390
      %v3455 = vsel %vm3327, %v3184, %v3391
      %v3456 = vsel %vm3328, %v3187, %v3392
      %v3457 = vsel %vm3329, %v3190, %v3393
      %v3458 = vsel %vm3330, %v3193, %v3394
      %v3459 = vsel %vm3331, %v3196, %v3395
      %v3460 = vsel %vm3332, %v3199, %v3396
      %v3461 = vsel %vm3333, %v3202, %v3397
      %v3462 = vsel %vm3334, %v3205, %v3398
      %v3463 = vsel %vm3335, %v3208, %v3399
      %v3464 = vsel %vm3336, %v3211, %v3400
      %v3465 = vsel %vm3337, %v3214, %v3401
      %v3466 = vsel %vm3338, %v3217, %v3402
      %v3467 = vsel %vm3339, %v3220, %v3403
      %v3468 = vsel %vm3340, %v3223, %v3404
      %v3469 = vsel %vm3341, %v3226, %v3405
      %v3470 = vsel %vm3342, %v3229, %v3406
      %v3471 = vsel %vm3343, %v3232, %v3407
      %v3472 = vsel %vm3344, %v3235, %v3408
      %v3473 = vsel %vm3345, %v3238, %v3409
      %v3474 = vsel %vm3346, %v3241, %v3410
      %v3475 = vsel %vm3347, %v3244, %v3411
      %v3476 = vsel %vm3348, %v3247, %v3412
      %v3477 = vsel %vm3349, %v3250, %v3413
      %v3478 = vsel %vm3350, %v3253, %v3414
      %v3479 = vsel %vm3351, %v3256, %v3415
      %v3480 = vsel %vm3352, %v3259, %v3416
      %v3481 = vsel %vm3353, %v3262, %v3417
      %v3482 = vsel %vm3354, %v3265, %v3418
      %v3483 = vsel %vm3355, %v3268, %v3419
      %v3484 = vsel %vm3356, %v3271, %v3420
      %v3485 = vsel %vm3357, %v3274, %v3421
      %v3486 = vsel %vm3358, %v3277, %v3422
      %v3487 = vsel %vm3359, %v3280, %v3423
      %v3488 = vsel %vm3360, %v3283, %v3424
      %v3489 = vsel %vm3361, %v3286, %v3425
      %v3490 = vsel %vm3362, %v3289, %v3426
      %v3491 = vsel %vm3363, %v3292, %v3427
      %v3492 = vsel %vm3364, %v3295, %v3428
      %v3493 = vsel %vm3365, %v3298, %v3429
      %v3494 = vsel %vm3366, %v3301, %v3430
      %v3495 = vld [vmem:[%s12] sm:$0xff]
      %v3496 = vld [vmem:[%s12 + $0x8] sm:$0xff]
      %v3497 = vld [vmem:[%s12 + $0x10] sm:$0xff]
      %v3498 = vld [vmem:[%s12 + $0x18] sm:$0xff]
      %v3499 = vld [vmem:[%s12 + $0x20] sm:$0xff]
      %v3500 = vld [vmem:[%s12 + $0x28] sm:$0xff]
      %v3501 = vld [vmem:[%s12 + $0x30] sm:$0xff]
      %v3502 = vld [vmem:[%s12 + $0x38] sm:$0xff]
      %v3503 = vld [vmem:[%s13] sm:$0x1]
      %v3505 = vperm.slane %v3503, 0
      %v3508 = vsel %vm1756, %v3431, 0
      %v3511 = vsel %vm1756, %v3432, 0
      %v3514 = vsel %vm1756, %v3433, 0
      %v3517 = vsel %vm1756, %v3434, 0
      %v3520 = vsel %vm1756, %v3435, 0
      %v3523 = vsel %vm1756, %v3436, 0
      %v3526 = vsel %vm1756, %v3437, 0
      %v3529 = vsel %vm1756, %v3438, 0
      %v3532 = vsel %vm1756, %v3439, 0
      %v3535 = vsel %vm1756, %v3440, 0
      %v3538 = vsel %vm1756, %v3441, 0
      %v3541 = vsel %vm1756, %v3442, 0
      %v3544 = vsel %vm1756, %v3443, 0
      %v3547 = vsel %vm1756, %v3444, 0
      %v3550 = vsel %vm1756, %v3445, 0
      %v3553 = vsel %vm1756, %v3446, 0
      %v3556 = vsel %vm1756, %v3447, 0
      %v3559 = vsel %vm1756, %v3448, 0
      %v3562 = vsel %vm1756, %v3449, 0
      %v3565 = vsel %vm1756, %v3450, 0
      %v3568 = vsel %vm1756, %v3451, 0
      %v3571 = vsel %vm1756, %v3452, 0
      %v3574 = vsel %vm1756, %v3453, 0
      %v3577 = vsel %vm1756, %v3454, 0
      %v3580 = vsel %vm1756, %v3455, 0
      %v3583 = vsel %vm1756, %v3456, 0
      %v3586 = vsel %vm1756, %v3457, 0
      %v3589 = vsel %vm1756, %v3458, 0
      %v3592 = vsel %vm1756, %v3459, 0
      %v3595 = vsel %vm1756, %v3460, 0
      %v3598 = vsel %vm1756, %v3461, 0
      %v3601 = vsel %vm1756, %v3462, 0
      %v3604 = vsel %vm1756, %v3463, 0
      %v3607 = vsel %vm1756, %v3464, 0
      %v3610 = vsel %vm1756, %v3465, 0
      %v3613 = vsel %vm1756, %v3466, 0
      %v3616 = vsel %vm1756, %v3467, 0
      %v3619 = vsel %vm1756, %v3468, 0
      %v3622 = vsel %vm1756, %v3469, 0
      %v3625 = vsel %vm1756, %v3470, 0
      %v3628 = vsel %vm1756, %v3471, 0
      %v3631 = vsel %vm1756, %v3472, 0
      %v3634 = vsel %vm1756, %v3473, 0
      %v3637 = vsel %vm1756, %v3474, 0
      %v3640 = vsel %vm1756, %v3475, 0
      %v3643 = vsel %vm1756, %v3476, 0
      %v3646 = vsel %vm1756, %v3477, 0
      %v3649 = vsel %vm1756, %v3478, 0
      %v3652 = vsel %vm1756, %v3479, 0
      %v3655 = vsel %vm1756, %v3480, 0
      %v3658 = vsel %vm1756, %v3481, 0
      %v3661 = vsel %vm1756, %v3482, 0
      %v3664 = vsel %vm1756, %v3483, 0
      %v3667 = vsel %vm1756, %v3484, 0
      %v3670 = vsel %vm1756, %v3485, 0
      %v3673 = vsel %vm1756, %v3486, 0
      %v3676 = vsel %vm1756, %v3487, 0
      %v3679 = vsel %vm1756, %v3488, 0
      %v3682 = vsel %vm1756, %v3489, 0
      %v3685 = vsel %vm1756, %v3490, 0
      %v3688 = vsel %vm1756, %v3491, 0
      %v3691 = vsel %vm1756, %v3492, 0
      %v3694 = vsel %vm1756, %v3493, 0
      %v3697 = vsel %vm1756, %v3494, 0
      %3699 = vmatpush.msra.mxu0 0.0
      %3700 = vmatpush.msra.mxu0 0.0
      %3701 = vmatpush.msra.mxu0 0.0
      %3702 = vmatpush.msra.mxu0 0.0
      %3703 = vmatpush.msra.mxu0 0.0
      %3704 = vmatpush.msra.mxu0 0.0
      %3705 = vmatpush.msra.mxu0 0.0
      %3706 = vmatpush.msra.mxu0 0.0
      %3707 = vmatpush.msra.mxu0 %v3502
      %3708 = vmatpush.msra.mxu0 %v3501
      %3709 = vmatpush.msra.mxu0 %v3500
      %3710 = vmatpush.msra.mxu0 %v3499
      %3711 = vmatpush.msra.mxu0 %v3498
      %3712 = vmatpush.msra.mxu0 %v3497
      %3713 = vmatpush.msra.mxu0 %v3496
      %3714 = vmatpush.msra.mxu0 %v3495
      %3715 = vmatmul.f32.gmra.mxu0 %v3508
      %v3716 = vpop.f32.mrf.mxu0
      %v3717 = vadd.f32 %v3505, %v3716
      %3718 = vmatmul.f32.gmra.mxu0 %v3511
      %v3719 = vpop.f32.mrf.mxu0
      %v3720 = vadd.f32 %v3505, %v3719
      %3721 = vmatmul.f32.gmra.mxu0 %v3514
      %v3722 = vpop.f32.mrf.mxu0
      %v3723 = vadd.f32 %v3505, %v3722
      %3724 = vmatmul.f32.gmra.mxu0 %v3517
      %v3725 = vpop.f32.mrf.mxu0
      %v3726 = vadd.f32 %v3505, %v3725
      %3727 = vmatmul.f32.gmra.mxu0 %v3520
      %v3728 = vpop.f32.mrf.mxu0
      %v3729 = vadd.f32 %v3505, %v3728
      %3730 = vmatmul.f32.gmra.mxu0 %v3523
      %v3731 = vpop.f32.mrf.mxu0
      %v3732 = vadd.f32 %v3505, %v3731
      %3733 = vmatmul.f32.gmra.mxu0 %v3526
      %v3734 = vpop.f32.mrf.mxu0
      %v3735 = vadd.f32 %v3505, %v3734
      %3736 = vmatmul.f32.gmra.mxu0 %v3529
      %v3737 = vpop.f32.mrf.mxu0
      %v3738 = vadd.f32 %v3505, %v3737
      %3739 = vmatmul.f32.gmra.mxu0 %v3532
      %v3740 = vpop.f32.mrf.mxu0
      %v3741 = vadd.f32 %v3505, %v3740
      %3742 = vmatmul.f32.gmra.mxu0 %v3535
      %v3743 = vpop.f32.mrf.mxu0
      %v3744 = vadd.f32 %v3505, %v3743
      %3745 = vmatmul.f32.gmra.mxu0 %v3538
      %v3746 = vpop.f32.mrf.mxu0
      %v3747 = vadd.f32 %v3505, %v3746
      %3748 = vmatmul.f32.gmra.mxu0 %v3541
      %v3749 = vpop.f32.mrf.mxu0
      %v3750 = vadd.f32 %v3505, %v3749
      %3751 = vmatmul.f32.gmra.mxu0 %v3544
      %v3752 = vpop.f32.mrf.mxu0
      %v3753 = vadd.f32 %v3505, %v3752
      %3754 = vmatmul.f32.gmra.mxu0 %v3547
      %v3755 = vpop.f32.mrf.mxu0
      %v3756 = vadd.f32 %v3505, %v3755
      %3757 = vmatmul.f32.gmra.mxu0 %v3550
      %v3758 = vpop.f32.mrf.mxu0
      %v3759 = vadd.f32 %v3505, %v3758
      %3760 = vmatmul.f32.gmra.mxu0 %v3553
      %v3761 = vpop.f32.mrf.mxu0
      %v3762 = vadd.f32 %v3505, %v3761
      %3763 = vmatmul.f32.gmra.mxu0 %v3556
      %v3764 = vpop.f32.mrf.mxu0
      %v3765 = vadd.f32 %v3505, %v3764
      %3766 = vmatmul.f32.gmra.mxu0 %v3559
      %v3767 = vpop.f32.mrf.mxu0
      %v3768 = vadd.f32 %v3505, %v3767
      %3769 = vmatmul.f32.gmra.mxu0 %v3562
      %v3770 = vpop.f32.mrf.mxu0
      %v3771 = vadd.f32 %v3505, %v3770
      %3772 = vmatmul.f32.gmra.mxu0 %v3565
      %v3773 = vpop.f32.mrf.mxu0
      %v3774 = vadd.f32 %v3505, %v3773
      %3775 = vmatmul.f32.gmra.mxu0 %v3568
      %v3776 = vpop.f32.mrf.mxu0
      %v3777 = vadd.f32 %v3505, %v3776
      %3778 = vmatmul.f32.gmra.mxu0 %v3571
      %v3779 = vpop.f32.mrf.mxu0
      %v3780 = vadd.f32 %v3505, %v3779
      %3781 = vmatmul.f32.gmra.mxu0 %v3574
      %v3782 = vpop.f32.mrf.mxu0
      %v3783 = vadd.f32 %v3505, %v3782
      %3784 = vmatmul.f32.gmra.mxu0 %v3577
      %v3785 = vpop.f32.mrf.mxu0
      %v3786 = vadd.f32 %v3505, %v3785
      %3787 = vmatmul.f32.gmra.mxu0 %v3580
      %v3788 = vpop.f32.mrf.mxu0
      %v3789 = vadd.f32 %v3505, %v3788
      %3790 = vmatmul.f32.gmra.mxu0 %v3583
      %v3791 = vpop.f32.mrf.mxu0
      %v3792 = vadd.f32 %v3505, %v3791
      %3793 = vmatmul.f32.gmra.mxu0 %v3586
      %v3794 = vpop.f32.mrf.mxu0
      %v3795 = vadd.f32 %v3505, %v3794
      %3796 = vmatmul.f32.gmra.mxu0 %v3589
      %v3797 = vpop.f32.mrf.mxu0
      %v3798 = vadd.f32 %v3505, %v3797
      %3799 = vmatmul.f32.gmra.mxu0 %v3592
      %v3800 = vpop.f32.mrf.mxu0
      %v3801 = vadd.f32 %v3505, %v3800
      %3802 = vmatmul.f32.gmra.mxu0 %v3595
      %v3803 = vpop.f32.mrf.mxu0
      %v3804 = vadd.f32 %v3505, %v3803
      %3805 = vmatmul.f32.gmra.mxu0 %v3598
      %v3806 = vpop.f32.mrf.mxu0
      %v3807 = vadd.f32 %v3505, %v3806
      %3808 = vmatmul.f32.gmra.mxu0 %v3601
      %v3809 = vpop.f32.mrf.mxu0
      %v3810 = vadd.f32 %v3505, %v3809
      %3811 = vmatmul.f32.gmra.mxu0 %v3604
      %v3812 = vpop.f32.mrf.mxu0
      %v3813 = vadd.f32 %v3505, %v3812
      %3814 = vmatmul.f32.gmra.mxu0 %v3607
      %v3815 = vpop.f32.mrf.mxu0
      %v3816 = vadd.f32 %v3505, %v3815
      %3817 = vmatmul.f32.gmra.mxu0 %v3610
      %v3818 = vpop.f32.mrf.mxu0
      %v3819 = vadd.f32 %v3505, %v3818
      %3820 = vmatmul.f32.gmra.mxu0 %v3613
      %v3821 = vpop.f32.mrf.mxu0
      %v3822 = vadd.f32 %v3505, %v3821
      %3823 = vmatmul.f32.gmra.mxu0 %v3616
      %v3824 = vpop.f32.mrf.mxu0
      %v3825 = vadd.f32 %v3505, %v3824
      %3826 = vmatmul.f32.gmra.mxu0 %v3619
      %v3827 = vpop.f32.mrf.mxu0
      %v3828 = vadd.f32 %v3505, %v3827
      %3829 = vmatmul.f32.gmra.mxu0 %v3622
      %v3830 = vpop.f32.mrf.mxu0
      %v3831 = vadd.f32 %v3505, %v3830
      %3832 = vmatmul.f32.gmra.mxu0 %v3625
      %v3833 = vpop.f32.mrf.mxu0
      %v3834 = vadd.f32 %v3505, %v3833
      %3835 = vmatmul.f32.gmra.mxu0 %v3628
      %v3836 = vpop.f32.mrf.mxu0
      %v3837 = vadd.f32 %v3505, %v3836
      %3838 = vmatmul.f32.gmra.mxu0 %v3631
      %v3839 = vpop.f32.mrf.mxu0
      %v3840 = vadd.f32 %v3505, %v3839
      %3841 = vmatmul.f32.gmra.mxu0 %v3634
      %v3842 = vpop.f32.mrf.mxu0
      %v3843 = vadd.f32 %v3505, %v3842
      %3844 = vmatmul.f32.gmra.mxu0 %v3637
      %v3845 = vpop.f32.mrf.mxu0
      %v3846 = vadd.f32 %v3505, %v3845
      %3847 = vmatmul.f32.gmra.mxu0 %v3640
      %v3848 = vpop.f32.mrf.mxu0
      %v3849 = vadd.f32 %v3505, %v3848
      %3850 = vmatmul.f32.gmra.mxu0 %v3643
      %v3851 = vpop.f32.mrf.mxu0
      %v3852 = vadd.f32 %v3505, %v3851
      %3853 = vmatmul.f32.gmra.mxu0 %v3646
      %v3854 = vpop.f32.mrf.mxu0
      %v3855 = vadd.f32 %v3505, %v3854
      %3856 = vmatmul.f32.gmra.mxu0 %v3649
      %v3857 = vpop.f32.mrf.mxu0
      %v3858 = vadd.f32 %v3505, %v3857
      %3859 = vmatmul.f32.gmra.mxu0 %v3652
      %v3860 = vpop.f32.mrf.mxu0
      %v3861 = vadd.f32 %v3505, %v3860
      %3862 = vmatmul.f32.gmra.mxu0 %v3655
      %v3863 = vpop.f32.mrf.mxu0
      %v3864 = vadd.f32 %v3505, %v3863
      %3865 = vmatmul.f32.gmra.mxu0 %v3658
      %v3866 = vpop.f32.mrf.mxu0
      %v3867 = vadd.f32 %v3505, %v3866
      %3868 = vmatmul.f32.gmra.mxu0 %v3661
      %v3869 = vpop.f32.mrf.mxu0
      %v3870 = vadd.f32 %v3505, %v3869
      %3871 = vmatmul.f32.gmra.mxu0 %v3664
      %v3872 = vpop.f32.mrf.mxu0
      %v3873 = vadd.f32 %v3505, %v3872
      %3874 = vmatmul.f32.gmra.mxu0 %v3667
      %v3875 = vpop.f32.mrf.mxu0
      %v3876 = vadd.f32 %v3505, %v3875
      %3877 = vmatmul.f32.gmra.mxu0 %v3670
      %v3878 = vpop.f32.mrf.mxu0
      %v3879 = vadd.f32 %v3505, %v3878
      %3880 = vmatmul.f32.gmra.mxu0 %v3673
      %v3881 = vpop.f32.mrf.mxu0
      %v3882 = vadd.f32 %v3505, %v3881
      %3883 = vmatmul.f32.gmra.mxu0 %v3676
      %v3884 = vpop.f32.mrf.mxu0
      %v3885 = vadd.f32 %v3505, %v3884
      %3886 = vmatmul.f32.gmra.mxu0 %v3679
      %v3887 = vpop.f32.mrf.mxu0
      %v3888 = vadd.f32 %v3505, %v3887
      %3889 = vmatmul.f32.gmra.mxu0 %v3682
      %v3890 = vpop.f32.mrf.mxu0
      %v3891 = vadd.f32 %v3505, %v3890
      %3892 = vmatmul.f32.gmra.mxu0 %v3685
      %v3893 = vpop.f32.mrf.mxu0
      %v3894 = vadd.f32 %v3505, %v3893
      %3895 = vmatmul.f32.gmra.mxu0 %v3688
      %v3896 = vpop.f32.mrf.mxu0
      %v3897 = vadd.f32 %v3505, %v3896
      %3898 = vmatmul.f32.gmra.mxu0 %v3691
      %v3899 = vpop.f32.mrf.mxu0
      %v3900 = vadd.f32 %v3505, %v3899
      %3901 = vmatmul.f32.gmra.mxu0 %v3694
      %v3902 = vpop.f32.mrf.mxu0
      %v3903 = vadd.f32 %v3505, %v3902
      %3904 = vmatmul.f32.gmra.mxu0 %v3697
      %v3905 = vpop.f32.mrf.mxu0
      %v3906 = vadd.f32 %v3505, %v3905
      %3907 = vdwg.mxu0
      %vm3908 = vcmp.gt.f32.partialorder %v3717, 0.0
      %vm3909 = vcmp.gt.f32.partialorder %v3720, 0.0
      %vm3910 = vcmp.gt.f32.partialorder %v3723, 0.0
      %vm3911 = vcmp.gt.f32.partialorder %v3726, 0.0
      %vm3912 = vcmp.gt.f32.partialorder %v3729, 0.0
      %vm3913 = vcmp.gt.f32.partialorder %v3732, 0.0
      %vm3914 = vcmp.gt.f32.partialorder %v3735, 0.0
      %vm3915 = vcmp.gt.f32.partialorder %v3738, 0.0
      %vm3916 = vcmp.gt.f32.partialorder %v3741, 0.0
      %vm3917 = vcmp.gt.f32.partialorder %v3744, 0.0
      %vm3918 = vcmp.gt.f32.partialorder %v3747, 0.0
      %vm3919 = vcmp.gt.f32.partialorder %v3750, 0.0
      %vm3920 = vcmp.gt.f32.partialorder %v3753, 0.0
      %vm3921 = vcmp.gt.f32.partialorder %v3756, 0.0
      %vm3922 = vcmp.gt.f32.partialorder %v3759, 0.0
      %vm3923 = vcmp.gt.f32.partialorder %v3762, 0.0
      %vm3924 = vcmp.gt.f32.partialorder %v3765, 0.0
      %vm3925 = vcmp.gt.f32.partialorder %v3768, 0.0
      %vm3926 = vcmp.gt.f32.partialorder %v3771, 0.0
      %vm3927 = vcmp.gt.f32.partialorder %v3774, 0.0
      %vm3928 = vcmp.gt.f32.partialorder %v3777, 0.0
      %vm3929 = vcmp.gt.f32.partialorder %v3780, 0.0
      %vm3930 = vcmp.gt.f32.partialorder %v3783, 0.0
      %vm3931 = vcmp.gt.f32.partialorder %v3786, 0.0
      %vm3932 = vcmp.gt.f32.partialorder %v3789, 0.0
      %vm3933 = vcmp.gt.f32.partialorder %v3792, 0.0
      %vm3934 = vcmp.gt.f32.partialorder %v3795, 0.0
      %vm3935 = vcmp.gt.f32.partialorder %v3798, 0.0
      %vm3936 = vcmp.gt.f32.partialorder %v3801, 0.0
      %vm3937 = vcmp.gt.f32.partialorder %v3804, 0.0
      %vm3938 = vcmp.gt.f32.partialorder %v3807, 0.0
      %vm3939 = vcmp.gt.f32.partialorder %v3810, 0.0
      %vm3940 = vcmp.gt.f32.partialorder %v3813, 0.0
      %vm3941 = vcmp.gt.f32.partialorder %v3816, 0.0
      %vm3942 = vcmp.gt.f32.partialorder %v3819, 0.0
      %vm3943 = vcmp.gt.f32.partialorder %v3822, 0.0
      %vm3944 = vcmp.gt.f32.partialorder %v3825, 0.0
      %vm3945 = vcmp.gt.f32.partialorder %v3828, 0.0
      %vm3946 = vcmp.gt.f32.partialorder %v3831, 0.0
      %vm3947 = vcmp.gt.f32.partialorder %v3834, 0.0
      %vm3948 = vcmp.gt.f32.partialorder %v3837, 0.0
      %vm3949 = vcmp.gt.f32.partialorder %v3840, 0.0
      %vm3950 = vcmp.gt.f32.partialorder %v3843, 0.0
      %vm3951 = vcmp.gt.f32.partialorder %v3846, 0.0
      %vm3952 = vcmp.gt.f32.partialorder %v3849, 0.0
      %vm3953 = vcmp.gt.f32.partialorder %v3852, 0.0
      %vm3954 = vcmp.gt.f32.partialorder %v3855, 0.0
      %vm3955 = vcmp.gt.f32.partialorder %v3858, 0.0
      %vm3956 = vcmp.gt.f32.partialorder %v3861, 0.0
      %vm3957 = vcmp.gt.f32.partialorder %v3864, 0.0
      %vm3958 = vcmp.gt.f32.partialorder %v3867, 0.0
      %vm3959 = vcmp.gt.f32.partialorder %v3870, 0.0
      %vm3960 = vcmp.gt.f32.partialorder %v3873, 0.0
      %vm3961 = vcmp.gt.f32.partialorder %v3876, 0.0
      %vm3962 = vcmp.gt.f32.partialorder %v3879, 0.0
      %vm3963 = vcmp.gt.f32.partialorder %v3882, 0.0
      %vm3964 = vcmp.gt.f32.partialorder %v3885, 0.0
      %vm3965 = vcmp.gt.f32.partialorder %v3888, 0.0
      %vm3966 = vcmp.gt.f32.partialorder %v3891, 0.0
      %vm3967 = vcmp.gt.f32.partialorder %v3894, 0.0
      %vm3968 = vcmp.gt.f32.partialorder %v3897, 0.0
      %vm3969 = vcmp.gt.f32.partialorder %v3900, 0.0
      %vm3970 = vcmp.gt.f32.partialorder %v3903, 0.0
      %vm3971 = vcmp.gt.f32.partialorder %v3906, 0.0
      %v3972 = vmul.f32 %v3717, 0.2
      %v3973 = vmul.f32 %v3720, 0.2
      %v3974 = vmul.f32 %v3723, 0.2
      %v3975 = vmul.f32 %v3726, 0.2
      %v3976 = vmul.f32 %v3729, 0.2
      %v3977 = vmul.f32 %v3732, 0.2
      %v3978 = vmul.f32 %v3735, 0.2
      %v3979 = vmul.f32 %v3738, 0.2
      %v3980 = vmul.f32 %v3741, 0.2
      %v3981 = vmul.f32 %v3744, 0.2
      %v3982 = vmul.f32 %v3747, 0.2
      %v3983 = vmul.f32 %v3750, 0.2
      %v3984 = vmul.f32 %v3753, 0.2
      %v3985 = vmul.f32 %v3756, 0.2
      %v3986 = vmul.f32 %v3759, 0.2
      %v3987 = vmul.f32 %v3762, 0.2
      %v3988 = vmul.f32 %v3765, 0.2
      %v3989 = vmul.f32 %v3768, 0.2
      %v3990 = vmul.f32 %v3771, 0.2
      %v3991 = vmul.f32 %v3774, 0.2
      %v3992 = vmul.f32 %v3777, 0.2
      %v3993 = vmul.f32 %v3780, 0.2
      %v3994 = vmul.f32 %v3783, 0.2
      %v3995 = vmul.f32 %v3786, 0.2
      %v3996 = vmul.f32 %v3789, 0.2
      %v3997 = vmul.f32 %v3792, 0.2
      %v3998 = vmul.f32 %v3795, 0.2
      %v3999 = vmul.f32 %v3798, 0.2
      %v4000 = vmul.f32 %v3801, 0.2
      %v4001 = vmul.f32 %v3804, 0.2
      %v4002 = vmul.f32 %v3807, 0.2
      %v4003 = vmul.f32 %v3810, 0.2
      %v4004 = vmul.f32 %v3813, 0.2
      %v4005 = vmul.f32 %v3816, 0.2
      %v4006 = vmul.f32 %v3819, 0.2
      %v4007 = vmul.f32 %v3822, 0.2
      %v4008 = vmul.f32 %v3825, 0.2
      %v4009 = vmul.f32 %v3828, 0.2
      %v4010 = vmul.f32 %v3831, 0.2
      %v4011 = vmul.f32 %v3834, 0.2
      %v4012 = vmul.f32 %v3837, 0.2
      %v4013 = vmul.f32 %v3840, 0.2
      %v4014 = vmul.f32 %v3843, 0.2
      %v4015 = vmul.f32 %v3846, 0.2
      %v4016 = vmul.f32 %v3849, 0.2
      %v4017 = vmul.f32 %v3852, 0.2
      %v4018 = vmul.f32 %v3855, 0.2
      %v4019 = vmul.f32 %v3858, 0.2
      %v4020 = vmul.f32 %v3861, 0.2
      %v4021 = vmul.f32 %v3864, 0.2
      %v4022 = vmul.f32 %v3867, 0.2
      %v4023 = vmul.f32 %v3870, 0.2
      %v4024 = vmul.f32 %v3873, 0.2
      %v4025 = vmul.f32 %v3876, 0.2
      %v4026 = vmul.f32 %v3879, 0.2
      %v4027 = vmul.f32 %v3882, 0.2
      %v4028 = vmul.f32 %v3885, 0.2
      %v4029 = vmul.f32 %v3888, 0.2
      %v4030 = vmul.f32 %v3891, 0.2
      %v4031 = vmul.f32 %v3894, 0.2
      %v4032 = vmul.f32 %v3897, 0.2
      %v4033 = vmul.f32 %v3900, 0.2
      %v4034 = vmul.f32 %v3903, 0.2
      %v4035 = vmul.f32 %v3906, 0.2
      %v4036 = vsel %vm3908, %v3717, %v3972
      %v4037 = vsel %vm3909, %v3720, %v3973
      %v4038 = vsel %vm3910, %v3723, %v3974
      %v4039 = vsel %vm3911, %v3726, %v3975
      %v4040 = vsel %vm3912, %v3729, %v3976
      %v4041 = vsel %vm3913, %v3732, %v3977
      %v4042 = vsel %vm3914, %v3735, %v3978
      %v4043 = vsel %vm3915, %v3738, %v3979
      %v4044 = vsel %vm3916, %v3741, %v3980
      %v4045 = vsel %vm3917, %v3744, %v3981
      %v4046 = vsel %vm3918, %v3747, %v3982
      %v4047 = vsel %vm3919, %v3750, %v3983
      %v4048 = vsel %vm3920, %v3753, %v3984
      %v4049 = vsel %vm3921, %v3756, %v3985
      %v4050 = vsel %vm3922, %v3759, %v3986
      %v4051 = vsel %vm3923, %v3762, %v3987
      %v4052 = vsel %vm3924, %v3765, %v3988
      %v4053 = vsel %vm3925, %v3768, %v3989
      %v4054 = vsel %vm3926, %v3771, %v3990
      %v4055 = vsel %vm3927, %v3774, %v3991
      %v4056 = vsel %vm3928, %v3777, %v3992
      %v4057 = vsel %vm3929, %v3780, %v3993
      %v4058 = vsel %vm3930, %v3783, %v3994
      %v4059 = vsel %vm3931, %v3786, %v3995
      %v4060 = vsel %vm3932, %v3789, %v3996
      %v4061 = vsel %vm3933, %v3792, %v3997
      %v4062 = vsel %vm3934, %v3795, %v3998
      %v4063 = vsel %vm3935, %v3798, %v3999
      %v4064 = vsel %vm3936, %v3801, %v4000
      %v4065 = vsel %vm3937, %v3804, %v4001
      %v4066 = vsel %vm3938, %v3807, %v4002
      %v4067 = vsel %vm3939, %v3810, %v4003
      %v4068 = vsel %vm3940, %v3813, %v4004
      %v4069 = vsel %vm3941, %v3816, %v4005
      %v4070 = vsel %vm3942, %v3819, %v4006
      %v4071 = vsel %vm3943, %v3822, %v4007
      %v4072 = vsel %vm3944, %v3825, %v4008
      %v4073 = vsel %vm3945, %v3828, %v4009
      %v4074 = vsel %vm3946, %v3831, %v4010
      %v4075 = vsel %vm3947, %v3834, %v4011
      %v4076 = vsel %vm3948, %v3837, %v4012
      %v4077 = vsel %vm3949, %v3840, %v4013
      %v4078 = vsel %vm3950, %v3843, %v4014
      %v4079 = vsel %vm3951, %v3846, %v4015
      %v4080 = vsel %vm3952, %v3849, %v4016
      %v4081 = vsel %vm3953, %v3852, %v4017
      %v4082 = vsel %vm3954, %v3855, %v4018
      %v4083 = vsel %vm3955, %v3858, %v4019
      %v4084 = vsel %vm3956, %v3861, %v4020
      %v4085 = vsel %vm3957, %v3864, %v4021
      %v4086 = vsel %vm3958, %v3867, %v4022
      %v4087 = vsel %vm3959, %v3870, %v4023
      %v4088 = vsel %vm3960, %v3873, %v4024
      %v4089 = vsel %vm3961, %v3876, %v4025
      %v4090 = vsel %vm3962, %v3879, %v4026
      %v4091 = vsel %vm3963, %v3882, %v4027
      %v4092 = vsel %vm3964, %v3885, %v4028
      %v4093 = vsel %vm3965, %v3888, %v4029
      %v4094 = vsel %vm3966, %v3891, %v4030
      %v4095 = vsel %vm3967, %v3894, %v4031
      %v4096 = vsel %vm3968, %v3897, %v4032
      %v4097 = vsel %vm3969, %v3900, %v4033
      %v4098 = vsel %vm3970, %v3903, %v4034
      %v4099 = vsel %vm3971, %v3906, %v4035
      %v4100 = vld [vmem:[%s14] sm:$0xff]
      %v4101 = vld [vmem:[%s14 + $0x8] sm:$0xff]
      %v4102 = vld [vmem:[%s14 + $0x10] sm:$0xff]
      %v4103 = vld [vmem:[%s14 + $0x18] sm:$0xff]
      %v4104 = vld [vmem:[%s14 + $0x20] sm:$0xff]
      %v4105 = vld [vmem:[%s14 + $0x28] sm:$0xff]
      %v4106 = vld [vmem:[%s14 + $0x30] sm:$0xff]
      %v4107 = vld [vmem:[%s14 + $0x38] sm:$0xff]
      %v4108 = vld [vmem:[%s14 + $0x40] sm:$0xff]
      %v4109 = vld [vmem:[%s14 + $0x48] sm:$0xff]
      %v4110 = vld [vmem:[%s14 + $0x50] sm:$0xff]
      %v4111 = vld [vmem:[%s14 + $0x58] sm:$0xff]
      %v4112 = vld [vmem:[%s14 + $0x60] sm:$0xff]
      %v4113 = vld [vmem:[%s14 + $0x68] sm:$0xff]
      %v4114 = vld [vmem:[%s14 + $0x70] sm:$0xff]
      %v4115 = vld [vmem:[%s14 + $0x78] sm:$0xff]
      %v4116 = vld [vmem:[%s15] sm:$0x1]
      %v4118 = vperm.slane %v4116, 0
      %4120 = vmatpush.msra.mxu0 %v4115
      %4121 = vmatpush.msra.mxu0 %v4114
      %4122 = vmatpush.msra.mxu0 %v4113
      %4123 = vmatpush.msra.mxu0 %v4112
      %4124 = vmatpush.msra.mxu0 %v4111
      %4125 = vmatpush.msra.mxu0 %v4110
      %4126 = vmatpush.msra.mxu0 %v4109
      %4127 = vmatpush.msra.mxu0 %v4108
      %4128 = vmatpush.msra.mxu0 %v4107
      %4129 = vmatpush.msra.mxu0 %v4106
      %4130 = vmatpush.msra.mxu0 %v4105
      %4131 = vmatpush.msra.mxu0 %v4104
      %4132 = vmatpush.msra.mxu0 %v4103
      %4133 = vmatpush.msra.mxu0 %v4102
      %4134 = vmatpush.msra.mxu0 %v4101
      %4135 = vmatpush.msra.mxu0 %v4100
      %4136 = vmatmul.f32.gmra.mxu0 %v4036
      %v4137 = vpop.f32.mrf.mxu0
      %v4138 = vadd.f32 %v4118, %v4137
      %4139 = vmatmul.f32.gmra.mxu0 %v4037
      %v4140 = vpop.f32.mrf.mxu0
      %v4141 = vadd.f32 %v4118, %v4140
      %4142 = vmatmul.f32.gmra.mxu0 %v4038
      %v4143 = vpop.f32.mrf.mxu0
      %v4144 = vadd.f32 %v4118, %v4143
      %4145 = vmatmul.f32.gmra.mxu0 %v4039
      %v4146 = vpop.f32.mrf.mxu0
      %v4147 = vadd.f32 %v4118, %v4146
      %4148 = vmatmul.f32.gmra.mxu0 %v4040
      %v4149 = vpop.f32.mrf.mxu0
      %v4150 = vadd.f32 %v4118, %v4149
      %4151 = vmatmul.f32.gmra.mxu0 %v4041
      %v4152 = vpop.f32.mrf.mxu0
      %v4153 = vadd.f32 %v4118, %v4152
      %4154 = vmatmul.f32.gmra.mxu0 %v4042
      %v4155 = vpop.f32.mrf.mxu0
      %v4156 = vadd.f32 %v4118, %v4155
      %4157 = vmatmul.f32.gmra.mxu0 %v4043
      %v4158 = vpop.f32.mrf.mxu0
      %v4159 = vadd.f32 %v4118, %v4158
      %4160 = vmatmul.f32.gmra.mxu0 %v4044
      %v4161 = vpop.f32.mrf.mxu0
      %v4162 = vadd.f32 %v4118, %v4161
      %4163 = vmatmul.f32.gmra.mxu0 %v4045
      %v4164 = vpop.f32.mrf.mxu0
      %v4165 = vadd.f32 %v4118, %v4164
      %4166 = vmatmul.f32.gmra.mxu0 %v4046
      %v4167 = vpop.f32.mrf.mxu0
      %v4168 = vadd.f32 %v4118, %v4167
      %4169 = vmatmul.f32.gmra.mxu0 %v4047
      %v4170 = vpop.f32.mrf.mxu0
      %v4171 = vadd.f32 %v4118, %v4170
      %4172 = vmatmul.f32.gmra.mxu0 %v4048
      %v4173 = vpop.f32.mrf.mxu0
      %v4174 = vadd.f32 %v4118, %v4173
      %4175 = vmatmul.f32.gmra.mxu0 %v4049
      %v4176 = vpop.f32.mrf.mxu0
      %v4177 = vadd.f32 %v4118, %v4176
      %4178 = vmatmul.f32.gmra.mxu0 %v4050
      %v4179 = vpop.f32.mrf.mxu0
      %v4180 = vadd.f32 %v4118, %v4179
      %4181 = vmatmul.f32.gmra.mxu0 %v4051
      %v4182 = vpop.f32.mrf.mxu0
      %v4183 = vadd.f32 %v4118, %v4182
      %4184 = vmatmul.f32.gmra.mxu0 %v4052
      %v4185 = vpop.f32.mrf.mxu0
      %v4186 = vadd.f32 %v4118, %v4185
      %4187 = vmatmul.f32.gmra.mxu0 %v4053
      %v4188 = vpop.f32.mrf.mxu0
      %v4189 = vadd.f32 %v4118, %v4188
      %4190 = vmatmul.f32.gmra.mxu0 %v4054
      %v4191 = vpop.f32.mrf.mxu0
      %v4192 = vadd.f32 %v4118, %v4191
      %4193 = vmatmul.f32.gmra.mxu0 %v4055
      %v4194 = vpop.f32.mrf.mxu0
      %v4195 = vadd.f32 %v4118, %v4194
      %4196 = vmatmul.f32.gmra.mxu0 %v4056
      %v4197 = vpop.f32.mrf.mxu0
      %v4198 = vadd.f32 %v4118, %v4197
      %4199 = vmatmul.f32.gmra.mxu0 %v4057
      %v4200 = vpop.f32.mrf.mxu0
      %v4201 = vadd.f32 %v4118, %v4200
      %4202 = vmatmul.f32.gmra.mxu0 %v4058
      %v4203 = vpop.f32.mrf.mxu0
      %v4204 = vadd.f32 %v4118, %v4203
      %4205 = vmatmul.f32.gmra.mxu0 %v4059
      %v4206 = vpop.f32.mrf.mxu0
      %v4207 = vadd.f32 %v4118, %v4206
      %4208 = vmatmul.f32.gmra.mxu0 %v4060
      %v4209 = vpop.f32.mrf.mxu0
      %v4210 = vadd.f32 %v4118, %v4209
      %4211 = vmatmul.f32.gmra.mxu0 %v4061
      %v4212 = vpop.f32.mrf.mxu0
      %v4213 = vadd.f32 %v4118, %v4212
      %4214 = vmatmul.f32.gmra.mxu0 %v4062
      %v4215 = vpop.f32.mrf.mxu0
      %v4216 = vadd.f32 %v4118, %v4215
      %4217 = vmatmul.f32.gmra.mxu0 %v4063
      %v4218 = vpop.f32.mrf.mxu0
      %v4219 = vadd.f32 %v4118, %v4218
      %4220 = vmatmul.f32.gmra.mxu0 %v4064
      %v4221 = vpop.f32.mrf.mxu0
      %v4222 = vadd.f32 %v4118, %v4221
      %4223 = vmatmul.f32.gmra.mxu0 %v4065
      %v4224 = vpop.f32.mrf.mxu0
      %v4225 = vadd.f32 %v4118, %v4224
      %4226 = vmatmul.f32.gmra.mxu0 %v4066
      %v4227 = vpop.f32.mrf.mxu0
      %v4228 = vadd.f32 %v4118, %v4227
      %4229 = vmatmul.f32.gmra.mxu0 %v4067
      %v4230 = vpop.f32.mrf.mxu0
      %v4231 = vadd.f32 %v4118, %v4230
      %4232 = vmatmul.f32.gmra.mxu0 %v4068
      %v4233 = vpop.f32.mrf.mxu0
      %v4234 = vadd.f32 %v4118, %v4233
      %4235 = vmatmul.f32.gmra.mxu0 %v4069
      %v4236 = vpop.f32.mrf.mxu0
      %v4237 = vadd.f32 %v4118, %v4236
      %4238 = vmatmul.f32.gmra.mxu0 %v4070
      %v4239 = vpop.f32.mrf.mxu0
      %v4240 = vadd.f32 %v4118, %v4239
      %4241 = vmatmul.f32.gmra.mxu0 %v4071
      %v4242 = vpop.f32.mrf.mxu0
      %v4243 = vadd.f32 %v4118, %v4242
      %4244 = vmatmul.f32.gmra.mxu0 %v4072
      %v4245 = vpop.f32.mrf.mxu0
      %v4246 = vadd.f32 %v4118, %v4245
      %4247 = vmatmul.f32.gmra.mxu0 %v4073
      %v4248 = vpop.f32.mrf.mxu0
      %v4249 = vadd.f32 %v4118, %v4248
      %4250 = vmatmul.f32.gmra.mxu0 %v4074
      %v4251 = vpop.f32.mrf.mxu0
      %v4252 = vadd.f32 %v4118, %v4251
      %4253 = vmatmul.f32.gmra.mxu0 %v4075
      %v4254 = vpop.f32.mrf.mxu0
      %v4255 = vadd.f32 %v4118, %v4254
      %4256 = vmatmul.f32.gmra.mxu0 %v4076
      %v4257 = vpop.f32.mrf.mxu0
      %v4258 = vadd.f32 %v4118, %v4257
      %4259 = vmatmul.f32.gmra.mxu0 %v4077
      %v4260 = vpop.f32.mrf.mxu0
      %v4261 = vadd.f32 %v4118, %v4260
      %4262 = vmatmul.f32.gmra.mxu0 %v4078
      %v4263 = vpop.f32.mrf.mxu0
      %v4264 = vadd.f32 %v4118, %v4263
      %4265 = vmatmul.f32.gmra.mxu0 %v4079
      %v4266 = vpop.f32.mrf.mxu0
      %v4267 = vadd.f32 %v4118, %v4266
      %4268 = vmatmul.f32.gmra.mxu0 %v4080
      %v4269 = vpop.f32.mrf.mxu0
      %v4270 = vadd.f32 %v4118, %v4269
      %4271 = vmatmul.f32.gmra.mxu0 %v4081
      %v4272 = vpop.f32.mrf.mxu0
      %v4273 = vadd.f32 %v4118, %v4272
      %4274 = vmatmul.f32.gmra.mxu0 %v4082
      %v4275 = vpop.f32.mrf.mxu0
      %v4276 = vadd.f32 %v4118, %v4275
      %4277 = vmatmul.f32.gmra.mxu0 %v4083
      %v4278 = vpop.f32.mrf.mxu0
      %v4279 = vadd.f32 %v4118, %v4278
      %4280 = vmatmul.f32.gmra.mxu0 %v4084
      %v4281 = vpop.f32.mrf.mxu0
      %v4282 = vadd.f32 %v4118, %v4281
      %4283 = vmatmul.f32.gmra.mxu0 %v4085
      %v4284 = vpop.f32.mrf.mxu0
      %v4285 = vadd.f32 %v4118, %v4284
      %4286 = vmatmul.f32.gmra.mxu0 %v4086
      %v4287 = vpop.f32.mrf.mxu0
      %v4288 = vadd.f32 %v4118, %v4287
      %4289 = vmatmul.f32.gmra.mxu0 %v4087
      %v4290 = vpop.f32.mrf.mxu0
      %v4291 = vadd.f32 %v4118, %v4290
      %4292 = vmatmul.f32.gmra.mxu0 %v4088
      %v4293 = vpop.f32.mrf.mxu0
      %v4294 = vadd.f32 %v4118, %v4293
      %4295 = vmatmul.f32.gmra.mxu0 %v4089
      %v4296 = vpop.f32.mrf.mxu0
      %v4297 = vadd.f32 %v4118, %v4296
      %4298 = vmatmul.f32.gmra.mxu0 %v4090
      %v4299 = vpop.f32.mrf.mxu0
      %v4300 = vadd.f32 %v4118, %v4299
      %4301 = vmatmul.f32.gmra.mxu0 %v4091
      %v4302 = vpop.f32.mrf.mxu0
      %v4303 = vadd.f32 %v4118, %v4302
      %4304 = vmatmul.f32.gmra.mxu0 %v4092
      %v4305 = vpop.f32.mrf.mxu0
      %v4306 = vadd.f32 %v4118, %v4305
      %4307 = vmatmul.f32.gmra.mxu0 %v4093
      %v4308 = vpop.f32.mrf.mxu0
      %v4309 = vadd.f32 %v4118, %v4308
      %4310 = vmatmul.f32.gmra.mxu0 %v4094
      %v4311 = vpop.f32.mrf.mxu0
      %v4312 = vadd.f32 %v4118, %v4311
      %4313 = vmatmul.f32.gmra.mxu0 %v4095
      %v4314 = vpop.f32.mrf.mxu0
      %v4315 = vadd.f32 %v4118, %v4314
      %4316 = vmatmul.f32.gmra.mxu0 %v4096
      %v4317 = vpop.f32.mrf.mxu0
      %v4318 = vadd.f32 %v4118, %v4317
      %4319 = vmatmul.f32.gmra.mxu0 %v4097
      %v4320 = vpop.f32.mrf.mxu0
      %v4321 = vadd.f32 %v4118, %v4320
      %4322 = vmatmul.f32.gmra.mxu0 %v4098
      %v4323 = vpop.f32.mrf.mxu0
      %v4324 = vadd.f32 %v4118, %v4323
      %4325 = vmatmul.f32.gmra.mxu0 %v4099
      %v4326 = vpop.f32.mrf.mxu0
      %v4327 = vadd.f32 %v4118, %v4326
      %4328 = vdwg.mxu0
      %4329 = vst.msk [vmem:[%s614] sm:$0xff] %vm865, %v4138
      %4330 = vst.msk [vmem:[%s614 + $0x8] sm:$0xff] %vm865, %v4141
      %4331 = vst.msk [vmem:[%s614 + $0x10] sm:$0xff] %vm865, %v4144
      %4332 = vst.msk [vmem:[%s614 + $0x18] sm:$0xff] %vm865, %v4147
      %4333 = vst.msk [vmem:[%s614 + $0x20] sm:$0xff] %vm865, %v4150
      %4334 = vst.msk [vmem:[%s614 + $0x28] sm:$0xff] %vm865, %v4153
      %4335 = vst.msk [vmem:[%s614 + $0x30] sm:$0xff] %vm865, %v4156
      %4336 = vst.msk [vmem:[%s614 + $0x38] sm:$0xff] %vm865, %v4159
      %4337 = vst.msk [vmem:[%s614 + $0x40] sm:$0xff] %vm865, %v4162
      %4338 = vst.msk [vmem:[%s614 + $0x48] sm:$0xff] %vm865, %v4165
      %4339 = vst.msk [vmem:[%s614 + $0x50] sm:$0xff] %vm865, %v4168
      %4340 = vst.msk [vmem:[%s614 + $0x58] sm:$0xff] %vm865, %v4171
      %4341 = vst.msk [vmem:[%s614 + $0x60] sm:$0xff] %vm865, %v4174
      %4342 = vst.msk [vmem:[%s614 + $0x68] sm:$0xff] %vm865, %v4177
      %4343 = vst.msk [vmem:[%s614 + $0x70] sm:$0xff] %vm865, %v4180
      %4344 = vst.msk [vmem:[%s614 + $0x78] sm:$0xff] %vm865, %v4183
      %4345 = vst.msk [vmem:[%s614 + $0x80] sm:$0xff] %vm865, %v4186
      %4346 = vst.msk [vmem:[%s614 + $0x88] sm:$0xff] %vm865, %v4189
      %4347 = vst.msk [vmem:[%s614 + $0x90] sm:$0xff] %vm865, %v4192
      %4348 = vst.msk [vmem:[%s614 + $0x98] sm:$0xff] %vm865, %v4195
      %4349 = vst.msk [vmem:[%s614 + $0xa0] sm:$0xff] %vm865, %v4198
      %4350 = vst.msk [vmem:[%s614 + $0xa8] sm:$0xff] %vm865, %v4201
      %4351 = vst.msk [vmem:[%s614 + $0xb0] sm:$0xff] %vm865, %v4204
      %4352 = vst.msk [vmem:[%s614 + $0xb8] sm:$0xff] %vm865, %v4207
      %4353 = vst.msk [vmem:[%s614 + $0xc0] sm:$0xff] %vm865, %v4210
      %4354 = vst.msk [vmem:[%s614 + $0xc8] sm:$0xff] %vm865, %v4213
      %4355 = vst.msk [vmem:[%s614 + $0xd0] sm:$0xff] %vm865, %v4216
      %4356 = vst.msk [vmem:[%s614 + $0xd8] sm:$0xff] %vm865, %v4219
      %4357 = vst.msk [vmem:[%s614 + $0xe0] sm:$0xff] %vm865, %v4222
      %4358 = vst.msk [vmem:[%s614 + $0xe8] sm:$0xff] %vm865, %v4225
      %4359 = vst.msk [vmem:[%s614 + $0xf0] sm:$0xff] %vm865, %v4228
      %4360 = vst.msk [vmem:[%s614 + $0xf8] sm:$0xff] %vm865, %v4231
      %4361 = vst.msk [vmem:[%s614 + $0x100] sm:$0xff] %vm865, %v4234
      %4362 = vst.msk [vmem:[%s614 + $0x108] sm:$0xff] %vm865, %v4237
      %4363 = vst.msk [vmem:[%s614 + $0x110] sm:$0xff] %vm865, %v4240
      %4364 = vst.msk [vmem:[%s614 + $0x118] sm:$0xff] %vm865, %v4243
      %4365 = vst.msk [vmem:[%s614 + $0x120] sm:$0xff] %vm865, %v4246
      %4366 = vst.msk [vmem:[%s614 + $0x128] sm:$0xff] %vm865, %v4249
      %4367 = vst.msk [vmem:[%s614 + $0x130] sm:$0xff] %vm865, %v4252
      %4368 = vst.msk [vmem:[%s614 + $0x138] sm:$0xff] %vm865, %v4255
      %4369 = vst.msk [vmem:[%s614 + $0x140] sm:$0xff] %vm865, %v4258
      %4370 = vst.msk [vmem:[%s614 + $0x148] sm:$0xff] %vm865, %v4261
      %4371 = vst.msk [vmem:[%s614 + $0x150] sm:$0xff] %vm865, %v4264
      %4372 = vst.msk [vmem:[%s614 + $0x158] sm:$0xff] %vm865, %v4267
      %4373 = vst.msk [vmem:[%s614 + $0x160] sm:$0xff] %vm865, %v4270
      %4374 = vst.msk [vmem:[%s614 + $0x168] sm:$0xff] %vm865, %v4273
      %4375 = vst.msk [vmem:[%s614 + $0x170] sm:$0xff] %vm865, %v4276
      %4376 = vst.msk [vmem:[%s614 + $0x178] sm:$0xff] %vm865, %v4279
      %4377 = vst.msk [vmem:[%s614 + $0x180] sm:$0xff] %vm865, %v4282
      %4378 = vst.msk [vmem:[%s614 + $0x188] sm:$0xff] %vm865, %v4285
      %4379 = vst.msk [vmem:[%s614 + $0x190] sm:$0xff] %vm865, %v4288
      %4380 = vst.msk [vmem:[%s614 + $0x198] sm:$0xff] %vm865, %v4291
      %4381 = vst.msk [vmem:[%s614 + $0x1a0] sm:$0xff] %vm865, %v4294
      %4382 = vst.msk [vmem:[%s614 + $0x1a8] sm:$0xff] %vm865, %v4297
      %4383 = vst.msk [vmem:[%s614 + $0x1b0] sm:$0xff] %vm865, %v4300
      %4384 = vst.msk [vmem:[%s614 + $0x1b8] sm:$0xff] %vm865, %v4303
      %4385 = vst.msk [vmem:[%s614 + $0x1c0] sm:$0xff] %vm865, %v4306
      %4386 = vst.msk [vmem:[%s614 + $0x1c8] sm:$0xff] %vm865, %v4309
      %4387 = vst.msk [vmem:[%s614 + $0x1d0] sm:$0xff] %vm865, %v4312
      %4388 = vst.msk [vmem:[%s614 + $0x1d8] sm:$0xff] %vm865, %v4315
      %4389 = vst.msk [vmem:[%s614 + $0x1e0] sm:$0xff] %vm865, %v4318
      %4390 = vst.msk [vmem:[%s614 + $0x1e8] sm:$0xff] %vm865, %v4321
      %4391 = vst.msk [vmem:[%s614 + $0x1f0] sm:$0xff] %vm865, %v4324
      %4392 = vst.msk [vmem:[%s614 + $0x1f8] sm:$0xff] %vm865, %v4327
      %4393 = vst.msk [vmem:[%s620] sm:$0xff] %vm2897, %v1967
      %4394 = vst.msk [vmem:[%s620 + $0x8] sm:$0xff] %vm2897, %v1970
      %4395 = vst.msk [vmem:[%s620 + $0x10] sm:$0xff] %vm2897, %v1973
      %4396 = vst.msk [vmem:[%s620 + $0x18] sm:$0xff] %vm2897, %v1976
      %4397 = vst.msk [vmem:[%s620 + $0x20] sm:$0xff] %vm2897, %v1979
      %4398 = vst.msk [vmem:[%s620 + $0x28] sm:$0xff] %vm2897, %v1982
      %4399 = vst.msk [vmem:[%s620 + $0x30] sm:$0xff] %vm2897, %v1985
      %4400 = vst.msk [vmem:[%s620 + $0x38] sm:$0xff] %vm2897, %v1988
      %4401 = vst.msk [vmem:[%s620 + $0x40] sm:$0xff] %vm2897, %v1991
      %4402 = vst.msk [vmem:[%s620 + $0x48] sm:$0xff] %vm2897, %v1994
      %4403 = vst.msk [vmem:[%s620 + $0x50] sm:$0xff] %vm2897, %v1997
      %4404 = vst.msk [vmem:[%s620 + $0x58] sm:$0xff] %vm2897, %v2000
      %4405 = vst.msk [vmem:[%s620 + $0x60] sm:$0xff] %vm2897, %v2003
      %4406 = vst.msk [vmem:[%s620 + $0x68] sm:$0xff] %vm2897, %v2006
      %4407 = vst.msk [vmem:[%s620 + $0x70] sm:$0xff] %vm2897, %v2009
      %4408 = vst.msk [vmem:[%s620 + $0x78] sm:$0xff] %vm2897, %v2012
      %4409 = vst.msk [vmem:[%s620 + $0x80] sm:$0xff] %vm2897, %v2015
      %4410 = vst.msk [vmem:[%s620 + $0x88] sm:$0xff] %vm2897, %v2018
      %4411 = vst.msk [vmem:[%s620 + $0x90] sm:$0xff] %vm2897, %v2021
      %4412 = vst.msk [vmem:[%s620 + $0x98] sm:$0xff] %vm2897, %v2024
      %4413 = vst.msk [vmem:[%s620 + $0xa0] sm:$0xff] %vm2897, %v2027
      %4414 = vst.msk [vmem:[%s620 + $0xa8] sm:$0xff] %vm2897, %v2030
      %4415 = vst.msk [vmem:[%s620 + $0xb0] sm:$0xff] %vm2897, %v2033
      %4416 = vst.msk [vmem:[%s620 + $0xb8] sm:$0xff] %vm2897, %v2036
      %4417 = vst.msk [vmem:[%s620 + $0xc0] sm:$0xff] %vm2897, %v2039
      %4418 = vst.msk [vmem:[%s620 + $0xc8] sm:$0xff] %vm2897, %v2042
      %4419 = vst.msk [vmem:[%s620 + $0xd0] sm:$0xff] %vm2897, %v2045
      %4420 = vst.msk [vmem:[%s620 + $0xd8] sm:$0xff] %vm2897, %v2048
      %4421 = vst.msk [vmem:[%s620 + $0xe0] sm:$0xff] %vm2897, %v2051
      %4422 = vst.msk [vmem:[%s620 + $0xe8] sm:$0xff] %vm2897, %v2054
      %4423 = vst.msk [vmem:[%s620 + $0xf0] sm:$0xff] %vm2897, %v2057
      %4424 = vst.msk [vmem:[%s620 + $0xf8] sm:$0xff] %vm2897, %v2060
      %4425 = vst.msk [vmem:[%s620 + $0x100] sm:$0xff] %vm2897, %v2063
      %4426 = vst.msk [vmem:[%s620 + $0x108] sm:$0xff] %vm2897, %v2066
      %4427 = vst.msk [vmem:[%s620 + $0x110] sm:$0xff] %vm2897, %v2069
      %4428 = vst.msk [vmem:[%s620 + $0x118] sm:$0xff] %vm2897, %v2072
      %4429 = vst.msk [vmem:[%s620 + $0x120] sm:$0xff] %vm2897, %v2075
      %4430 = vst.msk [vmem:[%s620 + $0x128] sm:$0xff] %vm2897, %v2078
      %4431 = vst.msk [vmem:[%s620 + $0x130] sm:$0xff] %vm2897, %v2081
      %4432 = vst.msk [vmem:[%s620 + $0x138] sm:$0xff] %vm2897, %v2084
      %4433 = vst.msk [vmem:[%s620 + $0x140] sm:$0xff] %vm2897, %v2087
      %4434 = vst.msk [vmem:[%s620 + $0x148] sm:$0xff] %vm2897, %v2090
      %4435 = vst.msk [vmem:[%s620 + $0x150] sm:$0xff] %vm2897, %v2093
      %4436 = vst.msk [vmem:[%s620 + $0x158] sm:$0xff] %vm2897, %v2096
      %4437 = vst.msk [vmem:[%s620 + $0x160] sm:$0xff] %vm2897, %v2099
      %4438 = vst.msk [vmem:[%s620 + $0x168] sm:$0xff] %vm2897, %v2102
      %4439 = vst.msk [vmem:[%s620 + $0x170] sm:$0xff] %vm2897, %v2105
      %4440 = vst.msk [vmem:[%s620 + $0x178] sm:$0xff] %vm2897, %v2108
      %4441 = vst.msk [vmem:[%s620 + $0x180] sm:$0xff] %vm2897, %v2111
      %4442 = vst.msk [vmem:[%s620 + $0x188] sm:$0xff] %vm2897, %v2114
      %4443 = vst.msk [vmem:[%s620 + $0x190] sm:$0xff] %vm2897, %v2117
      %4444 = vst.msk [vmem:[%s620 + $0x198] sm:$0xff] %vm2897, %v2120
      %4445 = vst.msk [vmem:[%s620 + $0x1a0] sm:$0xff] %vm2897, %v2123
      %4446 = vst.msk [vmem:[%s620 + $0x1a8] sm:$0xff] %vm2897, %v2126
      %4447 = vst.msk [vmem:[%s620 + $0x1b0] sm:$0xff] %vm2897, %v2129
      %4448 = vst.msk [vmem:[%s620 + $0x1b8] sm:$0xff] %vm2897, %v2132
      %4449 = vst.msk [vmem:[%s620 + $0x1c0] sm:$0xff] %vm2897, %v2135
      %4450 = vst.msk [vmem:[%s620 + $0x1c8] sm:$0xff] %vm2897, %v2138
      %4451 = vst.msk [vmem:[%s620 + $0x1d0] sm:$0xff] %vm2897, %v2141
      %4452 = vst.msk [vmem:[%s620 + $0x1d8] sm:$0xff] %vm2897, %v2144
      %4453 = vst.msk [vmem:[%s620 + $0x1e0] sm:$0xff] %vm2897, %v2147
      %4454 = vst.msk [vmem:[%s620 + $0x1e8] sm:$0xff] %vm2897, %v2150
      %4455 = vst.msk [vmem:[%s620 + $0x1f0] sm:$0xff] %vm2897, %v2153
      %4456 = vst.msk [vmem:[%s620 + $0x1f8] sm:$0xff] %vm2897, %v2156
      %4457 = vst.msk [vmem:[%s626] sm:$0xff] %vm2897, %v2443
      %4458 = vst.msk [vmem:[%s626 + $0x8] sm:$0xff] %vm2897, %v2444
      %4459 = vst.msk [vmem:[%s626 + $0x10] sm:$0xff] %vm2897, %v2445
      %4460 = vst.msk [vmem:[%s626 + $0x18] sm:$0xff] %vm2897, %v2446
      %4461 = vst.msk [vmem:[%s626 + $0x20] sm:$0xff] %vm2897, %v2447
      %4462 = vst.msk [vmem:[%s626 + $0x28] sm:$0xff] %vm2897, %v2448
      %4463 = vst.msk [vmem:[%s626 + $0x30] sm:$0xff] %vm2897, %v2449
      %4464 = vst.msk [vmem:[%s626 + $0x38] sm:$0xff] %vm2897, %v2450
      %4465 = vst.msk [vmem:[%s626 + $0x40] sm:$0xff] %vm2897, %v2451
      %4466 = vst.msk [vmem:[%s626 + $0x48] sm:$0xff] %vm2897, %v2452
      %4467 = vst.msk [vmem:[%s626 + $0x50] sm:$0xff] %vm2897, %v2453
      %4468 = vst.msk [vmem:[%s626 + $0x58] sm:$0xff] %vm2897, %v2454
      %4469 = vst.msk [vmem:[%s626 + $0x60] sm:$0xff] %vm2897, %v2455
      %4470 = vst.msk [vmem:[%s626 + $0x68] sm:$0xff] %vm2897, %v2456
      %4471 = vst.msk [vmem:[%s626 + $0x70] sm:$0xff] %vm2897, %v2457
      %4472 = vst.msk [vmem:[%s626 + $0x78] sm:$0xff] %vm2897, %v2458
      %4473 = vst.msk [vmem:[%s626 + $0x80] sm:$0xff] %vm2897, %v2459
      %4474 = vst.msk [vmem:[%s626 + $0x88] sm:$0xff] %vm2897, %v2460
      %4475 = vst.msk [vmem:[%s626 + $0x90] sm:$0xff] %vm2897, %v2461
      %4476 = vst.msk [vmem:[%s626 + $0x98] sm:$0xff] %vm2897, %v2462
      %4477 = vst.msk [vmem:[%s626 + $0xa0] sm:$0xff] %vm2897, %v2463
      %4478 = vst.msk [vmem:[%s626 + $0xa8] sm:$0xff] %vm2897, %v2464
      %4479 = vst.msk [vmem:[%s626 + $0xb0] sm:$0xff] %vm2897, %v2465
      %4480 = vst.msk [vmem:[%s626 + $0xb8] sm:$0xff] %vm2897, %v2466
      %4481 = vst.msk [vmem:[%s626 + $0xc0] sm:$0xff] %vm2897, %v2467
      %4482 = vst.msk [vmem:[%s626 + $0xc8] sm:$0xff] %vm2897, %v2468
      %4483 = vst.msk [vmem:[%s626 + $0xd0] sm:$0xff] %vm2897, %v2469
      %4484 = vst.msk [vmem:[%s626 + $0xd8] sm:$0xff] %vm2897, %v2470
      %4485 = vst.msk [vmem:[%s626 + $0xe0] sm:$0xff] %vm2897, %v2471
      %4486 = vst.msk [vmem:[%s626 + $0xe8] sm:$0xff] %vm2897, %v2472
      %4487 = vst.msk [vmem:[%s626 + $0xf0] sm:$0xff] %vm2897, %v2473
      %4488 = vst.msk [vmem:[%s626 + $0xf8] sm:$0xff] %vm2897, %v2474
      %4489 = vst.msk [vmem:[%s626 + $0x100] sm:$0xff] %vm2897, %v2475
      %4490 = vst.msk [vmem:[%s626 + $0x108] sm:$0xff] %vm2897, %v2476
      %4491 = vst.msk [vmem:[%s626 + $0x110] sm:$0xff] %vm2897, %v2477
      %4492 = vst.msk [vmem:[%s626 + $0x118] sm:$0xff] %vm2897, %v2478
      %4493 = vst.msk [vmem:[%s626 + $0x120] sm:$0xff] %vm2897, %v2479
      %4494 = vst.msk [vmem:[%s626 + $0x128] sm:$0xff] %vm2897, %v2480
      %4495 = vst.msk [vmem:[%s626 + $0x130] sm:$0xff] %vm2897, %v2481
      %4496 = vst.msk [vmem:[%s626 + $0x138] sm:$0xff] %vm2897, %v2482
      %4497 = vst.msk [vmem:[%s626 + $0x140] sm:$0xff] %vm2897, %v2483
      %4498 = vst.msk [vmem:[%s626 + $0x148] sm:$0xff] %vm2897, %v2484
      %4499 = vst.msk [vmem:[%s626 + $0x150] sm:$0xff] %vm2897, %v2485
      %4500 = vst.msk [vmem:[%s626 + $0x158] sm:$0xff] %vm2897, %v2486
      %4501 = vst.msk [vmem:[%s626 + $0x160] sm:$0xff] %vm2897, %v2487
      %4502 = vst.msk [vmem:[%s626 + $0x168] sm:$0xff] %vm2897, %v2488
      %4503 = vst.msk [vmem:[%s626 + $0x170] sm:$0xff] %vm2897, %v2489
      %4504 = vst.msk [vmem:[%s626 + $0x178] sm:$0xff] %vm2897, %v2490
      %4505 = vst.msk [vmem:[%s626 + $0x180] sm:$0xff] %vm2897, %v2491
      %4506 = vst.msk [vmem:[%s626 + $0x188] sm:$0xff] %vm2897, %v2492
      %4507 = vst.msk [vmem:[%s626 + $0x190] sm:$0xff] %vm2897, %v2493
      %4508 = vst.msk [vmem:[%s626 + $0x198] sm:$0xff] %vm2897, %v2494
      %4509 = vst.msk [vmem:[%s626 + $0x1a0] sm:$0xff] %vm2897, %v2495
      %4510 = vst.msk [vmem:[%s626 + $0x1a8] sm:$0xff] %vm2897, %v2496
      %4511 = vst.msk [vmem:[%s626 + $0x1b0] sm:$0xff] %vm2897, %v2497
      %4512 = vst.msk [vmem:[%s626 + $0x1b8] sm:$0xff] %vm2897, %v2498
      %4513 = vst.msk [vmem:[%s626 + $0x1c0] sm:$0xff] %vm2897, %v2499
      %4514 = vst.msk [vmem:[%s626 + $0x1c8] sm:$0xff] %vm2897, %v2500
      %4515 = vst.msk [vmem:[%s626 + $0x1d0] sm:$0xff] %vm2897, %v2501
      %4516 = vst.msk [vmem:[%s626 + $0x1d8] sm:$0xff] %vm2897, %v2502
      %4517 = vst.msk [vmem:[%s626 + $0x1e0] sm:$0xff] %vm2897, %v2503
      %4518 = vst.msk [vmem:[%s626 + $0x1e8] sm:$0xff] %vm2897, %v2504
      %4519 = vst.msk [vmem:[%s626 + $0x1f0] sm:$0xff] %vm2897, %v2505
      %4520 = vst.msk [vmem:[%s626 + $0x1f8] sm:$0xff] %vm2897, %v2506
      %s4521 = smul.u32 64, %s30
      %p4522 = scmp.lt.s32.totalorder %s4521, 127
      %s4523 = scalar_select %p4522, %s4521, 127
      %s4524 = smul.addr %s4523, 8
      %s4525 = scalar_lea.vmem %s16, %s4524
      %s4526 = smul.u32 64, %s30
      %p4527 = scmp.lt.s32.totalorder %s4526, 127
      %s4528 = scalar_select %p4527, %s4526, 127
      %s4529 = smul.addr %s4528, 8
      %s4530 = scalar_lea.vmem %s17, %s4529
      %s4531 = smul.u32 64, %s30
      %p4532 = scmp.lt.s32.totalorder %s4531, 127
      %s4533 = scalar_select %p4532, %s4531, 127
      %s4534 = smul.addr %s4533, 8
      %s4535 = scalar_lea.vmem %s18, %s4534
      // Predicated region
      $region85: #{tpu_custom_call.1} parent=83 // pred_check
        %p4536 = pneg %p394
      $region86: #{tpu_custom_call.1} parent=83 // pred_check_branch
        %4538 = sbr.rel (%p4536) target = $region88
      $region87: #{tpu_custom_call.1} parent=83 // pred_region
        %s4539 = smul.u32 64, %s30
      $region88: #{tpu_custom_call.1} parent=83 // pred_fallthru
        _
      // Predicated region
      $region89: #{tpu_custom_call.1} parent=83 // pred_check
        %p4540 = pneg %p420
      $region90: #{tpu_custom_call.1} parent=83 // pred_check_branch
        %4542 = sbr.rel (%p4540) target = $region92
      $region91: #{tpu_custom_call.1} parent=83 // pred_region
        %s4543 = smul.u32 64, %s30
      $region92: #{tpu_custom_call.1} parent=83 // pred_fallthru
        _
      // Predicated region
      $region93: #{tpu_custom_call.1} parent=83 // pred_check
        %p4544 = pneg %p446
      $region94: #{tpu_custom_call.1} parent=83 // pred_check_branch
        %4546 = sbr.rel (%p4544) target = $region96
      $region95: #{tpu_custom_call.1} parent=83 // pred_region
        %s4547 = smul.u32 64, %s30
      $region96: #{tpu_custom_call.1} parent=83 // pred_fallthru
        _
    $region84: #{tpu_custom_call.1} parent=5 // pred_fallthru
      _
    %p4548 = scmp.le.s32.totalorder 2, %s25
    // Predicated region
    $region97: #{tpu_custom_call.1} parent=5 // pred_check
      %p4549 = pneg %p4548
    $region98: #{tpu_custom_call.1} parent=5 // pred_check_branch
      %4551 = sbr.rel (%p4549) target = $region100
    $region99: #{tpu_custom_call.1} parent=5 // pred_region
      %s4552 = ssub.s32 %s25, 2
      // Predicated region
      $region101: #{tpu_custom_call.1} parent=99 // pred_check
        %p4553 = pneg %p400
      $region102: #{tpu_custom_call.1} parent=99 // pred_check_branch
        %4555 = sbr.rel (%p4553) target = $region104
      $region103: #{tpu_custom_call.1} parent=99 // pred_region
        %s4556 = smul.u32 64, %s31
        %p4557 = scmp.lt.s32.totalorder %s4556, 127
        %s4558 = scalar_select %p4557, %s4556, 127
        %s4559 = smul.addr %s4558, 8
        %s4560 = scalar_lea.vmem %s16, %s4559
      $region104: #{tpu_custom_call.1} parent=99 // pred_fallthru
        _
      // Predicated region
      $region105: #{tpu_custom_call.1} parent=99 // pred_check
        %p4561 = pneg %p426
      $region106: #{tpu_custom_call.1} parent=99 // pred_check_branch
        %4563 = sbr.rel (%p4561) target = $region108
      $region107: #{tpu_custom_call.1} parent=99 // pred_region
        %s4564 = smul.u32 64, %s31
        %p4565 = scmp.lt.s32.totalorder %s4564, 127
        %s4566 = scalar_select %p4565, %s4564, 127
        %s4567 = smul.addr %s4566, 8
        %s4568 = scalar_lea.vmem %s17, %s4567
      $region108: #{tpu_custom_call.1} parent=99 // pred_fallthru
        _
      // Predicated region
      $region109: #{tpu_custom_call.1} parent=99 // pred_check
        %p4569 = pneg %p452
      $region110: #{tpu_custom_call.1} parent=99 // pred_check_branch
        %4571 = sbr.rel (%p4569) target = $region112
      $region111: #{tpu_custom_call.1} parent=99 // pred_region
        %s4572 = smul.u32 64, %s31
        %p4573 = scmp.lt.s32.totalorder %s4572, 127
        %s4574 = scalar_select %p4573, %s4572, 127
        %s4575 = smul.addr %s4574, 8
        %s4576 = scalar_lea.vmem %s18, %s4575
      $region112: #{tpu_custom_call.1} parent=99 // pred_fallthru
        _
    $region100: #{tpu_custom_call.1} parent=5 // pred_fallthru
      _
  $region6: #{tpu_custom_call.1} parent=0 // loop_footer
    %s29 = sadd.s32 1, %s25
  $region7: #{tpu_custom_call.1} parent=0 // loop_footer_branch
    %24 = sbr.rel target = $region3
  $region8: #{tpu_custom_call.1} parent=0 // loop_exit
    _

</llo_original>
